<compile_context>
chip_gen: v5e
topology: v5e:2x2
jax: 0.10.0
libtpu: 0.0.40
codegen_flags: <defaults>
</compile_context>

<pallas_src>
import functools

import jax
import jax.numpy as jnp
import numpy as np
from jax import lax
from jax.experimental import pallas as pl
from jax.experimental.pallas import tpu as pltpu

LEAKY_SLOPE = 0.05
# Tap order (dy, dx); k = (dy+1)*3 + (dx+1) matches HWIO weights reshaped to (9, ci, co).
_OFFSETS = tuple((dy, dx) for dy in (-1, 0, 1) for dx in (-1, 0, 1))


def _conv3x3(a, w_ref, b_ref, masks, *, W, slope):
    """3x3 'same' conv on a (Cin, L) activation -> (Cout, L).

    a:      (Cin, L) f32, lane index = b*H*W + h*W + w
    w_ref:  (9, Cout, Cin) per-tap weights (tap order = _OFFSETS)
    b_ref:  (Cout, 1) bias
    masks:  list of 9 (1, L) f32 {0,1} validity masks (zero padding + batch isolation)
    """
    cin, L = a.shape
    cout = w_ref.shape[1]
    acc = jnp.zeros((cout, L), jnp.float32)
    for k, (dy, dx) in enumerate(_OFFSETS):
        d = dy * W + dx
        # out[:, i] needs in[:, i + d]; pltpu.roll follows np.roll, so shift by -d (mod L).
        shifted = a if d == 0 else pltpu.roll(a, shift=(-d) % L, axis=1)
        if d == 0:
            tap = jnp.dot(w_ref[k], shifted, preferred_element_type=jnp.float32)
        elif cout < cin:
            # Masking after the dot touches fewer elements when Cout < Cin; it is exact
            # because the wrapped (invalid) inputs are finite and multiplied by 0.
            tap = jnp.dot(w_ref[k], shifted, preferred_element_type=jnp.float32) * masks[k]
        else:
            tap = jnp.dot(w_ref[k], shifted * masks[k], preferred_element_type=jnp.float32)
        acc = acc + tap          # chained adds -> MRB accumulation on v7x, cheap VPU adds elsewhere
    y = acc + b_ref[...]
    if slope is not None:
        y = jnp.maximum(y, slope * y)      # leaky_relu(0.05)
    return y


def dcnet_kernel(masks_ref, x_ref, w1, b1, w2, b2, w3, b3, w4, b4, w5, b5,
                 o_ref, *, W):
    masks = [masks_ref[k] for k in range(9)]            # hoist once, reused by all 5 layers
    conv = functools.partial(_conv3x3, masks=masks, W=W)
    h = conv(x_ref[0], w1, b1, slope=None)              # conv1 (no activation) -> (64, L)
    h = conv(h, w2, b2, slope=LEAKY_SLOPE)              # conv2 -> (32, L)
    h = conv(h, w3, b3, slope=LEAKY_SLOPE)              # conv3 -> (16, L)
    h = conv(h, w4, b4, slope=LEAKY_SLOPE)              # conv4 -> (8, L)
    h = conv(h, w5, b5, slope=LEAKY_SLOPE)              # conv5 -> (1, L)
    o_ref[...] = h.reshape(1, 1, h.shape[-1])           # lane-dense store (last dim = L)


def _pick_batch_block(n, hw, *, target_lanes=1024):
    """Largest divisor of n with block*hw <= target_lanes, keeping >=2 grid steps if possible."""
    divisors = [b for b in range(1, n + 1) if n % b == 0 and b * hw <= target_lanes]
    if not divisors:
        return 1
    two_step = [b for b in divisors if n // b >= 2]
    return max(two_step) if two_step else max(divisors)


def _build_tap_masks(H, W, b_blk):
    hw = H * W
    hh, ww = np.meshgrid(np.arange(H), np.arange(W), indexing="ij")
    hh = hh.reshape(-1)
    ww = ww.reshape(-1)
    masks = np.empty((9, 1, b_blk * hw), np.float32)
    for k, (dy, dx) in enumerate(_OFFSETS):
        valid = ((hh + dy >= 0) & (hh + dy < H) & (ww + dx >= 0) & (ww + dx < W))
        masks[k, 0, :] = np.tile(valid.astype(np.float32), b_blk)
    return jnp.asarray(masks)


def dcnet_forward(x_nchw, params, *, batch_block=None):
    N, cin, H, W = x_nchw.shape
    hw = H * W
    b_blk = _pick_batch_block(N, hw) if batch_block is None else batch_block
    assert N % b_blk == 0
    nb = N // b_blk
    L = b_blk * hw

    # NCHW flattened over (H, W) is already the (C, H*W) lane layout the kernel wants.
    x = x_nchw.astype(jnp.float32).reshape(N, cin, hw)
    if b_blk == 1:
        xb = x
    else:
        # Pack b_blk images side by side on the lane axis (tiny host-side transpose).
        xb = x.reshape(nb, b_blk, cin, hw).transpose(0, 2, 1, 3).reshape(nb, cin, L)

    masks = _build_tap_masks(H, W, b_blk)

    flat = []
    for w, b in params:                       # w: HWIO (3, 3, ci, co);  b: (1, co)
        kh, kw, ci, co = w.shape
        w_taps = jnp.transpose(w.reshape(kh * kw, ci, co), (0, 2, 1)).astype(jnp.float32)
        flat += [w_taps, jnp.transpose(b).astype(jnp.float32)]      # (9, co, ci), (co, 1)

    in_specs = [pl.BlockSpec(masks.shape, lambda n: (0, 0, 0)),
                pl.BlockSpec((1, cin, L), lambda n: (n, 0, 0))]
    for p in flat:
        if p.ndim == 3:
            in_specs.append(pl.BlockSpec(p.shape, lambda n: (0, 0, 0)))
        else:
            in_specs.append(pl.BlockSpec(p.shape, lambda n: (0, 0)))

    flops = 2 * N * hw * 9 * sum(int(w.shape[2]) * int(w.shape[3]) for w, _ in params)
    bytes_accessed = 4 * (int(x.size) + int(masks.size)
                          + sum(int(p.size) for p in flat) + N * hw)

    out = pl.pallas_call(
        functools.partial(dcnet_kernel, W=W),
        out_shape=jax.ShapeDtypeStruct((nb, 1, L), jnp.float32),
        grid=(nb,),
        in_specs=in_specs,
        out_specs=pl.BlockSpec((1, 1, L), lambda n: (n, 0, 0)),
        compiler_params=pltpu.CompilerParams(dimension_semantics=("parallel",)),
        cost_estimate=pl.CostEstimate(flops=flops, transcendentals=0,
                                      bytes_accessed=bytes_accessed),
    )(masks, xb, *flat)

    # Batch is the major sub-index of the lane axis and Cout == 1, so (nb, 1, b_blk*hw)
    # has exactly the NCHW (N, 1, H, W) linear layout: the reshape is free.
    return out.reshape(N, 1, H, W)


def init_params(key):
    """Deterministic params: xavier_normal_ weights, uniform(-1, 1) biases (DCNet.initialize)."""
    chans = [(6, 64), (64, 32), (32, 16), (16, 8), (8, 1)]
    params = []
    for i, (ci, co) in enumerate(chans):
        kw, kb = jax.random.split(jax.random.fold_in(key, i))
        fan_in, fan_out = ci * 9, co * 9
        std = float(np.sqrt(2.0 / (fan_in + fan_out)))
        w = std * jax.random.normal(kw, (3, 3, ci, co), jnp.float32)   # HWIO
        b = jax.random.uniform(kb, (1, co), jnp.float32, -1.0, 1.0)
        params.append((w, b))
    return params


def dcnet_reference(x_nchw, params):
    """Pure-JAX reference (lax.conv) for correctness check."""
    x = jnp.transpose(x_nchw, (0, 2, 3, 1)).astype(jnp.float32)
    dn = lax.conv_dimension_numbers(x.shape, (3, 3, 1, 1), ("NHWC", "HWIO", "NHWC"))
    for i, (w, b) in enumerate(params):
        x = lax.conv_general_dilated(x, w, (1, 1), "SAME", dimension_numbers=dn) + b[0]
        if i > 0:
            x = jnp.where(x >= 0, x, LEAKY_SLOPE * x)
    return jnp.transpose(x, (0, 3, 1, 2))


if __name__ == "__main__":
    key = jax.random.PRNGKey(0)
    kx, kp = jax.random.split(key)
    x = jax.random.normal(kx, (2, 6, 16, 16), jnp.float32)   # NCHW, Conv2d(6, ...) input
    params = init_params(kp)

    fwd = jax.jit(dcnet_forward)
    out = jax.block_until_ready(fwd(x, params))
    ref = jax.block_until_ready(dcnet_reference(x, params))
    assert out.shape == (2, 1, 16, 16)
    np.testing.assert_allclose(np.asarray(out), np.asarray(ref), rtol=1e-3, atol=1e-3)
    print("KERNEL_OK")
</pallas_src>

<mosaic_0001>
module attributes {stable_mosaic.version = 11 : i64} {
  func.func @dcnet_kernel(%arg0: i32, %arg1: memref<9x1x256xf32, #tpu.memory_space<vmem>>, %arg2: memref<1x6x256xf32, #tpu.memory_space<vmem>>, %arg3: memref<9x64x6xf32, #tpu.memory_space<vmem>>, %arg4: memref<64x1xf32, #tpu.memory_space<vmem>>, %arg5: memref<9x32x64xf32, #tpu.memory_space<vmem>>, %arg6: memref<32x1xf32, #tpu.memory_space<vmem>>, %arg7: memref<9x16x32xf32, #tpu.memory_space<vmem>>, %arg8: memref<16x1xf32, #tpu.memory_space<vmem>>, %arg9: memref<9x8x16xf32, #tpu.memory_space<vmem>>, %arg10: memref<8x1xf32, #tpu.memory_space<vmem>>, %arg11: memref<9x1x8xf32, #tpu.memory_space<vmem>>, %arg12: memref<1x1xf32, #tpu.memory_space<vmem>>, %arg13: memref<1x1x256xf32, #tpu.memory_space<vmem>>) attributes {dimension_semantics = [#tpu.dimension_semantics<parallel>], iteration_bounds = array<i64: 2>, scalar_prefetch = 0 : i64, scratch_operands = 0 : i64, tpu.core_type = #tpu.core_type<tc>, window_params = [{pipeline_mode = #tpu.pipeline_mode<synchronous>, transform_indices = @transform_0, window_bounds = array<i64: 9, 1, 256>}, {transform_indices = @transform_1, window_bounds = array<i64: 1, 6, 256>}, {pipeline_mode = #tpu.pipeline_mode<synchronous>, transform_indices = @transform_2, window_bounds = array<i64: 9, 64, 6>}, {pipeline_mode = #tpu.pipeline_mode<synchronous>, transform_indices = @transform_3, window_bounds = array<i64: 64, 1>}, {pipeline_mode = #tpu.pipeline_mode<synchronous>, transform_indices = @transform_4, window_bounds = array<i64: 9, 32, 64>}, {pipeline_mode = #tpu.pipeline_mode<synchronous>, transform_indices = @transform_5, window_bounds = array<i64: 32, 1>}, {pipeline_mode = #tpu.pipeline_mode<synchronous>, transform_indices = @transform_6, window_bounds = array<i64: 9, 16, 32>}, {pipeline_mode = #tpu.pipeline_mode<synchronous>, transform_indices = @transform_7, window_bounds = array<i64: 16, 1>}, {pipeline_mode = #tpu.pipeline_mode<synchronous>, transform_indices = @transform_8, window_bounds = array<i64: 9, 8, 16>}, {pipeline_mode = #tpu.pipeline_mode<synchronous>, transform_indices = @transform_9, window_bounds = array<i64: 8, 1>}, {pipeline_mode = #tpu.pipeline_mode<synchronous>, transform_indices = @transform_10, window_bounds = array<i64: 9, 1, 8>}, {pipeline_mode = #tpu.pipeline_mode<synchronous>, transform_indices = @transform_11, window_bounds = array<i64: 1, 1>}, {transform_indices = @transform_12, window_bounds = array<i64: 1, 1, 256>}]} {
    %c0 = arith.constant 0 : index
    %c0_0 = arith.constant 0 : index
    %c0_1 = arith.constant 0 : index
    %0 = vector.load %arg1[%c0, %c0_0, %c0_1] : memref<9x1x256xf32, #tpu.memory_space<vmem>>, vector<1x1x256xf32>
    %1 = vector.shape_cast %0 : vector<1x1x256xf32> to vector<1x256xf32>
    %c1 = arith.constant 1 : index
    %c0_2 = arith.constant 0 : index
    %c0_3 = arith.constant 0 : index
    %2 = vector.load %arg1[%c1, %c0_2, %c0_3] : memref<9x1x256xf32, #tpu.memory_space<vmem>>, vector<1x1x256xf32>
    %3 = vector.shape_cast %2 : vector<1x1x256xf32> to vector<1x256xf32>
    %c2 = arith.constant 2 : index
    %c0_4 = arith.constant 0 : index
    %c0_5 = arith.constant 0 : index
    %4 = vector.load %arg1[%c2, %c0_4, %c0_5] : memref<9x1x256xf32, #tpu.memory_space<vmem>>, vector<1x1x256xf32>
    %5 = vector.shape_cast %4 : vector<1x1x256xf32> to vector<1x256xf32>
    %c3 = arith.constant 3 : index
    %c0_6 = arith.constant 0 : index
    %c0_7 = arith.constant 0 : index
    %6 = vector.load %arg1[%c3, %c0_6, %c0_7] : memref<9x1x256xf32, #tpu.memory_space<vmem>>, vector<1x1x256xf32>
    %7 = vector.shape_cast %6 : vector<1x1x256xf32> to vector<1x256xf32>
    %c5 = arith.constant 5 : index
    %c0_8 = arith.constant 0 : index
    %c0_9 = arith.constant 0 : index
    %8 = vector.load %arg1[%c5, %c0_8, %c0_9] : memref<9x1x256xf32, #tpu.memory_space<vmem>>, vector<1x1x256xf32>
    %9 = vector.shape_cast %8 : vector<1x1x256xf32> to vector<1x256xf32>
    %c6 = arith.constant 6 : index
    %c0_10 = arith.constant 0 : index
    %c0_11 = arith.constant 0 : index
    %10 = vector.load %arg1[%c6, %c0_10, %c0_11] : memref<9x1x256xf32, #tpu.memory_space<vmem>>, vector<1x1x256xf32>
    %11 = vector.shape_cast %10 : vector<1x1x256xf32> to vector<1x256xf32>
    %c7 = arith.constant 7 : index
    %c0_12 = arith.constant 0 : index
    %c0_13 = arith.constant 0 : index
    %12 = vector.load %arg1[%c7, %c0_12, %c0_13] : memref<9x1x256xf32, #tpu.memory_space<vmem>>, vector<1x1x256xf32>
    %13 = vector.shape_cast %12 : vector<1x1x256xf32> to vector<1x256xf32>
    %c8 = arith.constant 8 : index
    %c0_14 = arith.constant 0 : index
    %c0_15 = arith.constant 0 : index
    %14 = vector.load %arg1[%c8, %c0_14, %c0_15] : memref<9x1x256xf32, #tpu.memory_space<vmem>>, vector<1x1x256xf32>
    %15 = vector.shape_cast %14 : vector<1x1x256xf32> to vector<1x256xf32>
    %c0_16 = arith.constant 0 : index
    %c0_17 = arith.constant 0 : index
    %c0_18 = arith.constant 0 : index
    %16 = vector.load %arg2[%c0_16, %c0_17, %c0_18] : memref<1x6x256xf32, #tpu.memory_space<vmem>>, vector<1x6x256xf32>
    %17 = vector.shape_cast %16 : vector<1x6x256xf32> to vector<6x256xf32>
    %cst = arith.constant 0.000000e+00 : f32
    %18 = vector.broadcast %cst : f32 to vector<64x256xf32>
    %c17_i32 = arith.constant 17 : i32
    %19 = tpu.dynamic_rotate %17 by %c17_i32 dim 1 : vector<6x256xf32>, i32 -> vector<6x256xf32>
    %c0_19 = arith.constant 0 : index
    %c0_20 = arith.constant 0 : index
    %c0_21 = arith.constant 0 : index
    %20 = vector.load %arg3[%c0_19, %c0_20, %c0_21] : memref<9x64x6xf32, #tpu.memory_space<vmem>>, vector<1x64x6xf32>
    %21 = vector.shape_cast %20 : vector<1x64x6xf32> to vector<64x6xf32>
    %22 = vector.broadcast %1 : vector<1x256xf32> to vector<6x256xf32>
    %23 = arith.mulf %19, %22 : vector<6x256xf32>
    %cst_22 = arith.constant dense<0.000000e+00> : vector<64x256xf32>
    %24 = tpu.matmul %21, %23, %cst_22 {dimension_numbers = #tpu.dot_dimension_numbers<[1], [0], [0], [1], [0, 0, 1, 1], [], []>} : vector<64x6xf32>, vector<6x256xf32>, vector<64x256xf32> -> vector<64x256xf32>
    %25 = arith.addf %18, %24 : vector<64x256xf32>
    %c16_i32 = arith.constant 16 : i32
    %26 = tpu.dynamic_rotate %17 by %c16_i32 dim 1 : vector<6x256xf32>, i32 -> vector<6x256xf32>
    %c1_23 = arith.constant 1 : index
    %c0_24 = arith.constant 0 : index
    %c0_25 = arith.constant 0 : index
    %27 = vector.load %arg3[%c1_23, %c0_24, %c0_25] : memref<9x64x6xf32, #tpu.memory_space<vmem>>, vector<1x64x6xf32>
    %28 = vector.shape_cast %27 : vector<1x64x6xf32> to vector<64x6xf32>
    %29 = vector.broadcast %3 : vector<1x256xf32> to vector<6x256xf32>
    %30 = arith.mulf %26, %29 : vector<6x256xf32>
    %cst_26 = arith.constant dense<0.000000e+00> : vector<64x256xf32>
    %31 = tpu.matmul %28, %30, %cst_26 {dimension_numbers = #tpu.dot_dimension_numbers<[1], [0], [0], [1], [0, 0, 1, 1], [], []>} : vector<64x6xf32>, vector<6x256xf32>, vector<64x256xf32> -> vector<64x256xf32>
    %32 = arith.addf %25, %31 : vector<64x256xf32>
    %c15_i32 = arith.constant 15 : i32
    %33 = tpu.dynamic_rotate %17 by %c15_i32 dim 1 : vector<6x256xf32>, i32 -> vector<6x256xf32>
    %c2_27 = arith.constant 2 : index
    %c0_28 = arith.constant 0 : index
    %c0_29 = arith.constant 0 : index
    %34 = vector.load %arg3[%c2_27, %c0_28, %c0_29] : memref<9x64x6xf32, #tpu.memory_space<vmem>>, vector<1x64x6xf32>
    %35 = vector.shape_cast %34 : vector<1x64x6xf32> to vector<64x6xf32>
    %36 = vector.broadcast %5 : vector<1x256xf32> to vector<6x256xf32>
    %37 = arith.mulf %33, %36 : vector<6x256xf32>
    %cst_30 = arith.constant dense<0.000000e+00> : vector<64x256xf32>
    %38 = tpu.matmul %35, %37, %cst_30 {dimension_numbers = #tpu.dot_dimension_numbers<[1], [0], [0], [1], [0, 0, 1, 1], [], []>} : vector<64x6xf32>, vector<6x256xf32>, vector<64x256xf32> -> vector<64x256xf32>
    %39 = arith.addf %32, %38 : vector<64x256xf32>
    %c1_i32 = arith.constant 1 : i32
    %40 = tpu.dynamic_rotate %17 by %c1_i32 dim 1 : vector<6x256xf32>, i32 -> vector<6x256xf32>
    %c3_31 = arith.constant 3 : index
    %c0_32 = arith.constant 0 : index
    %c0_33 = arith.constant 0 : index
    %41 = vector.load %arg3[%c3_31, %c0_32, %c0_33] : memref<9x64x6xf32, #tpu.memory_space<vmem>>, vector<1x64x6xf32>
    %42 = vector.shape_cast %41 : vector<1x64x6xf32> to vector<64x6xf32>
    %43 = vector.broadcast %7 : vector<1x256xf32> to vector<6x256xf32>
    %44 = arith.mulf %40, %43 : vector<6x256xf32>
    %cst_34 = arith.constant dense<0.000000e+00> : vector<64x256xf32>
    %45 = tpu.matmul %42, %44, %cst_34 {dimension_numbers = #tpu.dot_dimension_numbers<[1], [0], [0], [1], [0, 0, 1, 1], [], []>} : vector<64x6xf32>, vector<6x256xf32>, vector<64x256xf32> -> vector<64x256xf32>
    %46 = arith.addf %39, %45 : vector<64x256xf32>
    %c4 = arith.constant 4 : index
    %c0_35 = arith.constant 0 : index
    %c0_36 = arith.constant 0 : index
    %47 = vector.load %arg3[%c4, %c0_35, %c0_36] : memref<9x64x6xf32, #tpu.memory_space<vmem>>, vector<1x64x6xf32>
    %48 = vector.shape_cast %47 : vector<1x64x6xf32> to vector<64x6xf32>
    %cst_37 = arith.constant dense<0.000000e+00> : vector<64x256xf32>
    %49 = tpu.matmul %48, %17, %cst_37 {dimension_numbers = #tpu.dot_dimension_numbers<[1], [0], [0], [1], [0, 0, 1, 1], [], []>} : vector<64x6xf32>, vector<6x256xf32>, vector<64x256xf32> -> vector<64x256xf32>
    %50 = arith.addf %46, %49 : vector<64x256xf32>
    %c255_i32 = arith.constant 255 : i32
    %51 = tpu.dynamic_rotate %17 by %c255_i32 dim 1 : vector<6x256xf32>, i32 -> vector<6x256xf32>
    %c5_38 = arith.constant 5 : index
    %c0_39 = arith.constant 0 : index
    %c0_40 = arith.constant 0 : index
    %52 = vector.load %arg3[%c5_38, %c0_39, %c0_40] : memref<9x64x6xf32, #tpu.memory_space<vmem>>, vector<1x64x6xf32>
    %53 = vector.shape_cast %52 : vector<1x64x6xf32> to vector<64x6xf32>
    %54 = vector.broadcast %9 : vector<1x256xf32> to vector<6x256xf32>
    %55 = arith.mulf %51, %54 : vector<6x256xf32>
    %cst_41 = arith.constant dense<0.000000e+00> : vector<64x256xf32>
    %56 = tpu.matmul %53, %55, %cst_41 {dimension_numbers = #tpu.dot_dimension_numbers<[1], [0], [0], [1], [0, 0, 1, 1], [], []>} : vector<64x6xf32>, vector<6x256xf32>, vector<64x256xf32> -> vector<64x256xf32>
    %57 = arith.addf %50, %56 : vector<64x256xf32>
    %c241_i32 = arith.constant 241 : i32
    %58 = tpu.dynamic_rotate %17 by %c241_i32 dim 1 : vector<6x256xf32>, i32 -> vector<6x256xf32>
    %c6_42 = arith.constant 6 : index
    %c0_43 = arith.constant 0 : index
    %c0_44 = arith.constant 0 : index
    %59 = vector.load %arg3[%c6_42, %c0_43, %c0_44] : memref<9x64x6xf32, #tpu.memory_space<vmem>>, vector<1x64x6xf32>
    %60 = vector.shape_cast %59 : vector<1x64x6xf32> to vector<64x6xf32>
    %61 = vector.broadcast %11 : vector<1x256xf32> to vector<6x256xf32>
    %62 = arith.mulf %58, %61 : vector<6x256xf32>
    %cst_45 = arith.constant dense<0.000000e+00> : vector<64x256xf32>
    %63 = tpu.matmul %60, %62, %cst_45 {dimension_numbers = #tpu.dot_dimension_numbers<[1], [0], [0], [1], [0, 0, 1, 1], [], []>} : vector<64x6xf32>, vector<6x256xf32>, vector<64x256xf32> -> vector<64x256xf32>
    %64 = arith.addf %57, %63 : vector<64x256xf32>
    %c240_i32 = arith.constant 240 : i32
    %65 = tpu.dynamic_rotate %17 by %c240_i32 dim 1 : vector<6x256xf32>, i32 -> vector<6x256xf32>
    %c7_46 = arith.constant 7 : index
    %c0_47 = arith.constant 0 : index
    %c0_48 = arith.constant 0 : index
    %66 = vector.load %arg3[%c7_46, %c0_47, %c0_48] : memref<9x64x6xf32, #tpu.memory_space<vmem>>, vector<1x64x6xf32>
    %67 = vector.shape_cast %66 : vector<1x64x6xf32> to vector<64x6xf32>
    %68 = vector.broadcast %13 : vector<1x256xf32> to vector<6x256xf32>
    %69 = arith.mulf %65, %68 : vector<6x256xf32>
    %cst_49 = arith.constant dense<0.000000e+00> : vector<64x256xf32>
    %70 = tpu.matmul %67, %69, %cst_49 {dimension_numbers = #tpu.dot_dimension_numbers<[1], [0], [0], [1], [0, 0, 1, 1], [], []>} : vector<64x6xf32>, vector<6x256xf32>, vector<64x256xf32> -> vector<64x256xf32>
    %71 = arith.addf %64, %70 : vector<64x256xf32>
    %c239_i32 = arith.constant 239 : i32
    %72 = tpu.dynamic_rotate %17 by %c239_i32 dim 1 : vector<6x256xf32>, i32 -> vector<6x256xf32>
    %c8_50 = arith.constant 8 : index
    %c0_51 = arith.constant 0 : index
    %c0_52 = arith.constant 0 : index
    %73 = vector.load %arg3[%c8_50, %c0_51, %c0_52] : memref<9x64x6xf32, #tpu.memory_space<vmem>>, vector<1x64x6xf32>
    %74 = vector.shape_cast %73 : vector<1x64x6xf32> to vector<64x6xf32>
    %75 = vector.broadcast %15 : vector<1x256xf32> to vector<6x256xf32>
    %76 = arith.mulf %72, %75 : vector<6x256xf32>
    %cst_53 = arith.constant dense<0.000000e+00> : vector<64x256xf32>
    %77 = tpu.matmul %74, %76, %cst_53 {dimension_numbers = #tpu.dot_dimension_numbers<[1], [0], [0], [1], [0, 0, 1, 1], [], []>} : vector<64x6xf32>, vector<6x256xf32>, vector<64x256xf32> -> vector<64x256xf32>
    %78 = arith.addf %71, %77 : vector<64x256xf32>
    %c0_54 = arith.constant 0 : index
    %c0_55 = arith.constant 0 : index
    %79 = vector.load %arg4[%c0_54, %c0_55] : memref<64x1xf32, #tpu.memory_space<vmem>>, vector<64x1xf32>
    %80 = vector.broadcast %79 : vector<64x1xf32> to vector<64x256xf32>
    %81 = arith.addf %78, %80 : vector<64x256xf32>
    %cst_56 = arith.constant 0.000000e+00 : f32
    %82 = vector.broadcast %cst_56 : f32 to vector<32x256xf32>
    %c17_i32_57 = arith.constant 17 : i32
    %83 = tpu.dynamic_rotate %81 by %c17_i32_57 dim 1 : vector<64x256xf32>, i32 -> vector<64x256xf32>
    %c0_58 = arith.constant 0 : index
    %c0_59 = arith.constant 0 : index
    %c0_60 = arith.constant 0 : index
    %84 = vector.load %arg5[%c0_58, %c0_59, %c0_60] : memref<9x32x64xf32, #tpu.memory_space<vmem>>, vector<1x32x64xf32>
    %85 = vector.shape_cast %84 : vector<1x32x64xf32> to vector<32x64xf32>
    %cst_61 = arith.constant dense<0.000000e+00> : vector<32x256xf32>
    %86 = tpu.matmul %85, %83, %cst_61 {dimension_numbers = #tpu.dot_dimension_numbers<[1], [0], [0], [1], [0, 0, 1, 1], [], []>} : vector<32x64xf32>, vector<64x256xf32>, vector<32x256xf32> -> vector<32x256xf32>
    %87 = vector.broadcast %1 : vector<1x256xf32> to vector<32x256xf32>
    %88 = arith.mulf %86, %87 : vector<32x256xf32>
    %89 = arith.addf %82, %88 : vector<32x256xf32>
    %c16_i32_62 = arith.constant 16 : i32
    %90 = tpu.dynamic_rotate %81 by %c16_i32_62 dim 1 : vector<64x256xf32>, i32 -> vector<64x256xf32>
    %c1_63 = arith.constant 1 : index
    %c0_64 = arith.constant 0 : index
    %c0_65 = arith.constant 0 : index
    %91 = vector.load %arg5[%c1_63, %c0_64, %c0_65] : memref<9x32x64xf32, #tpu.memory_space<vmem>>, vector<1x32x64xf32>
    %92 = vector.shape_cast %91 : vector<1x32x64xf32> to vector<32x64xf32>
    %cst_66 = arith.constant dense<0.000000e+00> : vector<32x256xf32>
    %93 = tpu.matmul %92, %90, %cst_66 {dimension_numbers = #tpu.dot_dimension_numbers<[1], [0], [0], [1], [0, 0, 1, 1], [], []>} : vector<32x64xf32>, vector<64x256xf32>, vector<32x256xf32> -> vector<32x256xf32>
    %94 = vector.broadcast %3 : vector<1x256xf32> to vector<32x256xf32>
    %95 = arith.mulf %93, %94 : vector<32x256xf32>
    %96 = arith.addf %89, %95 : vector<32x256xf32>
    %c15_i32_67 = arith.constant 15 : i32
    %97 = tpu.dynamic_rotate %81 by %c15_i32_67 dim 1 : vector<64x256xf32>, i32 -> vector<64x256xf32>
    %c2_68 = arith.constant 2 : index
    %c0_69 = arith.constant 0 : index
    %c0_70 = arith.constant 0 : index
    %98 = vector.load %arg5[%c2_68, %c0_69, %c0_70] : memref<9x32x64xf32, #tpu.memory_space<vmem>>, vector<1x32x64xf32>
    %99 = vector.shape_cast %98 : vector<1x32x64xf32> to vector<32x64xf32>
    %cst_71 = arith.constant dense<0.000000e+00> : vector<32x256xf32>
    %100 = tpu.matmul %99, %97, %cst_71 {dimension_numbers = #tpu.dot_dimension_numbers<[1], [0], [0], [1], [0, 0, 1, 1], [], []>} : vector<32x64xf32>, vector<64x256xf32>, vector<32x256xf32> -> vector<32x256xf32>
    %101 = vector.broadcast %5 : vector<1x256xf32> to vector<32x256xf32>
    %102 = arith.mulf %100, %101 : vector<32x256xf32>
    %103 = arith.addf %96, %102 : vector<32x256xf32>
    %c1_i32_72 = arith.constant 1 : i32
    %104 = tpu.dynamic_rotate %81 by %c1_i32_72 dim 1 : vector<64x256xf32>, i32 -> vector<64x256xf32>
    %c3_73 = arith.constant 3 : index
    %c0_74 = arith.constant 0 : index
    %c0_75 = arith.constant 0 : index
    %105 = vector.load %arg5[%c3_73, %c0_74, %c0_75] : memref<9x32x64xf32, #tpu.memory_space<vmem>>, vector<1x32x64xf32>
    %106 = vector.shape_cast %105 : vector<1x32x64xf32> to vector<32x64xf32>
    %cst_76 = arith.constant dense<0.000000e+00> : vector<32x256xf32>
    %107 = tpu.matmul %106, %104, %cst_76 {dimension_numbers = #tpu.dot_dimension_numbers<[1], [0], [0], [1], [0, 0, 1, 1], [], []>} : vector<32x64xf32>, vector<64x256xf32>, vector<32x256xf32> -> vector<32x256xf32>
    %108 = vector.broadcast %7 : vector<1x256xf32> to vector<32x256xf32>
    %109 = arith.mulf %107, %108 : vector<32x256xf32>
    %110 = arith.addf %103, %109 : vector<32x256xf32>
    %c4_77 = arith.constant 4 : index
    %c0_78 = arith.constant 0 : index
    %c0_79 = arith.constant 0 : index
    %111 = vector.load %arg5[%c4_77, %c0_78, %c0_79] : memref<9x32x64xf32, #tpu.memory_space<vmem>>, vector<1x32x64xf32>
    %112 = vector.shape_cast %111 : vector<1x32x64xf32> to vector<32x64xf32>
    %cst_80 = arith.constant dense<0.000000e+00> : vector<32x256xf32>
    %113 = tpu.matmul %112, %81, %cst_80 {dimension_numbers = #tpu.dot_dimension_numbers<[1], [0], [0], [1], [0, 0, 1, 1], [], []>} : vector<32x64xf32>, vector<64x256xf32>, vector<32x256xf32> -> vector<32x256xf32>
    %114 = arith.addf %110, %113 : vector<32x256xf32>
    %c255_i32_81 = arith.constant 255 : i32
    %115 = tpu.dynamic_rotate %81 by %c255_i32_81 dim 1 : vector<64x256xf32>, i32 -> vector<64x256xf32>
    %c5_82 = arith.constant 5 : index
    %c0_83 = arith.constant 0 : index
    %c0_84 = arith.constant 0 : index
    %116 = vector.load %arg5[%c5_82, %c0_83, %c0_84] : memref<9x32x64xf32, #tpu.memory_space<vmem>>, vector<1x32x64xf32>
    %117 = vector.shape_cast %116 : vector<1x32x64xf32> to vector<32x64xf32>
    %cst_85 = arith.constant dense<0.000000e+00> : vector<32x256xf32>
    %118 = tpu.matmul %117, %115, %cst_85 {dimension_numbers = #tpu.dot_dimension_numbers<[1], [0], [0], [1], [0, 0, 1, 1], [], []>} : vector<32x64xf32>, vector<64x256xf32>, vector<32x256xf32> -> vector<32x256xf32>
    %119 = vector.broadcast %9 : vector<1x256xf32> to vector<32x256xf32>
    %120 = arith.mulf %118, %119 : vector<32x256xf32>
    %121 = arith.addf %114, %120 : vector<32x256xf32>
    %c241_i32_86 = arith.constant 241 : i32
    %122 = tpu.dynamic_rotate %81 by %c241_i32_86 dim 1 : vector<64x256xf32>, i32 -> vector<64x256xf32>
    %c6_87 = arith.constant 6 : index
    %c0_88 = arith.constant 0 : index
    %c0_89 = arith.constant 0 : index
    %123 = vector.load %arg5[%c6_87, %c0_88, %c0_89] : memref<9x32x64xf32, #tpu.memory_space<vmem>>, vector<1x32x64xf32>
    %124 = vector.shape_cast %123 : vector<1x32x64xf32> to vector<32x64xf32>
    %cst_90 = arith.constant dense<0.000000e+00> : vector<32x256xf32>
    %125 = tpu.matmul %124, %122, %cst_90 {dimension_numbers = #tpu.dot_dimension_numbers<[1], [0], [0], [1], [0, 0, 1, 1], [], []>} : vector<32x64xf32>, vector<64x256xf32>, vector<32x256xf32> -> vector<32x256xf32>
    %126 = vector.broadcast %11 : vector<1x256xf32> to vector<32x256xf32>
    %127 = arith.mulf %125, %126 : vector<32x256xf32>
    %128 = arith.addf %121, %127 : vector<32x256xf32>
    %c240_i32_91 = arith.constant 240 : i32
    %129 = tpu.dynamic_rotate %81 by %c240_i32_91 dim 1 : vector<64x256xf32>, i32 -> vector<64x256xf32>
    %c7_92 = arith.constant 7 : index
    %c0_93 = arith.constant 0 : index
    %c0_94 = arith.constant 0 : index
    %130 = vector.load %arg5[%c7_92, %c0_93, %c0_94] : memref<9x32x64xf32, #tpu.memory_space<vmem>>, vector<1x32x64xf32>
    %131 = vector.shape_cast %130 : vector<1x32x64xf32> to vector<32x64xf32>
    %cst_95 = arith.constant dense<0.000000e+00> : vector<32x256xf32>
    %132 = tpu.matmul %131, %129, %cst_95 {dimension_numbers = #tpu.dot_dimension_numbers<[1], [0], [0], [1], [0, 0, 1, 1], [], []>} : vector<32x64xf32>, vector<64x256xf32>, vector<32x256xf32> -> vector<32x256xf32>
    %133 = vector.broadcast %13 : vector<1x256xf32> to vector<32x256xf32>
    %134 = arith.mulf %132, %133 : vector<32x256xf32>
    %135 = arith.addf %128, %134 : vector<32x256xf32>
    %c239_i32_96 = arith.constant 239 : i32
    %136 = tpu.dynamic_rotate %81 by %c239_i32_96 dim 1 : vector<64x256xf32>, i32 -> vector<64x256xf32>
    %c8_97 = arith.constant 8 : index
    %c0_98 = arith.constant 0 : index
    %c0_99 = arith.constant 0 : index
    %137 = vector.load %arg5[%c8_97, %c0_98, %c0_99] : memref<9x32x64xf32, #tpu.memory_space<vmem>>, vector<1x32x64xf32>
    %138 = vector.shape_cast %137 : vector<1x32x64xf32> to vector<32x64xf32>
    %cst_100 = arith.constant dense<0.000000e+00> : vector<32x256xf32>
    %139 = tpu.matmul %138, %136, %cst_100 {dimension_numbers = #tpu.dot_dimension_numbers<[1], [0], [0], [1], [0, 0, 1, 1], [], []>} : vector<32x64xf32>, vector<64x256xf32>, vector<32x256xf32> -> vector<32x256xf32>
    %140 = vector.broadcast %15 : vector<1x256xf32> to vector<32x256xf32>
    %141 = arith.mulf %139, %140 : vector<32x256xf32>
    %142 = arith.addf %135, %141 : vector<32x256xf32>
    %c0_101 = arith.constant 0 : index
    %c0_102 = arith.constant 0 : index
    %143 = vector.load %arg6[%c0_101, %c0_102] : memref<32x1xf32, #tpu.memory_space<vmem>>, vector<32x1xf32>
    %144 = vector.broadcast %143 : vector<32x1xf32> to vector<32x256xf32>
    %145 = arith.addf %142, %144 : vector<32x256xf32>
    %cst_103 = arith.constant 5.000000e-02 : f32
    %146 = vector.broadcast %cst_103 : f32 to vector<32x256xf32>
    %147 = arith.mulf %146, %145 : vector<32x256xf32>
    %148 = arith.maximumf %145, %147 : vector<32x256xf32>
    %cst_104 = arith.constant 0.000000e+00 : f32
    %149 = vector.broadcast %cst_104 : f32 to vector<16x256xf32>
    %c17_i32_105 = arith.constant 17 : i32
    %150 = tpu.dynamic_rotate %148 by %c17_i32_105 dim 1 : vector<32x256xf32>, i32 -> vector<32x256xf32>
    %c0_106 = arith.constant 0 : index
    %c0_107 = arith.constant 0 : index
    %c0_108 = arith.constant 0 : index
    %151 = vector.load %arg7[%c0_106, %c0_107, %c0_108] : memref<9x16x32xf32, #tpu.memory_space<vmem>>, vector<1x16x32xf32>
    %152 = vector.shape_cast %151 : vector<1x16x32xf32> to vector<16x32xf32>
    %cst_109 = arith.constant dense<0.000000e+00> : vector<16x256xf32>
    %153 = tpu.matmul %152, %150, %cst_109 {dimension_numbers = #tpu.dot_dimension_numbers<[1], [0], [0], [1], [0, 0, 1, 1], [], []>} : vector<16x32xf32>, vector<32x256xf32>, vector<16x256xf32> -> vector<16x256xf32>
    %154 = vector.broadcast %1 : vector<1x256xf32> to vector<16x256xf32>
    %155 = arith.mulf %153, %154 : vector<16x256xf32>
    %156 = arith.addf %149, %155 : vector<16x256xf32>
    %c16_i32_110 = arith.constant 16 : i32
    %157 = tpu.dynamic_rotate %148 by %c16_i32_110 dim 1 : vector<32x256xf32>, i32 -> vector<32x256xf32>
    %c1_111 = arith.constant 1 : index
    %c0_112 = arith.constant 0 : index
    %c0_113 = arith.constant 0 : index
    %158 = vector.load %arg7[%c1_111, %c0_112, %c0_113] : memref<9x16x32xf32, #tpu.memory_space<vmem>>, vector<1x16x32xf32>
    %159 = vector.shape_cast %158 : vector<1x16x32xf32> to vector<16x32xf32>
    %cst_114 = arith.constant dense<0.000000e+00> : vector<16x256xf32>
    %160 = tpu.matmul %159, %157, %cst_114 {dimension_numbers = #tpu.dot_dimension_numbers<[1], [0], [0], [1], [0, 0, 1, 1], [], []>} : vector<16x32xf32>, vector<32x256xf32>, vector<16x256xf32> -> vector<16x256xf32>
    %161 = vector.broadcast %3 : vector<1x256xf32> to vector<16x256xf32>
    %162 = arith.mulf %160, %161 : vector<16x256xf32>
    %163 = arith.addf %156, %162 : vector<16x256xf32>
    %c15_i32_115 = arith.constant 15 : i32
    %164 = tpu.dynamic_rotate %148 by %c15_i32_115 dim 1 : vector<32x256xf32>, i32 -> vector<32x256xf32>
    %c2_116 = arith.constant 2 : index
    %c0_117 = arith.constant 0 : index
    %c0_118 = arith.constant 0 : index
    %165 = vector.load %arg7[%c2_116, %c0_117, %c0_118] : memref<9x16x32xf32, #tpu.memory_space<vmem>>, vector<1x16x32xf32>
    %166 = vector.shape_cast %165 : vector<1x16x32xf32> to vector<16x32xf32>
    %cst_119 = arith.constant dense<0.000000e+00> : vector<16x256xf32>
    %167 = tpu.matmul %166, %164, %cst_119 {dimension_numbers = #tpu.dot_dimension_numbers<[1], [0], [0], [1], [0, 0, 1, 1], [], []>} : vector<16x32xf32>, vector<32x256xf32>, vector<16x256xf32> -> vector<16x256xf32>
    %168 = vector.broadcast %5 : vector<1x256xf32> to vector<16x256xf32>
    %169 = arith.mulf %167, %168 : vector<16x256xf32>
    %170 = arith.addf %163, %169 : vector<16x256xf32>
    %c1_i32_120 = arith.constant 1 : i32
    %171 = tpu.dynamic_rotate %148 by %c1_i32_120 dim 1 : vector<32x256xf32>, i32 -> vector<32x256xf32>
    %c3_121 = arith.constant 3 : index
    %c0_122 = arith.constant 0 : index
    %c0_123 = arith.constant 0 : index
    %172 = vector.load %arg7[%c3_121, %c0_122, %c0_123] : memref<9x16x32xf32, #tpu.memory_space<vmem>>, vector<1x16x32xf32>
    %173 = vector.shape_cast %172 : vector<1x16x32xf32> to vector<16x32xf32>
    %cst_124 = arith.constant dense<0.000000e+00> : vector<16x256xf32>
    %174 = tpu.matmul %173, %171, %cst_124 {dimension_numbers = #tpu.dot_dimension_numbers<[1], [0], [0], [1], [0, 0, 1, 1], [], []>} : vector<16x32xf32>, vector<32x256xf32>, vector<16x256xf32> -> vector<16x256xf32>
    %175 = vector.broadcast %7 : vector<1x256xf32> to vector<16x256xf32>
    %176 = arith.mulf %174, %175 : vector<16x256xf32>
    %177 = arith.addf %170, %176 : vector<16x256xf32>
    %c4_125 = arith.constant 4 : index
    %c0_126 = arith.constant 0 : index
    %c0_127 = arith.constant 0 : index
    %178 = vector.load %arg7[%c4_125, %c0_126, %c0_127] : memref<9x16x32xf32, #tpu.memory_space<vmem>>, vector<1x16x32xf32>
    %179 = vector.shape_cast %178 : vector<1x16x32xf32> to vector<16x32xf32>
    %cst_128 = arith.constant dense<0.000000e+00> : vector<16x256xf32>
    %180 = tpu.matmul %179, %148, %cst_128 {dimension_numbers = #tpu.dot_dimension_numbers<[1], [0], [0], [1], [0, 0, 1, 1], [], []>} : vector<16x32xf32>, vector<32x256xf32>, vector<16x256xf32> -> vector<16x256xf32>
    %181 = arith.addf %177, %180 : vector<16x256xf32>
    %c255_i32_129 = arith.constant 255 : i32
    %182 = tpu.dynamic_rotate %148 by %c255_i32_129 dim 1 : vector<32x256xf32>, i32 -> vector<32x256xf32>
    %c5_130 = arith.constant 5 : index
    %c0_131 = arith.constant 0 : index
    %c0_132 = arith.constant 0 : index
    %183 = vector.load %arg7[%c5_130, %c0_131, %c0_132] : memref<9x16x32xf32, #tpu.memory_space<vmem>>, vector<1x16x32xf32>
    %184 = vector.shape_cast %183 : vector<1x16x32xf32> to vector<16x32xf32>
    %cst_133 = arith.constant dense<0.000000e+00> : vector<16x256xf32>
    %185 = tpu.matmul %184, %182, %cst_133 {dimension_numbers = #tpu.dot_dimension_numbers<[1], [0], [0], [1], [0, 0, 1, 1], [], []>} : vector<16x32xf32>, vector<32x256xf32>, vector<16x256xf32> -> vector<16x256xf32>
    %186 = vector.broadcast %9 : vector<1x256xf32> to vector<16x256xf32>
    %187 = arith.mulf %185, %186 : vector<16x256xf32>
    %188 = arith.addf %181, %187 : vector<16x256xf32>
    %c241_i32_134 = arith.constant 241 : i32
    %189 = tpu.dynamic_rotate %148 by %c241_i32_134 dim 1 : vector<32x256xf32>, i32 -> vector<32x256xf32>
    %c6_135 = arith.constant 6 : index
    %c0_136 = arith.constant 0 : index
    %c0_137 = arith.constant 0 : index
    %190 = vector.load %arg7[%c6_135, %c0_136, %c0_137] : memref<9x16x32xf32, #tpu.memory_space<vmem>>, vector<1x16x32xf32>
    %191 = vector.shape_cast %190 : vector<1x16x32xf32> to vector<16x32xf32>
    %cst_138 = arith.constant dense<0.000000e+00> : vector<16x256xf32>
    %192 = tpu.matmul %191, %189, %cst_138 {dimension_numbers = #tpu.dot_dimension_numbers<[1], [0], [0], [1], [0, 0, 1, 1], [], []>} : vector<16x32xf32>, vector<32x256xf32>, vector<16x256xf32> -> vector<16x256xf32>
    %193 = vector.broadcast %11 : vector<1x256xf32> to vector<16x256xf32>
    %194 = arith.mulf %192, %193 : vector<16x256xf32>
    %195 = arith.addf %188, %194 : vector<16x256xf32>
    %c240_i32_139 = arith.constant 240 : i32
    %196 = tpu.dynamic_rotate %148 by %c240_i32_139 dim 1 : vector<32x256xf32>, i32 -> vector<32x256xf32>
    %c7_140 = arith.constant 7 : index
    %c0_141 = arith.constant 0 : index
    %c0_142 = arith.constant 0 : index
    %197 = vector.load %arg7[%c7_140, %c0_141, %c0_142] : memref<9x16x32xf32, #tpu.memory_space<vmem>>, vector<1x16x32xf32>
    %198 = vector.shape_cast %197 : vector<1x16x32xf32> to vector<16x32xf32>
    %cst_143 = arith.constant dense<0.000000e+00> : vector<16x256xf32>
    %199 = tpu.matmul %198, %196, %cst_143 {dimension_numbers = #tpu.dot_dimension_numbers<[1], [0], [0], [1], [0, 0, 1, 1], [], []>} : vector<16x32xf32>, vector<32x256xf32>, vector<16x256xf32> -> vector<16x256xf32>
    %200 = vector.broadcast %13 : vector<1x256xf32> to vector<16x256xf32>
    %201 = arith.mulf %199, %200 : vector<16x256xf32>
    %202 = arith.addf %195, %201 : vector<16x256xf32>
    %c239_i32_144 = arith.constant 239 : i32
    %203 = tpu.dynamic_rotate %148 by %c239_i32_144 dim 1 : vector<32x256xf32>, i32 -> vector<32x256xf32>
    %c8_145 = arith.constant 8 : index
    %c0_146 = arith.constant 0 : index
    %c0_147 = arith.constant 0 : index
    %204 = vector.load %arg7[%c8_145, %c0_146, %c0_147] : memref<9x16x32xf32, #tpu.memory_space<vmem>>, vector<1x16x32xf32>
    %205 = vector.shape_cast %204 : vector<1x16x32xf32> to vector<16x32xf32>
    %cst_148 = arith.constant dense<0.000000e+00> : vector<16x256xf32>
    %206 = tpu.matmul %205, %203, %cst_148 {dimension_numbers = #tpu.dot_dimension_numbers<[1], [0], [0], [1], [0, 0, 1, 1], [], []>} : vector<16x32xf32>, vector<32x256xf32>, vector<16x256xf32> -> vector<16x256xf32>
    %207 = vector.broadcast %15 : vector<1x256xf32> to vector<16x256xf32>
    %208 = arith.mulf %206, %207 : vector<16x256xf32>
    %209 = arith.addf %202, %208 : vector<16x256xf32>
    %c0_149 = arith.constant 0 : index
    %c0_150 = arith.constant 0 : index
    %210 = vector.load %arg8[%c0_149, %c0_150] : memref<16x1xf32, #tpu.memory_space<vmem>>, vector<16x1xf32>
    %211 = vector.broadcast %210 : vector<16x1xf32> to vector<16x256xf32>
    %212 = arith.addf %209, %211 : vector<16x256xf32>
    %cst_151 = arith.constant 5.000000e-02 : f32
    %213 = vector.broadcast %cst_151 : f32 to vector<16x256xf32>
    %214 = arith.mulf %213, %212 : vector<16x256xf32>
    %215 = arith.maximumf %212, %214 : vector<16x256xf32>
    %cst_152 = arith.constant 0.000000e+00 : f32
    %216 = vector.broadcast %cst_152 : f32 to vector<8x256xf32>
    %c17_i32_153 = arith.constant 17 : i32
    %217 = tpu.dynamic_rotate %215 by %c17_i32_153 dim 1 : vector<16x256xf32>, i32 -> vector<16x256xf32>
    %c0_154 = arith.constant 0 : index
    %c0_155 = arith.constant 0 : index
    %c0_156 = arith.constant 0 : index
    %218 = vector.load %arg9[%c0_154, %c0_155, %c0_156] : memref<9x8x16xf32, #tpu.memory_space<vmem>>, vector<1x8x16xf32>
    %219 = vector.shape_cast %218 : vector<1x8x16xf32> to vector<8x16xf32>
    %cst_157 = arith.constant dense<0.000000e+00> : vector<8x256xf32>
    %220 = tpu.matmul %219, %217, %cst_157 {dimension_numbers = #tpu.dot_dimension_numbers<[1], [0], [0], [1], [0, 0, 1, 1], [], []>} : vector<8x16xf32>, vector<16x256xf32>, vector<8x256xf32> -> vector<8x256xf32>
    %221 = vector.broadcast %1 : vector<1x256xf32> to vector<8x256xf32>
    %222 = arith.mulf %220, %221 : vector<8x256xf32>
    %223 = arith.addf %216, %222 : vector<8x256xf32>
    %c16_i32_158 = arith.constant 16 : i32
    %224 = tpu.dynamic_rotate %215 by %c16_i32_158 dim 1 : vector<16x256xf32>, i32 -> vector<16x256xf32>
    %c1_159 = arith.constant 1 : index
    %c0_160 = arith.constant 0 : index
    %c0_161 = arith.constant 0 : index
    %225 = vector.load %arg9[%c1_159, %c0_160, %c0_161] : memref<9x8x16xf32, #tpu.memory_space<vmem>>, vector<1x8x16xf32>
    %226 = vector.shape_cast %225 : vector<1x8x16xf32> to vector<8x16xf32>
    %cst_162 = arith.constant dense<0.000000e+00> : vector<8x256xf32>
    %227 = tpu.matmul %226, %224, %cst_162 {dimension_numbers = #tpu.dot_dimension_numbers<[1], [0], [0], [1], [0, 0, 1, 1], [], []>} : vector<8x16xf32>, vector<16x256xf32>, vector<8x256xf32> -> vector<8x256xf32>
    %228 = vector.broadcast %3 : vector<1x256xf32> to vector<8x256xf32>
    %229 = arith.mulf %227, %228 : vector<8x256xf32>
    %230 = arith.addf %223, %229 : vector<8x256xf32>
    %c15_i32_163 = arith.constant 15 : i32
    %231 = tpu.dynamic_rotate %215 by %c15_i32_163 dim 1 : vector<16x256xf32>, i32 -> vector<16x256xf32>
    %c2_164 = arith.constant 2 : index
    %c0_165 = arith.constant 0 : index
    %c0_166 = arith.constant 0 : index
    %232 = vector.load %arg9[%c2_164, %c0_165, %c0_166] : memref<9x8x16xf32, #tpu.memory_space<vmem>>, vector<1x8x16xf32>
    %233 = vector.shape_cast %232 : vector<1x8x16xf32> to vector<8x16xf32>
    %cst_167 = arith.constant dense<0.000000e+00> : vector<8x256xf32>
    %234 = tpu.matmul %233, %231, %cst_167 {dimension_numbers = #tpu.dot_dimension_numbers<[1], [0], [0], [1], [0, 0, 1, 1], [], []>} : vector<8x16xf32>, vector<16x256xf32>, vector<8x256xf32> -> vector<8x256xf32>
    %235 = vector.broadcast %5 : vector<1x256xf32> to vector<8x256xf32>
    %236 = arith.mulf %234, %235 : vector<8x256xf32>
    %237 = arith.addf %230, %236 : vector<8x256xf32>
    %c1_i32_168 = arith.constant 1 : i32
    %238 = tpu.dynamic_rotate %215 by %c1_i32_168 dim 1 : vector<16x256xf32>, i32 -> vector<16x256xf32>
    %c3_169 = arith.constant 3 : index
    %c0_170 = arith.constant 0 : index
    %c0_171 = arith.constant 0 : index
    %239 = vector.load %arg9[%c3_169, %c0_170, %c0_171] : memref<9x8x16xf32, #tpu.memory_space<vmem>>, vector<1x8x16xf32>
    %240 = vector.shape_cast %239 : vector<1x8x16xf32> to vector<8x16xf32>
    %cst_172 = arith.constant dense<0.000000e+00> : vector<8x256xf32>
    %241 = tpu.matmul %240, %238, %cst_172 {dimension_numbers = #tpu.dot_dimension_numbers<[1], [0], [0], [1], [0, 0, 1, 1], [], []>} : vector<8x16xf32>, vector<16x256xf32>, vector<8x256xf32> -> vector<8x256xf32>
    %242 = vector.broadcast %7 : vector<1x256xf32> to vector<8x256xf32>
    %243 = arith.mulf %241, %242 : vector<8x256xf32>
    %244 = arith.addf %237, %243 : vector<8x256xf32>
    %c4_173 = arith.constant 4 : index
    %c0_174 = arith.constant 0 : index
    %c0_175 = arith.constant 0 : index
    %245 = vector.load %arg9[%c4_173, %c0_174, %c0_175] : memref<9x8x16xf32, #tpu.memory_space<vmem>>, vector<1x8x16xf32>
    %246 = vector.shape_cast %245 : vector<1x8x16xf32> to vector<8x16xf32>
    %cst_176 = arith.constant dense<0.000000e+00> : vector<8x256xf32>
    %247 = tpu.matmul %246, %215, %cst_176 {dimension_numbers = #tpu.dot_dimension_numbers<[1], [0], [0], [1], [0, 0, 1, 1], [], []>} : vector<8x16xf32>, vector<16x256xf32>, vector<8x256xf32> -> vector<8x256xf32>
    %248 = arith.addf %244, %247 : vector<8x256xf32>
    %c255_i32_177 = arith.constant 255 : i32
    %249 = tpu.dynamic_rotate %215 by %c255_i32_177 dim 1 : vector<16x256xf32>, i32 -> vector<16x256xf32>
    %c5_178 = arith.constant 5 : index
    %c0_179 = arith.constant 0 : index
    %c0_180 = arith.constant 0 : index
    %250 = vector.load %arg9[%c5_178, %c0_179, %c0_180] : memref<9x8x16xf32, #tpu.memory_space<vmem>>, vector<1x8x16xf32>
    %251 = vector.shape_cast %250 : vector<1x8x16xf32> to vector<8x16xf32>
    %cst_181 = arith.constant dense<0.000000e+00> : vector<8x256xf32>
    %252 = tpu.matmul %251, %249, %cst_181 {dimension_numbers = #tpu.dot_dimension_numbers<[1], [0], [0], [1], [0, 0, 1, 1], [], []>} : vector<8x16xf32>, vector<16x256xf32>, vector<8x256xf32> -> vector<8x256xf32>
    %253 = vector.broadcast %9 : vector<1x256xf32> to vector<8x256xf32>
    %254 = arith.mulf %252, %253 : vector<8x256xf32>
    %255 = arith.addf %248, %254 : vector<8x256xf32>
    %c241_i32_182 = arith.constant 241 : i32
    %256 = tpu.dynamic_rotate %215 by %c241_i32_182 dim 1 : vector<16x256xf32>, i32 -> vector<16x256xf32>
    %c6_183 = arith.constant 6 : index
    %c0_184 = arith.constant 0 : index
    %c0_185 = arith.constant 0 : index
    %257 = vector.load %arg9[%c6_183, %c0_184, %c0_185] : memref<9x8x16xf32, #tpu.memory_space<vmem>>, vector<1x8x16xf32>
    %258 = vector.shape_cast %257 : vector<1x8x16xf32> to vector<8x16xf32>
    %cst_186 = arith.constant dense<0.000000e+00> : vector<8x256xf32>
    %259 = tpu.matmul %258, %256, %cst_186 {dimension_numbers = #tpu.dot_dimension_numbers<[1], [0], [0], [1], [0, 0, 1, 1], [], []>} : vector<8x16xf32>, vector<16x256xf32>, vector<8x256xf32> -> vector<8x256xf32>
    %260 = vector.broadcast %11 : vector<1x256xf32> to vector<8x256xf32>
    %261 = arith.mulf %259, %260 : vector<8x256xf32>
    %262 = arith.addf %255, %261 : vector<8x256xf32>
    %c240_i32_187 = arith.constant 240 : i32
    %263 = tpu.dynamic_rotate %215 by %c240_i32_187 dim 1 : vector<16x256xf32>, i32 -> vector<16x256xf32>
    %c7_188 = arith.constant 7 : index
    %c0_189 = arith.constant 0 : index
    %c0_190 = arith.constant 0 : index
    %264 = vector.load %arg9[%c7_188, %c0_189, %c0_190] : memref<9x8x16xf32, #tpu.memory_space<vmem>>, vector<1x8x16xf32>
    %265 = vector.shape_cast %264 : vector<1x8x16xf32> to vector<8x16xf32>
    %cst_191 = arith.constant dense<0.000000e+00> : vector<8x256xf32>
    %266 = tpu.matmul %265, %263, %cst_191 {dimension_numbers = #tpu.dot_dimension_numbers<[1], [0], [0], [1], [0, 0, 1, 1], [], []>} : vector<8x16xf32>, vector<16x256xf32>, vector<8x256xf32> -> vector<8x256xf32>
    %267 = vector.broadcast %13 : vector<1x256xf32> to vector<8x256xf32>
    %268 = arith.mulf %266, %267 : vector<8x256xf32>
    %269 = arith.addf %262, %268 : vector<8x256xf32>
    %c239_i32_192 = arith.constant 239 : i32
    %270 = tpu.dynamic_rotate %215 by %c239_i32_192 dim 1 : vector<16x256xf32>, i32 -> vector<16x256xf32>
    %c8_193 = arith.constant 8 : index
    %c0_194 = arith.constant 0 : index
    %c0_195 = arith.constant 0 : index
    %271 = vector.load %arg9[%c8_193, %c0_194, %c0_195] : memref<9x8x16xf32, #tpu.memory_space<vmem>>, vector<1x8x16xf32>
    %272 = vector.shape_cast %271 : vector<1x8x16xf32> to vector<8x16xf32>
    %cst_196 = arith.constant dense<0.000000e+00> : vector<8x256xf32>
    %273 = tpu.matmul %272, %270, %cst_196 {dimension_numbers = #tpu.dot_dimension_numbers<[1], [0], [0], [1], [0, 0, 1, 1], [], []>} : vector<8x16xf32>, vector<16x256xf32>, vector<8x256xf32> -> vector<8x256xf32>
    %274 = vector.broadcast %15 : vector<1x256xf32> to vector<8x256xf32>
    %275 = arith.mulf %273, %274 : vector<8x256xf32>
    %276 = arith.addf %269, %275 : vector<8x256xf32>
    %c0_197 = arith.constant 0 : index
    %c0_198 = arith.constant 0 : index
    %277 = vector.load %arg10[%c0_197, %c0_198] : memref<8x1xf32, #tpu.memory_space<vmem>>, vector<8x1xf32>
    %278 = vector.broadcast %277 : vector<8x1xf32> to vector<8x256xf32>
    %279 = arith.addf %276, %278 : vector<8x256xf32>
    %cst_199 = arith.constant 5.000000e-02 : f32
    %280 = vector.broadcast %cst_199 : f32 to vector<8x256xf32>
    %281 = arith.mulf %280, %279 : vector<8x256xf32>
    %282 = arith.maximumf %279, %281 : vector<8x256xf32>
    %cst_200 = arith.constant 0.000000e+00 : f32
    %283 = vector.broadcast %cst_200 : f32 to vector<1x256xf32>
    %c17_i32_201 = arith.constant 17 : i32
    %284 = tpu.dynamic_rotate %282 by %c17_i32_201 dim 1 : vector<8x256xf32>, i32 -> vector<8x256xf32>
    %c0_202 = arith.constant 0 : index
    %c0_203 = arith.constant 0 : index
    %c0_204 = arith.constant 0 : index
    %285 = vector.load %arg11[%c0_202, %c0_203, %c0_204] : memref<9x1x8xf32, #tpu.memory_space<vmem>>, vector<1x1x8xf32>
    %286 = vector.shape_cast %285 : vector<1x1x8xf32> to vector<1x8xf32>
    %cst_205 = arith.constant dense<0.000000e+00> : vector<1x256xf32>
    %287 = tpu.matmul %286, %284, %cst_205 {dimension_numbers = #tpu.dot_dimension_numbers<[1], [0], [0], [1], [0, 0, 1, 1], [], []>} : vector<1x8xf32>, vector<8x256xf32>, vector<1x256xf32> -> vector<1x256xf32>
    %288 = arith.mulf %287, %1 : vector<1x256xf32>
    %289 = arith.addf %283, %288 : vector<1x256xf32>
    %c16_i32_206 = arith.constant 16 : i32
    %290 = tpu.dynamic_rotate %282 by %c16_i32_206 dim 1 : vector<8x256xf32>, i32 -> vector<8x256xf32>
    %c1_207 = arith.constant 1 : index
    %c0_208 = arith.constant 0 : index
    %c0_209 = arith.constant 0 : index
    %291 = vector.load %arg11[%c1_207, %c0_208, %c0_209] : memref<9x1x8xf32, #tpu.memory_space<vmem>>, vector<1x1x8xf32>
    %292 = vector.shape_cast %291 : vector<1x1x8xf32> to vector<1x8xf32>
    %cst_210 = arith.constant dense<0.000000e+00> : vector<1x256xf32>
    %293 = tpu.matmul %292, %290, %cst_210 {dimension_numbers = #tpu.dot_dimension_numbers<[1], [0], [0], [1], [0, 0, 1, 1], [], []>} : vector<1x8xf32>, vector<8x256xf32>, vector<1x256xf32> -> vector<1x256xf32>
    %294 = arith.mulf %293, %3 : vector<1x256xf32>
    %295 = arith.addf %289, %294 : vector<1x256xf32>
    %c15_i32_211 = arith.constant 15 : i32
    %296 = tpu.dynamic_rotate %282 by %c15_i32_211 dim 1 : vector<8x256xf32>, i32 -> vector<8x256xf32>
    %c2_212 = arith.constant 2 : index
    %c0_213 = arith.constant 0 : index
    %c0_214 = arith.constant 0 : index
    %297 = vector.load %arg11[%c2_212, %c0_213, %c0_214] : memref<9x1x8xf32, #tpu.memory_space<vmem>>, vector<1x1x8xf32>
    %298 = vector.shape_cast %297 : vector<1x1x8xf32> to vector<1x8xf32>
    %cst_215 = arith.constant dense<0.000000e+00> : vector<1x256xf32>
    %299 = tpu.matmul %298, %296, %cst_215 {dimension_numbers = #tpu.dot_dimension_numbers<[1], [0], [0], [1], [0, 0, 1, 1], [], []>} : vector<1x8xf32>, vector<8x256xf32>, vector<1x256xf32> -> vector<1x256xf32>
    %300 = arith.mulf %299, %5 : vector<1x256xf32>
    %301 = arith.addf %295, %300 : vector<1x256xf32>
    %c1_i32_216 = arith.constant 1 : i32
    %302 = tpu.dynamic_rotate %282 by %c1_i32_216 dim 1 : vector<8x256xf32>, i32 -> vector<8x256xf32>
    %c3_217 = arith.constant 3 : index
    %c0_218 = arith.constant 0 : index
    %c0_219 = arith.constant 0 : index
    %303 = vector.load %arg11[%c3_217, %c0_218, %c0_219] : memref<9x1x8xf32, #tpu.memory_space<vmem>>, vector<1x1x8xf32>
    %304 = vector.shape_cast %303 : vector<1x1x8xf32> to vector<1x8xf32>
    %cst_220 = arith.constant dense<0.000000e+00> : vector<1x256xf32>
    %305 = tpu.matmul %304, %302, %cst_220 {dimension_numbers = #tpu.dot_dimension_numbers<[1], [0], [0], [1], [0, 0, 1, 1], [], []>} : vector<1x8xf32>, vector<8x256xf32>, vector<1x256xf32> -> vector<1x256xf32>
    %306 = arith.mulf %305, %7 : vector<1x256xf32>
    %307 = arith.addf %301, %306 : vector<1x256xf32>
    %c4_221 = arith.constant 4 : index
    %c0_222 = arith.constant 0 : index
    %c0_223 = arith.constant 0 : index
    %308 = vector.load %arg11[%c4_221, %c0_222, %c0_223] : memref<9x1x8xf32, #tpu.memory_space<vmem>>, vector<1x1x8xf32>
    %309 = vector.shape_cast %308 : vector<1x1x8xf32> to vector<1x8xf32>
    %cst_224 = arith.constant dense<0.000000e+00> : vector<1x256xf32>
    %310 = tpu.matmul %309, %282, %cst_224 {dimension_numbers = #tpu.dot_dimension_numbers<[1], [0], [0], [1], [0, 0, 1, 1], [], []>} : vector<1x8xf32>, vector<8x256xf32>, vector<1x256xf32> -> vector<1x256xf32>
    %311 = arith.addf %307, %310 : vector<1x256xf32>
    %c255_i32_225 = arith.constant 255 : i32
    %312 = tpu.dynamic_rotate %282 by %c255_i32_225 dim 1 : vector<8x256xf32>, i32 -> vector<8x256xf32>
    %c5_226 = arith.constant 5 : index
    %c0_227 = arith.constant 0 : index
    %c0_228 = arith.constant 0 : index
    %313 = vector.load %arg11[%c5_226, %c0_227, %c0_228] : memref<9x1x8xf32, #tpu.memory_space<vmem>>, vector<1x1x8xf32>
    %314 = vector.shape_cast %313 : vector<1x1x8xf32> to vector<1x8xf32>
    %cst_229 = arith.constant dense<0.000000e+00> : vector<1x256xf32>
    %315 = tpu.matmul %314, %312, %cst_229 {dimension_numbers = #tpu.dot_dimension_numbers<[1], [0], [0], [1], [0, 0, 1, 1], [], []>} : vector<1x8xf32>, vector<8x256xf32>, vector<1x256xf32> -> vector<1x256xf32>
    %316 = arith.mulf %315, %9 : vector<1x256xf32>
    %317 = arith.addf %311, %316 : vector<1x256xf32>
    %c241_i32_230 = arith.constant 241 : i32
    %318 = tpu.dynamic_rotate %282 by %c241_i32_230 dim 1 : vector<8x256xf32>, i32 -> vector<8x256xf32>
    %c6_231 = arith.constant 6 : index
    %c0_232 = arith.constant 0 : index
    %c0_233 = arith.constant 0 : index
    %319 = vector.load %arg11[%c6_231, %c0_232, %c0_233] : memref<9x1x8xf32, #tpu.memory_space<vmem>>, vector<1x1x8xf32>
    %320 = vector.shape_cast %319 : vector<1x1x8xf32> to vector<1x8xf32>
    %cst_234 = arith.constant dense<0.000000e+00> : vector<1x256xf32>
    %321 = tpu.matmul %320, %318, %cst_234 {dimension_numbers = #tpu.dot_dimension_numbers<[1], [0], [0], [1], [0, 0, 1, 1], [], []>} : vector<1x8xf32>, vector<8x256xf32>, vector<1x256xf32> -> vector<1x256xf32>
    %322 = arith.mulf %321, %11 : vector<1x256xf32>
    %323 = arith.addf %317, %322 : vector<1x256xf32>
    %c240_i32_235 = arith.constant 240 : i32
    %324 = tpu.dynamic_rotate %282 by %c240_i32_235 dim 1 : vector<8x256xf32>, i32 -> vector<8x256xf32>
    %c7_236 = arith.constant 7 : index
    %c0_237 = arith.constant 0 : index
    %c0_238 = arith.constant 0 : index
    %325 = vector.load %arg11[%c7_236, %c0_237, %c0_238] : memref<9x1x8xf32, #tpu.memory_space<vmem>>, vector<1x1x8xf32>
    %326 = vector.shape_cast %325 : vector<1x1x8xf32> to vector<1x8xf32>
    %cst_239 = arith.constant dense<0.000000e+00> : vector<1x256xf32>
    %327 = tpu.matmul %326, %324, %cst_239 {dimension_numbers = #tpu.dot_dimension_numbers<[1], [0], [0], [1], [0, 0, 1, 1], [], []>} : vector<1x8xf32>, vector<8x256xf32>, vector<1x256xf32> -> vector<1x256xf32>
    %328 = arith.mulf %327, %13 : vector<1x256xf32>
    %329 = arith.addf %323, %328 : vector<1x256xf32>
    %c239_i32_240 = arith.constant 239 : i32
    %330 = tpu.dynamic_rotate %282 by %c239_i32_240 dim 1 : vector<8x256xf32>, i32 -> vector<8x256xf32>
    %c8_241 = arith.constant 8 : index
    %c0_242 = arith.constant 0 : index
    %c0_243 = arith.constant 0 : index
    %331 = vector.load %arg11[%c8_241, %c0_242, %c0_243] : memref<9x1x8xf32, #tpu.memory_space<vmem>>, vector<1x1x8xf32>
    %332 = vector.shape_cast %331 : vector<1x1x8xf32> to vector<1x8xf32>
    %cst_244 = arith.constant dense<0.000000e+00> : vector<1x256xf32>
    %333 = tpu.matmul %332, %330, %cst_244 {dimension_numbers = #tpu.dot_dimension_numbers<[1], [0], [0], [1], [0, 0, 1, 1], [], []>} : vector<1x8xf32>, vector<8x256xf32>, vector<1x256xf32> -> vector<1x256xf32>
    %334 = arith.mulf %333, %15 : vector<1x256xf32>
    %335 = arith.addf %329, %334 : vector<1x256xf32>
    %c0_245 = arith.constant 0 : index
    %c0_246 = arith.constant 0 : index
    %336 = vector.load %arg12[%c0_245, %c0_246] : memref<1x1xf32, #tpu.memory_space<vmem>>, vector<1x1xf32>
    %337 = vector.broadcast %336 : vector<1x1xf32> to vector<1x256xf32>
    %338 = arith.addf %335, %337 : vector<1x256xf32>
    %cst_247 = arith.constant 5.000000e-02 : f32
    %339 = vector.broadcast %cst_247 : f32 to vector<1x256xf32>
    %340 = arith.mulf %339, %338 : vector<1x256xf32>
    %341 = arith.maximumf %338, %340 : vector<1x256xf32>
    %342 = vector.shape_cast %341 : vector<1x256xf32> to vector<1x1x256xf32>
    %c0_248 = arith.constant 0 : index
    %c0_249 = arith.constant 0 : index
    %c0_250 = arith.constant 0 : index
    %343 = vector.load %arg13[%c0_248, %c0_249, %c0_250] : memref<1x1x256xf32, #tpu.memory_space<vmem>>, vector<1x1x256xf32>
    tpu.vector_store %arg13[%c0_248, %c0_249, %c0_250], %342 {strides = array<i32>} : memref<1x1x256xf32, #tpu.memory_space<vmem>>, vector<1x1x256xf32>,
    return
  }
  func.func @transform_0(%arg0: i32) -> (i32, i32, i32) {
    %c0_i32 = arith.constant 0 : i32
    %c0_i32_0 = arith.constant 0 : i32
    %c0_i32_1 = arith.constant 0 : i32
    %c0_i32_2 = arith.constant 0 : i32
    return %c0_i32, %c0_i32_0, %c0_i32_1 : i32, i32, i32
  }
  func.func @transform_1(%arg0: i32) -> (i32, i32, i32) {
    %c0_i32 = arith.constant 0 : i32
    %c0_i32_0 = arith.constant 0 : i32
    %c0_i32_1 = arith.constant 0 : i32
    return %arg0, %c0_i32, %c0_i32_0 : i32, i32, i32
  }
  func.func @transform_2(%arg0: i32) -> (i32, i32, i32) {
    %c0_i32 = arith.constant 0 : i32
    %c0_i32_0 = arith.constant 0 : i32
    %c0_i32_1 = arith.constant 0 : i32
    %c0_i32_2 = arith.constant 0 : i32
    return %c0_i32, %c0_i32_0, %c0_i32_1 : i32, i32, i32
  }
  func.func @transform_3(%arg0: i32) -> (i32, i32) {
    %c0_i32 = arith.constant 0 : i32
    %c0_i32_0 = arith.constant 0 : i32
    %c0_i32_1 = arith.constant 0 : i32
    return %c0_i32, %c0_i32_0 : i32, i32
  }
  func.func @transform_4(%arg0: i32) -> (i32, i32, i32) {
    %c0_i32 = arith.constant 0 : i32
    %c0_i32_0 = arith.constant 0 : i32
    %c0_i32_1 = arith.constant 0 : i32
    %c0_i32_2 = arith.constant 0 : i32
    return %c0_i32, %c0_i32_0, %c0_i32_1 : i32, i32, i32
  }
  func.func @transform_5(%arg0: i32) -> (i32, i32) {
    %c0_i32 = arith.constant 0 : i32
    %c0_i32_0 = arith.constant 0 : i32
    %c0_i32_1 = arith.constant 0 : i32
    return %c0_i32, %c0_i32_0 : i32, i32
  }
  func.func @transform_6(%arg0: i32) -> (i32, i32, i32) {
    %c0_i32 = arith.constant 0 : i32
    %c0_i32_0 = arith.constant 0 : i32
    %c0_i32_1 = arith.constant 0 : i32
    %c0_i32_2 = arith.constant 0 : i32
    return %c0_i32, %c0_i32_0, %c0_i32_1 : i32, i32, i32
  }
  func.func @transform_7(%arg0: i32) -> (i32, i32) {
    %c0_i32 = arith.constant 0 : i32
    %c0_i32_0 = arith.constant 0 : i32
    %c0_i32_1 = arith.constant 0 : i32
    return %c0_i32, %c0_i32_0 : i32, i32
  }
  func.func @transform_8(%arg0: i32) -> (i32, i32, i32) {
    %c0_i32 = arith.constant 0 : i32
    %c0_i32_0 = arith.constant 0 : i32
    %c0_i32_1 = arith.constant 0 : i32
    %c0_i32_2 = arith.constant 0 : i32
    return %c0_i32, %c0_i32_0, %c0_i32_1 : i32, i32, i32
  }
  func.func @transform_9(%arg0: i32) -> (i32, i32) {
    %c0_i32 = arith.constant 0 : i32
    %c0_i32_0 = arith.constant 0 : i32
    %c0_i32_1 = arith.constant 0 : i32
    return %c0_i32, %c0_i32_0 : i32, i32
  }
  func.func @transform_10(%arg0: i32) -> (i32, i32, i32) {
    %c0_i32 = arith.constant 0 : i32
    %c0_i32_0 = arith.constant 0 : i32
    %c0_i32_1 = arith.constant 0 : i32
    %c0_i32_2 = arith.constant 0 : i32
    return %c0_i32, %c0_i32_0, %c0_i32_1 : i32, i32, i32
  }
  func.func @transform_11(%arg0: i32) -> (i32, i32) {
    %c0_i32 = arith.constant 0 : i32
    %c0_i32_0 = arith.constant 0 : i32
    %c0_i32_1 = arith.constant 0 : i32
    return %c0_i32, %c0_i32_0 : i32, i32
  }
  func.func @transform_12(%arg0: i32) -> (i32, i32, i32) {
    %c0_i32 = arith.constant 0 : i32
    %c0_i32_0 = arith.constant 0 : i32
    %c0_i32_1 = arith.constant 0 : i32
    return %arg0, %c0_i32, %c0_i32_0 : i32, i32, i32
  }
}

</mosaic_0001>

<llo_original>
// kernel: dcnet_forward.1
$region0: #{dcnet_forward.1}
  #allocation0 [shape = 'u32[]', space=smem, size = 0x4, offset = 0x4, fixed_abs, tag = 'smem constant byte address 0x4 - core index']
  #allocation1 [shape = 'u32[72,128]{1,0:T(1,128)}', space=vmem, size = 0x9000, scoped, tag = 'internal scratch']
  #allocation2 [shape = 'f32[1,1]{1,0:T(1,128)S(1)}', space=vmem, size = 0x200, scoped, tag = 'scoped memory for dcnet_forward.1']
  %s0 = inlined_call_operand.vmem [shape: f32[9,1,256], index: 0, kind: input, shape index: {}]
  %s1 = inlined_call_operand.vmem [shape: f32[2,6,256], index: 1, kind: input, shape index: {}]
  %s2 = inlined_call_operand.vmem [shape: f32[9,64,6], index: 2, kind: input, shape index: {}]
  %s3 = inlined_call_operand.vmem [shape: f32[64,1], index: 3, kind: input, shape index: {}]
  %s4 = inlined_call_operand.vmem [shape: f32[9,32,64], index: 4, kind: input, shape index: {}]
  %s5 = inlined_call_operand.vmem [shape: f32[32,1], index: 5, kind: input, shape index: {}]
  %s6 = inlined_call_operand.vmem [shape: f32[9,16,32], index: 6, kind: input, shape index: {}]
  %s7 = inlined_call_operand.vmem [shape: f32[16,1], index: 7, kind: input, shape index: {}]
  %s8 = inlined_call_operand.vmem [shape: f32[9,8,16], index: 8, kind: input, shape index: {}]
  %s9 = inlined_call_operand.vmem [shape: f32[8,1], index: 9, kind: input, shape index: {}]
  %s10 = inlined_call_operand.vmem [shape: f32[9,1,8], index: 10, kind: input, shape index: {}]
  %s11 = inlined_call_operand.<no memory space> [shape: f32[1,1], index: 11, kind: input, shape index: {}]
  %s12 = inlined_call_operand.vmem [shape: f32[2,1,256], index: 12, kind: output, shape index: {}]
  %s13 = sld [smem:[#allocation0]]
  $region81: #{dcnet_forward.1} parent=0
    _
  %s15 = ssub.s32 1, %s13
  %s16 = scalar_select 0, %s15, %s13
  %v17 = vstv %s11
  %18 = vst [vmem:[#allocation2] sm:$0x1] %v17
  loop: start=0, step=1, limit=4
  $region2: #{dcnet_forward.1} parent=0 // loop_pre_header
    _
  $region3: #{dcnet_forward.1} parent=0 // loop_header
    %s20 = sphi 0, %s24
    %p21 = scmp.ge.s32.totalorder %s20, 4
    %s28 = sphi 0, %s28
    %s30 = sphi 0, %s28
    %s31 = sphi 0, %s30
    %s45 = sphi 0, %s31
    %s51 = sphi 0, %s53
    %s54 = sphi 0, %s51
    %s55 = sphi 0, %s54
    %s71 = sphi 0, %s55
    %s75 = sphi 0, %s75
    %s77 = sphi 0, %s75
    %s78 = sphi 0, %s77
    %s92 = sphi 0, %s78
    %s96 = sphi 0, %s96
    %s98 = sphi 0, %s96
    %s99 = sphi 0, %s98
    %s113 = sphi 0, %s99
    %s117 = sphi 0, %s117
    %s119 = sphi 0, %s117
    %s120 = sphi 0, %s119
    %s134 = sphi 0, %s120
    %s138 = sphi 0, %s138
    %s140 = sphi 0, %s138
    %s141 = sphi 0, %s140
    %s155 = sphi 0, %s141
    %s159 = sphi 0, %s159
    %s161 = sphi 0, %s159
    %s162 = sphi 0, %s161
    %s176 = sphi 0, %s162
    %s180 = sphi 0, %s180
    %s182 = sphi 0, %s180
    %s183 = sphi 0, %s182
    %s197 = sphi 0, %s183
    %s201 = sphi 0, %s201
    %s203 = sphi 0, %s201
    %s204 = sphi 0, %s203
    %s218 = sphi 0, %s204
    %s222 = sphi 0, %s222
    %s224 = sphi 0, %s222
    %s225 = sphi 0, %s224
    %s239 = sphi 0, %s225
    %s243 = sphi 0, %s243
    %s245 = sphi 0, %s243
    %s246 = sphi 0, %s245
    %s260 = sphi 0, %s246
    %s264 = sphi 0, %s264
    %s266 = sphi 0, %s264
    %s267 = sphi 0, %s266
    %s281 = sphi 0, %s267
    %s287 = sphi 0, %s289
    %s290 = sphi 0, %s287
    %s291 = sphi 0, %s290
    %s307 = sphi 0, %s291
  $region4: #{dcnet_forward.1} parent=0 // loop_header_branch
    %23 = sbr.rel (%p21) target = $region8
  $region5: #{dcnet_forward.1} parent=0 // loop_body
    %s25 = ssub.s32 %s20, 1
    %s26 = ssub.s32 %s20, 2
    %s27 = sadd.s32 %s20, 1
    %s29 = sadd.s32 %s28, 1
    %p32 = scmp.eq.s32.totalorder %s20, 1
    %p33 = scmp.ne.s32.totalorder %s28, %s30
    %p34 = scmp.eq.s32.totalorder %s20, 0
    %p35 = por %p33, %p34
    %p36 = scmp.ne.s32.totalorder %s28, %s30
    %p37 = scmp.eq.s32.totalorder %s25, 1
    %p38 = por %p36, %p37
    %p39 = scmp.ne.s32.totalorder %s30, %s31
    %p40 = scmp.eq.s32.totalorder %s25, 0
    %p41 = por %p39, %p40
    %p42 = scmp.ne.s32.totalorder %s30, %s31
    %p43 = scmp.eq.s32.totalorder %s26, 1
    %p44 = por %p42, %p43
    %p46 = scmp.ne.s32.totalorder %s31, %s45
    %p47 = scmp.eq.s32.totalorder %s26, 0
    %p48 = por %p46, %p47
    %s49 = ssub.s32 %s20, %s27
    %p50 = scmp.eq.s32.totalorder %s49, 0
    %s52 = sadd.s32 %s51, 1
    %s53 = scalar_select %p50, %s51, %s52
    %p56 = pneg %p50
    %p57 = scmp.eq.s32.totalorder %s20, 1
    %p58 = por %p56, %p57
    %p59 = scmp.ne.s32.totalorder %s51, %s54
    %p60 = scmp.eq.s32.totalorder %s20, 0
    %p61 = por %p59, %p60
    %p62 = scmp.ne.s32.totalorder %s51, %s54
    %p63 = scmp.eq.s32.totalorder %s25, 1
    %p64 = por %p62, %p63
    %p65 = scmp.ne.s32.totalorder %s54, %s55
    %p66 = scmp.eq.s32.totalorder %s25, 0
    %p67 = por %p65, %p66
    %p68 = scmp.ne.s32.totalorder %s54, %s55
    %p69 = scmp.eq.s32.totalorder %s26, 1
    %p70 = por %p68, %p69
    %p72 = scmp.ne.s32.totalorder %s55, %s71
    %p73 = scmp.eq.s32.totalorder %s26, 0
    %p74 = por %p72, %p73
    %s76 = sadd.s32 %s75, 1
    %p79 = scmp.eq.s32.totalorder %s20, 1
    %p80 = scmp.ne.s32.totalorder %s75, %s77
    %p81 = scmp.eq.s32.totalorder %s20, 0
    %p82 = por %p80, %p81
    %p83 = scmp.ne.s32.totalorder %s75, %s77
    %p84 = scmp.eq.s32.totalorder %s25, 1
    %p85 = por %p83, %p84
    %p86 = scmp.ne.s32.totalorder %s77, %s78
    %p87 = scmp.eq.s32.totalorder %s25, 0
    %p88 = por %p86, %p87
    %p89 = scmp.ne.s32.totalorder %s77, %s78
    %p90 = scmp.eq.s32.totalorder %s26, 1
    %p91 = por %p89, %p90
    %p93 = scmp.ne.s32.totalorder %s78, %s92
    %p94 = scmp.eq.s32.totalorder %s26, 0
    %p95 = por %p93, %p94
    %s97 = sadd.s32 %s96, 1
    %p100 = scmp.eq.s32.totalorder %s20, 1
    %p101 = scmp.ne.s32.totalorder %s96, %s98
    %p102 = scmp.eq.s32.totalorder %s20, 0
    %p103 = por %p101, %p102
    %p104 = scmp.ne.s32.totalorder %s96, %s98
    %p105 = scmp.eq.s32.totalorder %s25, 1
    %p106 = por %p104, %p105
    %p107 = scmp.ne.s32.totalorder %s98, %s99
    %p108 = scmp.eq.s32.totalorder %s25, 0
    %p109 = por %p107, %p108
    %p110 = scmp.ne.s32.totalorder %s98, %s99
    %p111 = scmp.eq.s32.totalorder %s26, 1
    %p112 = por %p110, %p111
    %p114 = scmp.ne.s32.totalorder %s99, %s113
    %p115 = scmp.eq.s32.totalorder %s26, 0
    %p116 = por %p114, %p115
    %s118 = sadd.s32 %s117, 1
    %p121 = scmp.eq.s32.totalorder %s20, 1
    %p122 = scmp.ne.s32.totalorder %s117, %s119
    %p123 = scmp.eq.s32.totalorder %s20, 0
    %p124 = por %p122, %p123
    %p125 = scmp.ne.s32.totalorder %s117, %s119
    %p126 = scmp.eq.s32.totalorder %s25, 1
    %p127 = por %p125, %p126
    %p128 = scmp.ne.s32.totalorder %s119, %s120
    %p129 = scmp.eq.s32.totalorder %s25, 0
    %p130 = por %p128, %p129
    %p131 = scmp.ne.s32.totalorder %s119, %s120
    %p132 = scmp.eq.s32.totalorder %s26, 1
    %p133 = por %p131, %p132
    %p135 = scmp.ne.s32.totalorder %s120, %s134
    %p136 = scmp.eq.s32.totalorder %s26, 0
    %p137 = por %p135, %p136
    %s139 = sadd.s32 %s138, 1
    %p142 = scmp.eq.s32.totalorder %s20, 1
    %p143 = scmp.ne.s32.totalorder %s138, %s140
    %p144 = scmp.eq.s32.totalorder %s20, 0
    %p145 = por %p143, %p144
    %p146 = scmp.ne.s32.totalorder %s138, %s140
    %p147 = scmp.eq.s32.totalorder %s25, 1
    %p148 = por %p146, %p147
    %p149 = scmp.ne.s32.totalorder %s140, %s141
    %p150 = scmp.eq.s32.totalorder %s25, 0
    %p151 = por %p149, %p150
    %p152 = scmp.ne.s32.totalorder %s140, %s141
    %p153 = scmp.eq.s32.totalorder %s26, 1
    %p154 = por %p152, %p153
    %p156 = scmp.ne.s32.totalorder %s141, %s155
    %p157 = scmp.eq.s32.totalorder %s26, 0
    %p158 = por %p156, %p157
    %s160 = sadd.s32 %s159, 1
    %p163 = scmp.eq.s32.totalorder %s20, 1
    %p164 = scmp.ne.s32.totalorder %s159, %s161
    %p165 = scmp.eq.s32.totalorder %s20, 0
    %p166 = por %p164, %p165
    %p167 = scmp.ne.s32.totalorder %s159, %s161
    %p168 = scmp.eq.s32.totalorder %s25, 1
    %p169 = por %p167, %p168
    %p170 = scmp.ne.s32.totalorder %s161, %s162
    %p171 = scmp.eq.s32.totalorder %s25, 0
    %p172 = por %p170, %p171
    %p173 = scmp.ne.s32.totalorder %s161, %s162
    %p174 = scmp.eq.s32.totalorder %s26, 1
    %p175 = por %p173, %p174
    %p177 = scmp.ne.s32.totalorder %s162, %s176
    %p178 = scmp.eq.s32.totalorder %s26, 0
    %p179 = por %p177, %p178
    %s181 = sadd.s32 %s180, 1
    %p184 = scmp.eq.s32.totalorder %s20, 1
    %p185 = scmp.ne.s32.totalorder %s180, %s182
    %p186 = scmp.eq.s32.totalorder %s20, 0
    %p187 = por %p185, %p186
    %p188 = scmp.ne.s32.totalorder %s180, %s182
    %p189 = scmp.eq.s32.totalorder %s25, 1
    %p190 = por %p188, %p189
    %p191 = scmp.ne.s32.totalorder %s182, %s183
    %p192 = scmp.eq.s32.totalorder %s25, 0
    %p193 = por %p191, %p192
    %p194 = scmp.ne.s32.totalorder %s182, %s183
    %p195 = scmp.eq.s32.totalorder %s26, 1
    %p196 = por %p194, %p195
    %p198 = scmp.ne.s32.totalorder %s183, %s197
    %p199 = scmp.eq.s32.totalorder %s26, 0
    %p200 = por %p198, %p199
    %s202 = sadd.s32 %s201, 1
    %p205 = scmp.eq.s32.totalorder %s20, 1
    %p206 = scmp.ne.s32.totalorder %s201, %s203
    %p207 = scmp.eq.s32.totalorder %s20, 0
    %p208 = por %p206, %p207
    %p209 = scmp.ne.s32.totalorder %s201, %s203
    %p210 = scmp.eq.s32.totalorder %s25, 1
    %p211 = por %p209, %p210
    %p212 = scmp.ne.s32.totalorder %s203, %s204
    %p213 = scmp.eq.s32.totalorder %s25, 0
    %p214 = por %p212, %p213
    %p215 = scmp.ne.s32.totalorder %s203, %s204
    %p216 = scmp.eq.s32.totalorder %s26, 1
    %p217 = por %p215, %p216
    %p219 = scmp.ne.s32.totalorder %s204, %s218
    %p220 = scmp.eq.s32.totalorder %s26, 0
    %p221 = por %p219, %p220
    %s223 = sadd.s32 %s222, 1
    %p226 = scmp.eq.s32.totalorder %s20, 1
    %p227 = scmp.ne.s32.totalorder %s222, %s224
    %p228 = scmp.eq.s32.totalorder %s20, 0
    %p229 = por %p227, %p228
    %p230 = scmp.ne.s32.totalorder %s222, %s224
    %p231 = scmp.eq.s32.totalorder %s25, 1
    %p232 = por %p230, %p231
    %p233 = scmp.ne.s32.totalorder %s224, %s225
    %p234 = scmp.eq.s32.totalorder %s25, 0
    %p235 = por %p233, %p234
    %p236 = scmp.ne.s32.totalorder %s224, %s225
    %p237 = scmp.eq.s32.totalorder %s26, 1
    %p238 = por %p236, %p237
    %p240 = scmp.ne.s32.totalorder %s225, %s239
    %p241 = scmp.eq.s32.totalorder %s26, 0
    %p242 = por %p240, %p241
    %s244 = sadd.s32 %s243, 1
    %p247 = scmp.eq.s32.totalorder %s20, 1
    %p248 = scmp.ne.s32.totalorder %s243, %s245
    %p249 = scmp.eq.s32.totalorder %s20, 0
    %p250 = por %p248, %p249
    %p251 = scmp.ne.s32.totalorder %s243, %s245
    %p252 = scmp.eq.s32.totalorder %s25, 1
    %p253 = por %p251, %p252
    %p254 = scmp.ne.s32.totalorder %s245, %s246
    %p255 = scmp.eq.s32.totalorder %s25, 0
    %p256 = por %p254, %p255
    %p257 = scmp.ne.s32.totalorder %s245, %s246
    %p258 = scmp.eq.s32.totalorder %s26, 1
    %p259 = por %p257, %p258
    %p261 = scmp.ne.s32.totalorder %s246, %s260
    %p262 = scmp.eq.s32.totalorder %s26, 0
    %p263 = por %p261, %p262
    %s265 = sadd.s32 %s264, 1
    %p268 = scmp.eq.s32.totalorder %s20, 1
    %p269 = scmp.ne.s32.totalorder %s264, %s266
    %p270 = scmp.eq.s32.totalorder %s20, 0
    %p271 = por %p269, %p270
    %p272 = scmp.ne.s32.totalorder %s264, %s266
    %p273 = scmp.eq.s32.totalorder %s25, 1
    %p274 = por %p272, %p273
    %p275 = scmp.ne.s32.totalorder %s266, %s267
    %p276 = scmp.eq.s32.totalorder %s25, 0
    %p277 = por %p275, %p276
    %p278 = scmp.ne.s32.totalorder %s266, %s267
    %p279 = scmp.eq.s32.totalorder %s26, 1
    %p280 = por %p278, %p279
    %p282 = scmp.ne.s32.totalorder %s267, %s281
    %p283 = scmp.eq.s32.totalorder %s26, 0
    %p284 = por %p282, %p283
    %s285 = ssub.s32 %s20, %s27
    %p286 = scmp.eq.s32.totalorder %s285, 0
    %s288 = sadd.s32 %s287, 1
    %s289 = scalar_select %p286, %s287, %s288
    %p292 = pneg %p286
    %p293 = scmp.eq.s32.totalorder %s20, 1
    %p294 = por %p292, %p293
    %p295 = scmp.ne.s32.totalorder %s287, %s290
    %p296 = scmp.eq.s32.totalorder %s20, 0
    %p297 = por %p295, %p296
    %p298 = scmp.ne.s32.totalorder %s287, %s290
    %p299 = scmp.eq.s32.totalorder %s25, 1
    %p300 = por %p298, %p299
    %p301 = scmp.ne.s32.totalorder %s290, %s291
    %p302 = scmp.eq.s32.totalorder %s25, 0
    %p303 = por %p301, %p302
    %p304 = scmp.ne.s32.totalorder %s290, %s291
    %p305 = scmp.eq.s32.totalorder %s26, 1
    %p306 = por %p304, %p305
    %p308 = scmp.ne.s32.totalorder %s291, %s307
    %p309 = scmp.eq.s32.totalorder %s26, 0
    %p310 = por %p308, %p309
    %p311 = scmp.le.s32.totalorder 1, %s20
    %p312 = scmp.lt.s32.totalorder %s20, 3
    %p313 = pnand %p311, %p312
    %p314 = pneg %p313
    // Predicated region
    $region9: #{dcnet_forward.1} parent=5 // pred_check
      _
    $region10: #{dcnet_forward.1} parent=5 // pred_check_branch
      %316 = sbr.rel (%p313) target = $region12
    $region11: #{dcnet_forward.1} parent=5 // pred_region
      %s317 = ssub.s32 %s20, 1
      // Predicated region
      $region13: #{dcnet_forward.1} parent=11 // pred_check
        %p318 = pneg %p41
      $region14: #{dcnet_forward.1} parent=11 // pred_check_branch
        %320 = sbr.rel (%p318) target = $region16
      $region15: #{dcnet_forward.1} parent=11 // pred_region
        _
      $region16: #{dcnet_forward.1} parent=11 // pred_fallthru
        _
      // Predicated region
      $region17: #{dcnet_forward.1} parent=11 // pred_check
        %p321 = pneg %p88
      $region18: #{dcnet_forward.1} parent=11 // pred_check_branch
        %323 = sbr.rel (%p321) target = $region20
      $region19: #{dcnet_forward.1} parent=11 // pred_region
        _
      $region20: #{dcnet_forward.1} parent=11 // pred_fallthru
        _
      // Predicated region
      $region21: #{dcnet_forward.1} parent=11 // pred_check
        %p324 = pneg %p109
      $region22: #{dcnet_forward.1} parent=11 // pred_check_branch
        %326 = sbr.rel (%p324) target = $region24
      $region23: #{dcnet_forward.1} parent=11 // pred_region
        _
      $region24: #{dcnet_forward.1} parent=11 // pred_fallthru
        _
      // Predicated region
      $region25: #{dcnet_forward.1} parent=11 // pred_check
        %p327 = pneg %p130
      $region26: #{dcnet_forward.1} parent=11 // pred_check_branch
        %329 = sbr.rel (%p327) target = $region28
      $region27: #{dcnet_forward.1} parent=11 // pred_region
        _
      $region28: #{dcnet_forward.1} parent=11 // pred_fallthru
        _
      // Predicated region
      $region29: #{dcnet_forward.1} parent=11 // pred_check
        %p330 = pneg %p151
      $region30: #{dcnet_forward.1} parent=11 // pred_check_branch
        %332 = sbr.rel (%p330) target = $region32
      $region31: #{dcnet_forward.1} parent=11 // pred_region
        _
      $region32: #{dcnet_forward.1} parent=11 // pred_fallthru
        _
      // Predicated region
      $region33: #{dcnet_forward.1} parent=11 // pred_check
        %p333 = pneg %p172
      $region34: #{dcnet_forward.1} parent=11 // pred_check_branch
        %335 = sbr.rel (%p333) target = $region36
      $region35: #{dcnet_forward.1} parent=11 // pred_region
        _
      $region36: #{dcnet_forward.1} parent=11 // pred_fallthru
        _
      // Predicated region
      $region37: #{dcnet_forward.1} parent=11 // pred_check
        %p336 = pneg %p193
      $region38: #{dcnet_forward.1} parent=11 // pred_check_branch
        %338 = sbr.rel (%p336) target = $region40
      $region39: #{dcnet_forward.1} parent=11 // pred_region
        _
      $region40: #{dcnet_forward.1} parent=11 // pred_fallthru
        _
      // Predicated region
      $region41: #{dcnet_forward.1} parent=11 // pred_check
        %p339 = pneg %p214
      $region42: #{dcnet_forward.1} parent=11 // pred_check_branch
        %341 = sbr.rel (%p339) target = $region44
      $region43: #{dcnet_forward.1} parent=11 // pred_region
        _
      $region44: #{dcnet_forward.1} parent=11 // pred_fallthru
        _
      // Predicated region
      $region45: #{dcnet_forward.1} parent=11 // pred_check
        %p342 = pneg %p235
      $region46: #{dcnet_forward.1} parent=11 // pred_check_branch
        %344 = sbr.rel (%p342) target = $region48
      $region47: #{dcnet_forward.1} parent=11 // pred_region
        _
      $region48: #{dcnet_forward.1} parent=11 // pred_fallthru
        _
      // Predicated region
      $region49: #{dcnet_forward.1} parent=11 // pred_check
        %p345 = pneg %p256
      $region50: #{dcnet_forward.1} parent=11 // pred_check_branch
        %347 = sbr.rel (%p345) target = $region52
      $region51: #{dcnet_forward.1} parent=11 // pred_region
        _
      $region52: #{dcnet_forward.1} parent=11 // pred_fallthru
        _
      // Predicated region
      $region53: #{dcnet_forward.1} parent=11 // pred_check
        %p348 = pneg %p277
      $region54: #{dcnet_forward.1} parent=11 // pred_check_branch
        %350 = sbr.rel (%p348) target = $region56
      $region55: #{dcnet_forward.1} parent=11 // pred_region
        _
      $region56: #{dcnet_forward.1} parent=11 // pred_fallthru
        _
    $region12: #{dcnet_forward.1} parent=5 // pred_fallthru
      _
    %p351 = scmp.lt.s32.totalorder %s20, 2
    // Predicated region
    $region57: #{dcnet_forward.1} parent=5 // pred_check
      %p352 = pneg %p351
    $region58: #{dcnet_forward.1} parent=5 // pred_check_branch
      %354 = sbr.rel (%p352) target = $region60
    $region59: #{dcnet_forward.1} parent=5 // pred_region
      // Predicated region
      $region61: #{dcnet_forward.1} parent=59 // pred_check
        %p355 = pneg %p61
      $region62: #{dcnet_forward.1} parent=59 // pred_check_branch
        %357 = sbr.rel (%p355) target = $region64
      $region63: #{dcnet_forward.1} parent=59 // pred_region
        %p358 = scmp.lt.s32.totalorder %s20, 1
        %s359 = scalar_select %p358, %s20, 1
        %s360 = smul.addr %s359, 2
        %s361 = smul.addr %s360, 8
        %s362 = scalar_lea.vmem %s1, %s361
      $region64: #{dcnet_forward.1} parent=59 // pred_fallthru
        _
    $region60: #{dcnet_forward.1} parent=5 // pred_fallthru
      _
    %p363 = scmp.le.s32.totalorder 1, %s20
    %p364 = scmp.lt.s32.totalorder %s20, 3
    %p365 = pnand %p363, %p364
    %p366 = pneg %p365
    // Predicated region
    $region65: #{dcnet_forward.1} parent=5 // pred_check
      _
    $region66: #{dcnet_forward.1} parent=5 // pred_check_branch
      %368 = sbr.rel (%p365) target = $region68
    $region67: #{dcnet_forward.1} parent=5 // pred_region
      %s369 = ssub.s32 %s20, 1
      %p370 = pneg %p41
      %p371 = pneg %p38
      %p372 = scmp.lt.s32.totalorder %s25, 1
      %s373 = scalar_select %p372, %s25, 1
      %s374 = smul.addr %s373, 2
      %s375 = smul.addr %s374, 8
      %s376 = scalar_lea.vmem %s1, %s375
      %p377 = pneg %p67
      %p378 = pneg %p64
      %p379 = pneg %p88
      %p380 = pneg %p85
      %p381 = pneg %p109
      %p382 = pneg %p106
      %p383 = pneg %p130
      %p384 = pneg %p127
      %p385 = pneg %p151
      %p386 = pneg %p148
      %p387 = pneg %p172
      %p388 = pneg %p169
      %p389 = pneg %p193
      %p390 = pneg %p190
      %p391 = pneg %p214
      %p392 = pneg %p211
      %p393 = pneg %p235
      %p394 = pneg %p232
      %p395 = pneg %p256
      %p396 = pneg %p253
      %p397 = pneg %p277
      %p398 = pneg %p274
      %p399 = pneg %p303
      %p400 = pneg %p300
      %p401 = scmp.lt.s32.totalorder %s25, 1
      %s402 = scalar_select %p401, %s25, 1
      %s403 = smul.addr %s402, 2
      %s404 = scalar_lea.vmem %s12, %s403
      %p405 = scmp.lt.s32.totalorder %s25, 1
      %s406 = scalar_select %p405, %s25, 1
      %s407 = smul.addr %s406, 2
      %s408 = smul.addr %s407, 8
      %s409 = scalar_lea.vmem %s1, %s408
      %p410 = scmp.lt.s32.totalorder %s25, 1
      %s411 = scalar_select %p410, %s25, 1
      %s412 = smul.addr %s411, 2
      %s413 = scalar_lea.vmem %s12, %s412
      %v414 = vld [vmem:[%s0] sm:$0x3]
      %s415 = scalar_lea.vmem %s0, 2
      %v416 = vld [vmem:[%s415] sm:$0x3]
      %s417 = scalar_lea.vmem %s0, 4
      %v418 = vld [vmem:[%s417] sm:$0x3]
      %s419 = scalar_lea.vmem %s0, 6
      %v420 = vld [vmem:[%s419] sm:$0x3]
      %s421 = scalar_lea.vmem %s0, 10
      %v422 = vld [vmem:[%s421] sm:$0x3]
      %s423 = scalar_lea.vmem %s0, 12
      %v424 = vld [vmem:[%s423] sm:$0x3]
      %s425 = scalar_lea.vmem %s0, 14
      %v426 = vld [vmem:[%s425] sm:$0x3]
      %s427 = scalar_lea.vmem %s0, 16
      %v428 = vld [vmem:[%s427] sm:$0x3]
      %v429 = vld [vmem:[%s409] sm:$0x3f]
      %v430 = vld [vmem:[%s409 + $0x8] sm:$0x3f]
      %431 = vrot.lane.b32.xlu0 %v429, 17
      %v432 = vpop.permute.xlu0 %431
      %433 = vrot.lane.b32.xlu0 %v430, 17
      %v434 = vpop.permute.xlu0 %433
      %v435 = vlaneseq
      %v436 = vand.u32 %v435, 127
      %vm437 = vcmp.lt.s32.totalorder %v436, 17
      %v438 = vsel %vm437, %v432, %v434
      %v439 = vsel %vm437, %v434, %v432
      %v440 = vld [vmem:[%s2] sm:$0xff]
      %v441 = vld [vmem:[%s2 + $0x8] sm:$0xff]
      %v442 = vld [vmem:[%s2 + $0x10] sm:$0xff]
      %v443 = vld [vmem:[%s2 + $0x18] sm:$0xff]
      %v444 = vld [vmem:[%s2 + $0x20] sm:$0xff]
      %v445 = vld [vmem:[%s2 + $0x28] sm:$0xff]
      %v446 = vld [vmem:[%s2 + $0x30] sm:$0xff]
      %v447 = vld [vmem:[%s2 + $0x38] sm:$0xff]
      %v449 = vperm.slane %v414, 0
      %v450 = vperm.slane %v414, 1
      %v453 = vmul.f32 %v439, %v449
      %v454 = vmul.f32 %v438, %v450
      %455 = vrot.lane.b32.xlu0 %v429, 16
      %v456 = vpop.permute.xlu0 %455
      %457 = vrot.lane.b32.xlu0 %v430, 16
      %v458 = vpop.permute.xlu0 %457
      %vm459 = vcmp.lt.s32.totalorder %v436, 16
      %v460 = vsel %vm459, %v456, %v458
      %v461 = vsel %vm459, %v458, %v456
      %s462 = scalar_lea.vmem %s2, 64
      %v463 = vld [vmem:[%s462] sm:$0xff]
      %v464 = vld [vmem:[%s462 + $0x8] sm:$0xff]
      %v465 = vld [vmem:[%s462 + $0x10] sm:$0xff]
      %v466 = vld [vmem:[%s462 + $0x18] sm:$0xff]
      %v467 = vld [vmem:[%s462 + $0x20] sm:$0xff]
      %v468 = vld [vmem:[%s462 + $0x28] sm:$0xff]
      %v469 = vld [vmem:[%s462 + $0x30] sm:$0xff]
      %v470 = vld [vmem:[%s462 + $0x38] sm:$0xff]
      %v472 = vperm.slane %v416, 0
      %v473 = vperm.slane %v416, 1
      %v476 = vmul.f32 %v461, %v472
      %v477 = vmul.f32 %v460, %v473
      %vm478 = vcmask 48128
      %v480 = vsel %vm478, %v463, 0
      %v483 = vsel %vm478, %v464, 0
      %v486 = vsel %vm478, %v465, 0
      %v489 = vsel %vm478, %v466, 0
      %v492 = vsel %vm478, %v467, 0
      %v495 = vsel %vm478, %v468, 0
      %v498 = vsel %vm478, %v469, 0
      %v501 = vsel %vm478, %v470, 0
      %vm503 = vcmask 1045504
      %v505 = vsel %vm503, %v476, 0
      %v508 = vsel %vm503, %v477, 0
      %510 = vmatpush.msra.mxu0 0.0
      %511 = vmatpush.msra.mxu0 0.0
      %512 = vmatpush.msra.mxu0 0.0
      %513 = vmatpush.msra.mxu0 0.0
      %514 = vmatpush.msra.mxu0 0.0
      %515 = vmatpush.msra.mxu0 0.0
      %516 = vmatpush.msra.mxu0 0.0
      %517 = vmatpush.msra.mxu0 0.0
      %518 = vmatpush.msra.mxu0 0.0
      %519 = vmatpush.msra.mxu0 0.0
      %520 = vmatpush.msra.mxu0 0.0
      %521 = vmatpush.msra.mxu0 0.0
      %522 = vmatpush.msra.mxu0 0.0
      %523 = vmatpush.msra.mxu0 0.0
      %524 = vmatpush.msra.mxu0 0.0
      %525 = vmatpush.msra.mxu0 %v505
      %526 = vmatmul.f32.gmra.mxu0 %v480
      %v527 = vpop.f32.mrf.mxu0
      %v528 = vadd.f32 0.0, %v527
      %529 = vmatmul.f32.gmra.mxu0 %v483
      %v530 = vpop.f32.mrf.mxu0
      %v531 = vadd.f32 0.0, %v530
      %532 = vmatmul.f32.gmra.mxu0 %v486
      %v533 = vpop.f32.mrf.mxu0
      %v534 = vadd.f32 0.0, %v533
      %535 = vmatmul.f32.gmra.mxu0 %v489
      %v536 = vpop.f32.mrf.mxu0
      %v537 = vadd.f32 0.0, %v536
      %538 = vmatmul.f32.gmra.mxu0 %v492
      %v539 = vpop.f32.mrf.mxu0
      %v540 = vadd.f32 0.0, %v539
      %541 = vmatmul.f32.gmra.mxu0 %v495
      %v542 = vpop.f32.mrf.mxu0
      %v543 = vadd.f32 0.0, %v542
      %544 = vmatmul.f32.gmra.mxu0 %v498
      %v545 = vpop.f32.mrf.mxu0
      %v546 = vadd.f32 0.0, %v545
      %547 = vmatmul.f32.gmra.mxu0 %v501
      %v548 = vpop.f32.mrf.mxu0
      %v549 = vadd.f32 0.0, %v548
      %550 = vdwg.mxu0
      %551 = vmatpush.msra.mxu0 0.0
      %552 = vmatpush.msra.mxu0 0.0
      %553 = vmatpush.msra.mxu0 0.0
      %554 = vmatpush.msra.mxu0 0.0
      %555 = vmatpush.msra.mxu0 0.0
      %556 = vmatpush.msra.mxu0 0.0
      %557 = vmatpush.msra.mxu0 0.0
      %558 = vmatpush.msra.mxu0 0.0
      %559 = vmatpush.msra.mxu0 0.0
      %560 = vmatpush.msra.mxu0 0.0
      %561 = vmatpush.msra.mxu0 0.0
      %562 = vmatpush.msra.mxu0 0.0
      %563 = vmatpush.msra.mxu0 0.0
      %564 = vmatpush.msra.mxu0 0.0
      %565 = vmatpush.msra.mxu0 0.0
      %566 = vmatpush.msra.mxu0 %v508
      %567 = vmatmul.f32.gmra.mxu0 %v480
      %v568 = vpop.f32.mrf.mxu0
      %v569 = vadd.f32 0.0, %v568
      %570 = vmatmul.f32.gmra.mxu0 %v483
      %v571 = vpop.f32.mrf.mxu0
      %v572 = vadd.f32 0.0, %v571
      %573 = vmatmul.f32.gmra.mxu0 %v486
      %v574 = vpop.f32.mrf.mxu0
      %v575 = vadd.f32 0.0, %v574
      %576 = vmatmul.f32.gmra.mxu0 %v489
      %v577 = vpop.f32.mrf.mxu0
      %v578 = vadd.f32 0.0, %v577
      %579 = vmatmul.f32.gmra.mxu0 %v492
      %v580 = vpop.f32.mrf.mxu0
      %v581 = vadd.f32 0.0, %v580
      %582 = vmatmul.f32.gmra.mxu0 %v495
      %v583 = vpop.f32.mrf.mxu0
      %v584 = vadd.f32 0.0, %v583
      %585 = vmatmul.f32.gmra.mxu0 %v498
      %v586 = vpop.f32.mrf.mxu0
      %v587 = vadd.f32 0.0, %v586
      %588 = vmatmul.f32.gmra.mxu0 %v501
      %v589 = vpop.f32.mrf.mxu0
      %v590 = vadd.f32 0.0, %v589
      %591 = vdwg.mxu0
      %v593 = vsel %vm478, %v440, 0
      %v596 = vsel %vm478, %v441, 0
      %v599 = vsel %vm478, %v442, 0
      %v602 = vsel %vm478, %v443, 0
      %v605 = vsel %vm478, %v444, 0
      %v608 = vsel %vm478, %v445, 0
      %v611 = vsel %vm478, %v446, 0
      %v614 = vsel %vm478, %v447, 0
      %v617 = vsel %vm503, %v453, 0
      %v620 = vsel %vm503, %v454, 0
      %622 = vmatpush.msra.mxu0 0.0
      %623 = vmatpush.msra.mxu0 0.0
      %624 = vmatpush.msra.mxu0 0.0
      %625 = vmatpush.msra.mxu0 0.0
      %626 = vmatpush.msra.mxu0 0.0
      %627 = vmatpush.msra.mxu0 0.0
      %628 = vmatpush.msra.mxu0 0.0
      %629 = vmatpush.msra.mxu0 0.0
      %630 = vmatpush.msra.mxu0 0.0
      %631 = vmatpush.msra.mxu0 0.0
      %632 = vmatpush.msra.mxu0 0.0
      %633 = vmatpush.msra.mxu0 0.0
      %634 = vmatpush.msra.mxu0 0.0
      %635 = vmatpush.msra.mxu0 0.0
      %636 = vmatpush.msra.mxu0 0.0
      %637 = vmatpush.msra.mxu0 %v617
      %638 = vmatmul.f32.gmra.mxu0 %v593
      %v639 = vpop.f32.mrf.mxu0
      %v640 = vadd.f32 %v528, %v639
      %641 = vmatmul.f32.gmra.mxu0 %v596
      %v642 = vpop.f32.mrf.mxu0
      %v643 = vadd.f32 %v531, %v642
      %644 = vmatmul.f32.gmra.mxu0 %v599
      %v645 = vpop.f32.mrf.mxu0
      %v646 = vadd.f32 %v534, %v645
      %647 = vmatmul.f32.gmra.mxu0 %v602
      %v648 = vpop.f32.mrf.mxu0
      %v649 = vadd.f32 %v537, %v648
      %650 = vmatmul.f32.gmra.mxu0 %v605
      %v651 = vpop.f32.mrf.mxu0
      %v652 = vadd.f32 %v540, %v651
      %653 = vmatmul.f32.gmra.mxu0 %v608
      %v654 = vpop.f32.mrf.mxu0
      %v655 = vadd.f32 %v543, %v654
      %656 = vmatmul.f32.gmra.mxu0 %v611
      %v657 = vpop.f32.mrf.mxu0
      %v658 = vadd.f32 %v546, %v657
      %659 = vmatmul.f32.gmra.mxu0 %v614
      %v660 = vpop.f32.mrf.mxu0
      %v661 = vadd.f32 %v549, %v660
      %662 = vdwg.mxu0
      %663 = vmatpush.msra.mxu0 0.0
      %664 = vmatpush.msra.mxu0 0.0
      %665 = vmatpush.msra.mxu0 0.0
      %666 = vmatpush.msra.mxu0 0.0
      %667 = vmatpush.msra.mxu0 0.0
      %668 = vmatpush.msra.mxu0 0.0
      %669 = vmatpush.msra.mxu0 0.0
      %670 = vmatpush.msra.mxu0 0.0
      %671 = vmatpush.msra.mxu0 0.0
      %672 = vmatpush.msra.mxu0 0.0
      %673 = vmatpush.msra.mxu0 0.0
      %674 = vmatpush.msra.mxu0 0.0
      %675 = vmatpush.msra.mxu0 0.0
      %676 = vmatpush.msra.mxu0 0.0
      %677 = vmatpush.msra.mxu0 0.0
      %678 = vmatpush.msra.mxu0 %v620
      %679 = vmatmul.f32.gmra.mxu0 %v593
      %v680 = vpop.f32.mrf.mxu0
      %v681 = vadd.f32 %v569, %v680
      %682 = vmatmul.f32.gmra.mxu0 %v596
      %v683 = vpop.f32.mrf.mxu0
      %v684 = vadd.f32 %v572, %v683
      %685 = vmatmul.f32.gmra.mxu0 %v599
      %v686 = vpop.f32.mrf.mxu0
      %v687 = vadd.f32 %v575, %v686
      %688 = vmatmul.f32.gmra.mxu0 %v602
      %v689 = vpop.f32.mrf.mxu0
      %v690 = vadd.f32 %v578, %v689
      %691 = vmatmul.f32.gmra.mxu0 %v605
      %v692 = vpop.f32.mrf.mxu0
      %v693 = vadd.f32 %v581, %v692
      %694 = vmatmul.f32.gmra.mxu0 %v608
      %v695 = vpop.f32.mrf.mxu0
      %v696 = vadd.f32 %v584, %v695
      %697 = vmatmul.f32.gmra.mxu0 %v611
      %v698 = vpop.f32.mrf.mxu0
      %v699 = vadd.f32 %v587, %v698
      %700 = vmatmul.f32.gmra.mxu0 %v614
      %v701 = vpop.f32.mrf.mxu0
      %v702 = vadd.f32 %v590, %v701
      %703 = vdwg.mxu0
      %704 = vrot.lane.b32.xlu0 %v429, 15
      %v705 = vpop.permute.xlu0 %704
      %706 = vrot.lane.b32.xlu0 %v430, 15
      %v707 = vpop.permute.xlu0 %706
      %vm708 = vcmp.lt.s32.totalorder %v436, 15
      %v709 = vsel %vm708, %v705, %v707
      %v710 = vsel %vm708, %v707, %v705
      %s711 = scalar_lea.vmem %s2, 128
      %v712 = vld [vmem:[%s711] sm:$0xff]
      %v713 = vld [vmem:[%s711 + $0x8] sm:$0xff]
      %v714 = vld [vmem:[%s711 + $0x10] sm:$0xff]
      %v715 = vld [vmem:[%s711 + $0x18] sm:$0xff]
      %v716 = vld [vmem:[%s711 + $0x20] sm:$0xff]
      %v717 = vld [vmem:[%s711 + $0x28] sm:$0xff]
      %v718 = vld [vmem:[%s711 + $0x30] sm:$0xff]
      %v719 = vld [vmem:[%s711 + $0x38] sm:$0xff]
      %v721 = vperm.slane %v418, 0
      %v722 = vperm.slane %v418, 1
      %v725 = vmul.f32 %v710, %v721
      %v726 = vmul.f32 %v709, %v722
      %v728 = vsel %vm478, %v712, 0
      %v731 = vsel %vm478, %v713, 0
      %v734 = vsel %vm478, %v714, 0
      %v737 = vsel %vm478, %v715, 0
      %v740 = vsel %vm478, %v716, 0
      %v743 = vsel %vm478, %v717, 0
      %v746 = vsel %vm478, %v718, 0
      %v749 = vsel %vm478, %v719, 0
      %v752 = vsel %vm503, %v725, 0
      %v755 = vsel %vm503, %v726, 0
      %757 = vmatpush.msra.mxu0 0.0
      %758 = vmatpush.msra.mxu0 0.0
      %759 = vmatpush.msra.mxu0 0.0
      %760 = vmatpush.msra.mxu0 0.0
      %761 = vmatpush.msra.mxu0 0.0
      %762 = vmatpush.msra.mxu0 0.0
      %763 = vmatpush.msra.mxu0 0.0
      %764 = vmatpush.msra.mxu0 0.0
      %765 = vmatpush.msra.mxu0 0.0
      %766 = vmatpush.msra.mxu0 0.0
      %767 = vmatpush.msra.mxu0 0.0
      %768 = vmatpush.msra.mxu0 0.0
      %769 = vmatpush.msra.mxu0 0.0
      %770 = vmatpush.msra.mxu0 0.0
      %771 = vmatpush.msra.mxu0 0.0
      %772 = vmatpush.msra.mxu0 %v752
      %773 = vmatmul.f32.gmra.mxu0 %v728
      %v774 = vpop.f32.mrf.mxu0
      %v775 = vadd.f32 0.0, %v774
      %776 = vmatmul.f32.gmra.mxu0 %v731
      %v777 = vpop.f32.mrf.mxu0
      %v778 = vadd.f32 0.0, %v777
      %779 = vmatmul.f32.gmra.mxu0 %v734
      %v780 = vpop.f32.mrf.mxu0
      %v781 = vadd.f32 0.0, %v780
      %782 = vmatmul.f32.gmra.mxu0 %v737
      %v783 = vpop.f32.mrf.mxu0
      %v784 = vadd.f32 0.0, %v783
      %785 = vmatmul.f32.gmra.mxu0 %v740
      %v786 = vpop.f32.mrf.mxu0
      %v787 = vadd.f32 0.0, %v786
      %788 = vmatmul.f32.gmra.mxu0 %v743
      %v789 = vpop.f32.mrf.mxu0
      %v790 = vadd.f32 0.0, %v789
      %791 = vmatmul.f32.gmra.mxu0 %v746
      %v792 = vpop.f32.mrf.mxu0
      %v793 = vadd.f32 0.0, %v792
      %794 = vmatmul.f32.gmra.mxu0 %v749
      %v795 = vpop.f32.mrf.mxu0
      %v796 = vadd.f32 0.0, %v795
      %797 = vdwg.mxu0
      %798 = vmatpush.msra.mxu0 0.0
      %799 = vmatpush.msra.mxu0 0.0
      %800 = vmatpush.msra.mxu0 0.0
      %801 = vmatpush.msra.mxu0 0.0
      %802 = vmatpush.msra.mxu0 0.0
      %803 = vmatpush.msra.mxu0 0.0
      %804 = vmatpush.msra.mxu0 0.0
      %805 = vmatpush.msra.mxu0 0.0
      %806 = vmatpush.msra.mxu0 0.0
      %807 = vmatpush.msra.mxu0 0.0
      %808 = vmatpush.msra.mxu0 0.0
      %809 = vmatpush.msra.mxu0 0.0
      %810 = vmatpush.msra.mxu0 0.0
      %811 = vmatpush.msra.mxu0 0.0
      %812 = vmatpush.msra.mxu0 0.0
      %813 = vmatpush.msra.mxu0 %v755
      %814 = vmatmul.f32.gmra.mxu0 %v728
      %v815 = vpop.f32.mrf.mxu0
      %v816 = vadd.f32 0.0, %v815
      %817 = vmatmul.f32.gmra.mxu0 %v731
      %v818 = vpop.f32.mrf.mxu0
      %v819 = vadd.f32 0.0, %v818
      %820 = vmatmul.f32.gmra.mxu0 %v734
      %v821 = vpop.f32.mrf.mxu0
      %v822 = vadd.f32 0.0, %v821
      %823 = vmatmul.f32.gmra.mxu0 %v737
      %v824 = vpop.f32.mrf.mxu0
      %v825 = vadd.f32 0.0, %v824
      %826 = vmatmul.f32.gmra.mxu0 %v740
      %v827 = vpop.f32.mrf.mxu0
      %v828 = vadd.f32 0.0, %v827
      %829 = vmatmul.f32.gmra.mxu0 %v743
      %v830 = vpop.f32.mrf.mxu0
      %v831 = vadd.f32 0.0, %v830
      %832 = vmatmul.f32.gmra.mxu0 %v746
      %v833 = vpop.f32.mrf.mxu0
      %v834 = vadd.f32 0.0, %v833
      %835 = vmatmul.f32.gmra.mxu0 %v749
      %v836 = vpop.f32.mrf.mxu0
      %v837 = vadd.f32 0.0, %v836
      %838 = vdwg.mxu0
      %v839 = vadd.f32 %v640, %v775
      %v840 = vadd.f32 %v681, %v816
      %v841 = vadd.f32 %v643, %v778
      %v842 = vadd.f32 %v684, %v819
      %v843 = vadd.f32 %v646, %v781
      %v844 = vadd.f32 %v687, %v822
      %v845 = vadd.f32 %v649, %v784
      %v846 = vadd.f32 %v690, %v825
      %v847 = vadd.f32 %v652, %v787
      %v848 = vadd.f32 %v693, %v828
      %v849 = vadd.f32 %v655, %v790
      %v850 = vadd.f32 %v696, %v831
      %v851 = vadd.f32 %v658, %v793
      %v852 = vadd.f32 %v699, %v834
      %v853 = vadd.f32 %v661, %v796
      %v854 = vadd.f32 %v702, %v837
      %855 = vrot.lane.b32.xlu0 %v429, 1
      %v856 = vpop.permute.xlu0 %855
      %857 = vrot.lane.b32.xlu0 %v430, 1
      %v858 = vpop.permute.xlu0 %857
      %vm859 = vcmp.lt.s32.totalorder %v436, 1
      %v860 = vsel %vm859, %v856, %v858
      %v861 = vsel %vm859, %v858, %v856
      %s862 = scalar_lea.vmem %s2, 192
      %v863 = vld [vmem:[%s862] sm:$0xff]
      %v864 = vld [vmem:[%s862 + $0x8] sm:$0xff]
      %v865 = vld [vmem:[%s862 + $0x10] sm:$0xff]
      %v866 = vld [vmem:[%s862 + $0x18] sm:$0xff]
      %v867 = vld [vmem:[%s862 + $0x20] sm:$0xff]
      %v868 = vld [vmem:[%s862 + $0x28] sm:$0xff]
      %v869 = vld [vmem:[%s862 + $0x30] sm:$0xff]
      %v870 = vld [vmem:[%s862 + $0x38] sm:$0xff]
      %v872 = vperm.slane %v420, 0
      %v873 = vperm.slane %v420, 1
      %v876 = vmul.f32 %v861, %v872
      %v877 = vmul.f32 %v860, %v873
      %v879 = vsel %vm478, %v863, 0
      %v882 = vsel %vm478, %v864, 0
      %v885 = vsel %vm478, %v865, 0
      %v888 = vsel %vm478, %v866, 0
      %v891 = vsel %vm478, %v867, 0
      %v894 = vsel %vm478, %v868, 0
      %v897 = vsel %vm478, %v869, 0
      %v900 = vsel %vm478, %v870, 0
      %v903 = vsel %vm503, %v876, 0
      %v906 = vsel %vm503, %v877, 0
      %908 = vmatpush.msra.mxu0 0.0
      %909 = vmatpush.msra.mxu0 0.0
      %910 = vmatpush.msra.mxu0 0.0
      %911 = vmatpush.msra.mxu0 0.0
      %912 = vmatpush.msra.mxu0 0.0
      %913 = vmatpush.msra.mxu0 0.0
      %914 = vmatpush.msra.mxu0 0.0
      %915 = vmatpush.msra.mxu0 0.0
      %916 = vmatpush.msra.mxu0 0.0
      %917 = vmatpush.msra.mxu0 0.0
      %918 = vmatpush.msra.mxu0 0.0
      %919 = vmatpush.msra.mxu0 0.0
      %920 = vmatpush.msra.mxu0 0.0
      %921 = vmatpush.msra.mxu0 0.0
      %922 = vmatpush.msra.mxu0 0.0
      %923 = vmatpush.msra.mxu0 %v903
      %924 = vmatmul.f32.gmra.mxu0 %v879
      %v925 = vpop.f32.mrf.mxu0
      %v926 = vadd.f32 0.0, %v925
      %927 = vmatmul.f32.gmra.mxu0 %v882
      %v928 = vpop.f32.mrf.mxu0
      %v929 = vadd.f32 0.0, %v928
      %930 = vmatmul.f32.gmra.mxu0 %v885
      %v931 = vpop.f32.mrf.mxu0
      %v932 = vadd.f32 0.0, %v931
      %933 = vmatmul.f32.gmra.mxu0 %v888
      %v934 = vpop.f32.mrf.mxu0
      %v935 = vadd.f32 0.0, %v934
      %936 = vmatmul.f32.gmra.mxu0 %v891
      %v937 = vpop.f32.mrf.mxu0
      %v938 = vadd.f32 0.0, %v937
      %939 = vmatmul.f32.gmra.mxu0 %v894
      %v940 = vpop.f32.mrf.mxu0
      %v941 = vadd.f32 0.0, %v940
      %942 = vmatmul.f32.gmra.mxu0 %v897
      %v943 = vpop.f32.mrf.mxu0
      %v944 = vadd.f32 0.0, %v943
      %945 = vmatmul.f32.gmra.mxu0 %v900
      %v946 = vpop.f32.mrf.mxu0
      %v947 = vadd.f32 0.0, %v946
      %948 = vdwg.mxu0
      %949 = vmatpush.msra.mxu0 0.0
      %950 = vmatpush.msra.mxu0 0.0
      %951 = vmatpush.msra.mxu0 0.0
      %952 = vmatpush.msra.mxu0 0.0
      %953 = vmatpush.msra.mxu0 0.0
      %954 = vmatpush.msra.mxu0 0.0
      %955 = vmatpush.msra.mxu0 0.0
      %956 = vmatpush.msra.mxu0 0.0
      %957 = vmatpush.msra.mxu0 0.0
      %958 = vmatpush.msra.mxu0 0.0
      %959 = vmatpush.msra.mxu0 0.0
      %960 = vmatpush.msra.mxu0 0.0
      %961 = vmatpush.msra.mxu0 0.0
      %962 = vmatpush.msra.mxu0 0.0
      %963 = vmatpush.msra.mxu0 0.0
      %964 = vmatpush.msra.mxu0 %v906
      %965 = vmatmul.f32.gmra.mxu0 %v879
      %v966 = vpop.f32.mrf.mxu0
      %v967 = vadd.f32 0.0, %v966
      %968 = vmatmul.f32.gmra.mxu0 %v882
      %v969 = vpop.f32.mrf.mxu0
      %v970 = vadd.f32 0.0, %v969
      %971 = vmatmul.f32.gmra.mxu0 %v885
      %v972 = vpop.f32.mrf.mxu0
      %v973 = vadd.f32 0.0, %v972
      %974 = vmatmul.f32.gmra.mxu0 %v888
      %v975 = vpop.f32.mrf.mxu0
      %v976 = vadd.f32 0.0, %v975
      %977 = vmatmul.f32.gmra.mxu0 %v891
      %v978 = vpop.f32.mrf.mxu0
      %v979 = vadd.f32 0.0, %v978
      %980 = vmatmul.f32.gmra.mxu0 %v894
      %v981 = vpop.f32.mrf.mxu0
      %v982 = vadd.f32 0.0, %v981
      %983 = vmatmul.f32.gmra.mxu0 %v897
      %v984 = vpop.f32.mrf.mxu0
      %v985 = vadd.f32 0.0, %v984
      %986 = vmatmul.f32.gmra.mxu0 %v900
      %v987 = vpop.f32.mrf.mxu0
      %v988 = vadd.f32 0.0, %v987
      %989 = vdwg.mxu0
      %v990 = vadd.f32 %v839, %v926
      %v991 = vadd.f32 %v840, %v967
      %v992 = vadd.f32 %v841, %v929
      %v993 = vadd.f32 %v842, %v970
      %v994 = vadd.f32 %v843, %v932
      %v995 = vadd.f32 %v844, %v973
      %v996 = vadd.f32 %v845, %v935
      %v997 = vadd.f32 %v846, %v976
      %v998 = vadd.f32 %v847, %v938
      %v999 = vadd.f32 %v848, %v979
      %v1000 = vadd.f32 %v849, %v941
      %v1001 = vadd.f32 %v850, %v982
      %v1002 = vadd.f32 %v851, %v944
      %v1003 = vadd.f32 %v852, %v985
      %v1004 = vadd.f32 %v853, %v947
      %v1005 = vadd.f32 %v854, %v988
      %s1006 = scalar_lea.vmem %s2, 256
      %v1007 = vld [vmem:[%s1006] sm:$0xff]
      %v1008 = vld [vmem:[%s1006 + $0x8] sm:$0xff]
      %v1009 = vld [vmem:[%s1006 + $0x10] sm:$0xff]
      %v1010 = vld [vmem:[%s1006 + $0x18] sm:$0xff]
      %v1011 = vld [vmem:[%s1006 + $0x20] sm:$0xff]
      %v1012 = vld [vmem:[%s1006 + $0x28] sm:$0xff]
      %v1013 = vld [vmem:[%s1006 + $0x30] sm:$0xff]
      %v1014 = vld [vmem:[%s1006 + $0x38] sm:$0xff]
      %v1016 = vsel %vm478, %v1007, 0
      %v1019 = vsel %vm478, %v1008, 0
      %v1022 = vsel %vm478, %v1009, 0
      %v1025 = vsel %vm478, %v1010, 0
      %v1028 = vsel %vm478, %v1011, 0
      %v1031 = vsel %vm478, %v1012, 0
      %v1034 = vsel %vm478, %v1013, 0
      %v1037 = vsel %vm478, %v1014, 0
      %v1040 = vsel %vm503, %v429, 0
      %v1043 = vsel %vm503, %v430, 0
      %1045 = vmatpush.msra.mxu0 0.0
      %1046 = vmatpush.msra.mxu0 0.0
      %1047 = vmatpush.msra.mxu0 0.0
      %1048 = vmatpush.msra.mxu0 0.0
      %1049 = vmatpush.msra.mxu0 0.0
      %1050 = vmatpush.msra.mxu0 0.0
      %1051 = vmatpush.msra.mxu0 0.0
      %1052 = vmatpush.msra.mxu0 0.0
      %1053 = vmatpush.msra.mxu0 0.0
      %1054 = vmatpush.msra.mxu0 0.0
      %1055 = vmatpush.msra.mxu0 0.0
      %1056 = vmatpush.msra.mxu0 0.0
      %1057 = vmatpush.msra.mxu0 0.0
      %1058 = vmatpush.msra.mxu0 0.0
      %1059 = vmatpush.msra.mxu0 0.0
      %1060 = vmatpush.msra.mxu0 %v1040
      %1061 = vmatmul.f32.gmra.mxu0 %v1016
      %v1062 = vpop.f32.mrf.mxu0
      %v1063 = vadd.f32 0.0, %v1062
      %1064 = vmatmul.f32.gmra.mxu0 %v1019
      %v1065 = vpop.f32.mrf.mxu0
      %v1066 = vadd.f32 0.0, %v1065
      %1067 = vmatmul.f32.gmra.mxu0 %v1022
      %v1068 = vpop.f32.mrf.mxu0
      %v1069 = vadd.f32 0.0, %v1068
      %1070 = vmatmul.f32.gmra.mxu0 %v1025
      %v1071 = vpop.f32.mrf.mxu0
      %v1072 = vadd.f32 0.0, %v1071
      %1073 = vmatmul.f32.gmra.mxu0 %v1028
      %v1074 = vpop.f32.mrf.mxu0
      %v1075 = vadd.f32 0.0, %v1074
      %1076 = vmatmul.f32.gmra.mxu0 %v1031
      %v1077 = vpop.f32.mrf.mxu0
      %v1078 = vadd.f32 0.0, %v1077
      %1079 = vmatmul.f32.gmra.mxu0 %v1034
      %v1080 = vpop.f32.mrf.mxu0
      %v1081 = vadd.f32 0.0, %v1080
      %1082 = vmatmul.f32.gmra.mxu0 %v1037
      %v1083 = vpop.f32.mrf.mxu0
      %v1084 = vadd.f32 0.0, %v1083
      %1085 = vdwg.mxu0
      %1086 = vmatpush.msra.mxu0 0.0
      %1087 = vmatpush.msra.mxu0 0.0
      %1088 = vmatpush.msra.mxu0 0.0
      %1089 = vmatpush.msra.mxu0 0.0
      %1090 = vmatpush.msra.mxu0 0.0
      %1091 = vmatpush.msra.mxu0 0.0
      %1092 = vmatpush.msra.mxu0 0.0
      %1093 = vmatpush.msra.mxu0 0.0
      %1094 = vmatpush.msra.mxu0 0.0
      %1095 = vmatpush.msra.mxu0 0.0
      %1096 = vmatpush.msra.mxu0 0.0
      %1097 = vmatpush.msra.mxu0 0.0
      %1098 = vmatpush.msra.mxu0 0.0
      %1099 = vmatpush.msra.mxu0 0.0
      %1100 = vmatpush.msra.mxu0 0.0
      %1101 = vmatpush.msra.mxu0 %v1043
      %1102 = vmatmul.f32.gmra.mxu0 %v1016
      %v1103 = vpop.f32.mrf.mxu0
      %v1104 = vadd.f32 0.0, %v1103
      %1105 = vmatmul.f32.gmra.mxu0 %v1019
      %v1106 = vpop.f32.mrf.mxu0
      %v1107 = vadd.f32 0.0, %v1106
      %1108 = vmatmul.f32.gmra.mxu0 %v1022
      %v1109 = vpop.f32.mrf.mxu0
      %v1110 = vadd.f32 0.0, %v1109
      %1111 = vmatmul.f32.gmra.mxu0 %v1025
      %v1112 = vpop.f32.mrf.mxu0
      %v1113 = vadd.f32 0.0, %v1112
      %1114 = vmatmul.f32.gmra.mxu0 %v1028
      %v1115 = vpop.f32.mrf.mxu0
      %v1116 = vadd.f32 0.0, %v1115
      %1117 = vmatmul.f32.gmra.mxu0 %v1031
      %v1118 = vpop.f32.mrf.mxu0
      %v1119 = vadd.f32 0.0, %v1118
      %1120 = vmatmul.f32.gmra.mxu0 %v1034
      %v1121 = vpop.f32.mrf.mxu0
      %v1122 = vadd.f32 0.0, %v1121
      %1123 = vmatmul.f32.gmra.mxu0 %v1037
      %v1124 = vpop.f32.mrf.mxu0
      %v1125 = vadd.f32 0.0, %v1124
      %1126 = vdwg.mxu0
      %v1127 = vadd.f32 %v990, %v1063
      %v1128 = vadd.f32 %v991, %v1104
      %v1129 = vadd.f32 %v992, %v1066
      %v1130 = vadd.f32 %v993, %v1107
      %v1131 = vadd.f32 %v994, %v1069
      %v1132 = vadd.f32 %v995, %v1110
      %v1133 = vadd.f32 %v996, %v1072
      %v1134 = vadd.f32 %v997, %v1113
      %v1135 = vadd.f32 %v998, %v1075
      %v1136 = vadd.f32 %v999, %v1116
      %v1137 = vadd.f32 %v1000, %v1078
      %v1138 = vadd.f32 %v1001, %v1119
      %v1139 = vadd.f32 %v1002, %v1081
      %v1140 = vadd.f32 %v1003, %v1122
      %v1141 = vadd.f32 %v1004, %v1084
      %v1142 = vadd.f32 %v1005, %v1125
      %1143 = vrot.lane.b32.xlu0 %v429, 127
      %v1144 = vpop.permute.xlu0 %1143
      %1145 = vrot.lane.b32.xlu0 %v430, 127
      %v1146 = vpop.permute.xlu0 %1145
      %vm1147 = vcmp.lt.s32.totalorder %v436, 127
      %v1148 = vsel %vm1147, %v1144, %v1146
      %v1149 = vsel %vm1147, %v1146, %v1144
      %s1150 = scalar_lea.vmem %s2, 320
      %v1151 = vld [vmem:[%s1150] sm:$0xff]
      %v1152 = vld [vmem:[%s1150 + $0x8] sm:$0xff]
      %v1153 = vld [vmem:[%s1150 + $0x10] sm:$0xff]
      %v1154 = vld [vmem:[%s1150 + $0x18] sm:$0xff]
      %v1155 = vld [vmem:[%s1150 + $0x20] sm:$0xff]
      %v1156 = vld [vmem:[%s1150 + $0x28] sm:$0xff]
      %v1157 = vld [vmem:[%s1150 + $0x30] sm:$0xff]
      %v1158 = vld [vmem:[%s1150 + $0x38] sm:$0xff]
      %v1160 = vperm.slane %v422, 0
      %v1161 = vperm.slane %v422, 1
      %v1164 = vmul.f32 %v1148, %v1160
      %v1165 = vmul.f32 %v1149, %v1161
      %v1167 = vsel %vm478, %v1151, 0
      %v1170 = vsel %vm478, %v1152, 0
      %v1173 = vsel %vm478, %v1153, 0
      %v1176 = vsel %vm478, %v1154, 0
      %v1179 = vsel %vm478, %v1155, 0
      %v1182 = vsel %vm478, %v1156, 0
      %v1185 = vsel %vm478, %v1157, 0
      %v1188 = vsel %vm478, %v1158, 0
      %v1191 = vsel %vm503, %v1164, 0
      %v1194 = vsel %vm503, %v1165, 0
      %1196 = vmatpush.msra.mxu0 0.0
      %1197 = vmatpush.msra.mxu0 0.0
      %1198 = vmatpush.msra.mxu0 0.0
      %1199 = vmatpush.msra.mxu0 0.0
      %1200 = vmatpush.msra.mxu0 0.0
      %1201 = vmatpush.msra.mxu0 0.0
      %1202 = vmatpush.msra.mxu0 0.0
      %1203 = vmatpush.msra.mxu0 0.0
      %1204 = vmatpush.msra.mxu0 0.0
      %1205 = vmatpush.msra.mxu0 0.0
      %1206 = vmatpush.msra.mxu0 0.0
      %1207 = vmatpush.msra.mxu0 0.0
      %1208 = vmatpush.msra.mxu0 0.0
      %1209 = vmatpush.msra.mxu0 0.0
      %1210 = vmatpush.msra.mxu0 0.0
      %1211 = vmatpush.msra.mxu0 %v1191
      %1212 = vmatmul.f32.gmra.mxu0 %v1167
      %v1213 = vpop.f32.mrf.mxu0
      %v1214 = vadd.f32 0.0, %v1213
      %1215 = vmatmul.f32.gmra.mxu0 %v1170
      %v1216 = vpop.f32.mrf.mxu0
      %v1217 = vadd.f32 0.0, %v1216
      %1218 = vmatmul.f32.gmra.mxu0 %v1173
      %v1219 = vpop.f32.mrf.mxu0
      %v1220 = vadd.f32 0.0, %v1219
      %1221 = vmatmul.f32.gmra.mxu0 %v1176
      %v1222 = vpop.f32.mrf.mxu0
      %v1223 = vadd.f32 0.0, %v1222
      %1224 = vmatmul.f32.gmra.mxu0 %v1179
      %v1225 = vpop.f32.mrf.mxu0
      %v1226 = vadd.f32 0.0, %v1225
      %1227 = vmatmul.f32.gmra.mxu0 %v1182
      %v1228 = vpop.f32.mrf.mxu0
      %v1229 = vadd.f32 0.0, %v1228
      %1230 = vmatmul.f32.gmra.mxu0 %v1185
      %v1231 = vpop.f32.mrf.mxu0
      %v1232 = vadd.f32 0.0, %v1231
      %1233 = vmatmul.f32.gmra.mxu0 %v1188
      %v1234 = vpop.f32.mrf.mxu0
      %v1235 = vadd.f32 0.0, %v1234
      %1236 = vdwg.mxu0
      %1237 = vmatpush.msra.mxu0 0.0
      %1238 = vmatpush.msra.mxu0 0.0
      %1239 = vmatpush.msra.mxu0 0.0
      %1240 = vmatpush.msra.mxu0 0.0
      %1241 = vmatpush.msra.mxu0 0.0
      %1242 = vmatpush.msra.mxu0 0.0
      %1243 = vmatpush.msra.mxu0 0.0
      %1244 = vmatpush.msra.mxu0 0.0
      %1245 = vmatpush.msra.mxu0 0.0
      %1246 = vmatpush.msra.mxu0 0.0
      %1247 = vmatpush.msra.mxu0 0.0
      %1248 = vmatpush.msra.mxu0 0.0
      %1249 = vmatpush.msra.mxu0 0.0
      %1250 = vmatpush.msra.mxu0 0.0
      %1251 = vmatpush.msra.mxu0 0.0
      %1252 = vmatpush.msra.mxu0 %v1194
      %1253 = vmatmul.f32.gmra.mxu0 %v1167
      %v1254 = vpop.f32.mrf.mxu0
      %v1255 = vadd.f32 0.0, %v1254
      %1256 = vmatmul.f32.gmra.mxu0 %v1170
      %v1257 = vpop.f32.mrf.mxu0
      %v1258 = vadd.f32 0.0, %v1257
      %1259 = vmatmul.f32.gmra.mxu0 %v1173
      %v1260 = vpop.f32.mrf.mxu0
      %v1261 = vadd.f32 0.0, %v1260
      %1262 = vmatmul.f32.gmra.mxu0 %v1176
      %v1263 = vpop.f32.mrf.mxu0
      %v1264 = vadd.f32 0.0, %v1263
      %1265 = vmatmul.f32.gmra.mxu0 %v1179
      %v1266 = vpop.f32.mrf.mxu0
      %v1267 = vadd.f32 0.0, %v1266
      %1268 = vmatmul.f32.gmra.mxu0 %v1182
      %v1269 = vpop.f32.mrf.mxu0
      %v1270 = vadd.f32 0.0, %v1269
      %1271 = vmatmul.f32.gmra.mxu0 %v1185
      %v1272 = vpop.f32.mrf.mxu0
      %v1273 = vadd.f32 0.0, %v1272
      %1274 = vmatmul.f32.gmra.mxu0 %v1188
      %v1275 = vpop.f32.mrf.mxu0
      %v1276 = vadd.f32 0.0, %v1275
      %1277 = vdwg.mxu0
      %v1278 = vadd.f32 %v1127, %v1214
      %v1279 = vadd.f32 %v1128, %v1255
      %v1280 = vadd.f32 %v1129, %v1217
      %v1281 = vadd.f32 %v1130, %v1258
      %v1282 = vadd.f32 %v1131, %v1220
      %v1283 = vadd.f32 %v1132, %v1261
      %v1284 = vadd.f32 %v1133, %v1223
      %v1285 = vadd.f32 %v1134, %v1264
      %v1286 = vadd.f32 %v1135, %v1226
      %v1287 = vadd.f32 %v1136, %v1267
      %v1288 = vadd.f32 %v1137, %v1229
      %v1289 = vadd.f32 %v1138, %v1270
      %v1290 = vadd.f32 %v1139, %v1232
      %v1291 = vadd.f32 %v1140, %v1273
      %v1292 = vadd.f32 %v1141, %v1235
      %v1293 = vadd.f32 %v1142, %v1276
      %1294 = vrot.lane.b32.xlu0 %v429, 113
      %v1295 = vpop.permute.xlu0 %1294
      %1296 = vrot.lane.b32.xlu0 %v430, 113
      %v1297 = vpop.permute.xlu0 %1296
      %vm1298 = vcmp.lt.s32.totalorder %v436, 113
      %v1299 = vsel %vm1298, %v1295, %v1297
      %v1300 = vsel %vm1298, %v1297, %v1295
      %s1301 = scalar_lea.vmem %s2, 384
      %v1302 = vld [vmem:[%s1301] sm:$0xff]
      %v1303 = vld [vmem:[%s1301 + $0x8] sm:$0xff]
      %v1304 = vld [vmem:[%s1301 + $0x10] sm:$0xff]
      %v1305 = vld [vmem:[%s1301 + $0x18] sm:$0xff]
      %v1306 = vld [vmem:[%s1301 + $0x20] sm:$0xff]
      %v1307 = vld [vmem:[%s1301 + $0x28] sm:$0xff]
      %v1308 = vld [vmem:[%s1301 + $0x30] sm:$0xff]
      %v1309 = vld [vmem:[%s1301 + $0x38] sm:$0xff]
      %v1311 = vperm.slane %v424, 0
      %v1312 = vperm.slane %v424, 1
      %v1315 = vmul.f32 %v1299, %v1311
      %v1316 = vmul.f32 %v1300, %v1312
      %v1318 = vsel %vm478, %v1302, 0
      %v1321 = vsel %vm478, %v1303, 0
      %v1324 = vsel %vm478, %v1304, 0
      %v1327 = vsel %vm478, %v1305, 0
      %v1330 = vsel %vm478, %v1306, 0
      %v1333 = vsel %vm478, %v1307, 0
      %v1336 = vsel %vm478, %v1308, 0
      %v1339 = vsel %vm478, %v1309, 0
      %v1342 = vsel %vm503, %v1315, 0
      %v1345 = vsel %vm503, %v1316, 0
      %1347 = vmatpush.msra.mxu0 0.0
      %1348 = vmatpush.msra.mxu0 0.0
      %1349 = vmatpush.msra.mxu0 0.0
      %1350 = vmatpush.msra.mxu0 0.0
      %1351 = vmatpush.msra.mxu0 0.0
      %1352 = vmatpush.msra.mxu0 0.0
      %1353 = vmatpush.msra.mxu0 0.0
      %1354 = vmatpush.msra.mxu0 0.0
      %1355 = vmatpush.msra.mxu0 0.0
      %1356 = vmatpush.msra.mxu0 0.0
      %1357 = vmatpush.msra.mxu0 0.0
      %1358 = vmatpush.msra.mxu0 0.0
      %1359 = vmatpush.msra.mxu0 0.0
      %1360 = vmatpush.msra.mxu0 0.0
      %1361 = vmatpush.msra.mxu0 0.0
      %1362 = vmatpush.msra.mxu0 %v1342
      %1363 = vmatmul.f32.gmra.mxu0 %v1318
      %v1364 = vpop.f32.mrf.mxu0
      %v1365 = vadd.f32 0.0, %v1364
      %1366 = vmatmul.f32.gmra.mxu0 %v1321
      %v1367 = vpop.f32.mrf.mxu0
      %v1368 = vadd.f32 0.0, %v1367
      %1369 = vmatmul.f32.gmra.mxu0 %v1324
      %v1370 = vpop.f32.mrf.mxu0
      %v1371 = vadd.f32 0.0, %v1370
      %1372 = vmatmul.f32.gmra.mxu0 %v1327
      %v1373 = vpop.f32.mrf.mxu0
      %v1374 = vadd.f32 0.0, %v1373
      %1375 = vmatmul.f32.gmra.mxu0 %v1330
      %v1376 = vpop.f32.mrf.mxu0
      %v1377 = vadd.f32 0.0, %v1376
      %1378 = vmatmul.f32.gmra.mxu0 %v1333
      %v1379 = vpop.f32.mrf.mxu0
      %v1380 = vadd.f32 0.0, %v1379
      %1381 = vmatmul.f32.gmra.mxu0 %v1336
      %v1382 = vpop.f32.mrf.mxu0
      %v1383 = vadd.f32 0.0, %v1382
      %1384 = vmatmul.f32.gmra.mxu0 %v1339
      %v1385 = vpop.f32.mrf.mxu0
      %v1386 = vadd.f32 0.0, %v1385
      %1387 = vdwg.mxu0
      %1388 = vmatpush.msra.mxu0 0.0
      %1389 = vmatpush.msra.mxu0 0.0
      %1390 = vmatpush.msra.mxu0 0.0
      %1391 = vmatpush.msra.mxu0 0.0
      %1392 = vmatpush.msra.mxu0 0.0
      %1393 = vmatpush.msra.mxu0 0.0
      %1394 = vmatpush.msra.mxu0 0.0
      %1395 = vmatpush.msra.mxu0 0.0
      %1396 = vmatpush.msra.mxu0 0.0
      %1397 = vmatpush.msra.mxu0 0.0
      %1398 = vmatpush.msra.mxu0 0.0
      %1399 = vmatpush.msra.mxu0 0.0
      %1400 = vmatpush.msra.mxu0 0.0
      %1401 = vmatpush.msra.mxu0 0.0
      %1402 = vmatpush.msra.mxu0 0.0
      %1403 = vmatpush.msra.mxu0 %v1345
      %1404 = vmatmul.f32.gmra.mxu0 %v1318
      %v1405 = vpop.f32.mrf.mxu0
      %v1406 = vadd.f32 0.0, %v1405
      %1407 = vmatmul.f32.gmra.mxu0 %v1321
      %v1408 = vpop.f32.mrf.mxu0
      %v1409 = vadd.f32 0.0, %v1408
      %1410 = vmatmul.f32.gmra.mxu0 %v1324
      %v1411 = vpop.f32.mrf.mxu0
      %v1412 = vadd.f32 0.0, %v1411
      %1413 = vmatmul.f32.gmra.mxu0 %v1327
      %v1414 = vpop.f32.mrf.mxu0
      %v1415 = vadd.f32 0.0, %v1414
      %1416 = vmatmul.f32.gmra.mxu0 %v1330
      %v1417 = vpop.f32.mrf.mxu0
      %v1418 = vadd.f32 0.0, %v1417
      %1419 = vmatmul.f32.gmra.mxu0 %v1333
      %v1420 = vpop.f32.mrf.mxu0
      %v1421 = vadd.f32 0.0, %v1420
      %1422 = vmatmul.f32.gmra.mxu0 %v1336
      %v1423 = vpop.f32.mrf.mxu0
      %v1424 = vadd.f32 0.0, %v1423
      %1425 = vmatmul.f32.gmra.mxu0 %v1339
      %v1426 = vpop.f32.mrf.mxu0
      %v1427 = vadd.f32 0.0, %v1426
      %1428 = vdwg.mxu0
      %v1429 = vadd.f32 %v1278, %v1365
      %v1430 = vadd.f32 %v1279, %v1406
      %v1431 = vadd.f32 %v1280, %v1368
      %v1432 = vadd.f32 %v1281, %v1409
      %v1433 = vadd.f32 %v1282, %v1371
      %v1434 = vadd.f32 %v1283, %v1412
      %v1435 = vadd.f32 %v1284, %v1374
      %v1436 = vadd.f32 %v1285, %v1415
      %v1437 = vadd.f32 %v1286, %v1377
      %v1438 = vadd.f32 %v1287, %v1418
      %v1439 = vadd.f32 %v1288, %v1380
      %v1440 = vadd.f32 %v1289, %v1421
      %v1441 = vadd.f32 %v1290, %v1383
      %v1442 = vadd.f32 %v1291, %v1424
      %v1443 = vadd.f32 %v1292, %v1386
      %v1444 = vadd.f32 %v1293, %v1427
      %1445 = vrot.lane.b32.xlu0 %v429, 112
      %v1446 = vpop.permute.xlu0 %1445
      %1447 = vrot.lane.b32.xlu0 %v430, 112
      %v1448 = vpop.permute.xlu0 %1447
      %vm1449 = vcmp.lt.s32.totalorder %v436, 112
      %v1450 = vsel %vm1449, %v1446, %v1448
      %v1451 = vsel %vm1449, %v1448, %v1446
      %s1452 = scalar_lea.vmem %s2, 448
      %v1453 = vld [vmem:[%s1452] sm:$0xff]
      %v1454 = vld [vmem:[%s1452 + $0x8] sm:$0xff]
      %v1455 = vld [vmem:[%s1452 + $0x10] sm:$0xff]
      %v1456 = vld [vmem:[%s1452 + $0x18] sm:$0xff]
      %v1457 = vld [vmem:[%s1452 + $0x20] sm:$0xff]
      %v1458 = vld [vmem:[%s1452 + $0x28] sm:$0xff]
      %v1459 = vld [vmem:[%s1452 + $0x30] sm:$0xff]
      %v1460 = vld [vmem:[%s1452 + $0x38] sm:$0xff]
      %v1462 = vperm.slane %v426, 0
      %v1463 = vperm.slane %v426, 1
      %v1466 = vmul.f32 %v1450, %v1462
      %v1467 = vmul.f32 %v1451, %v1463
      %v1469 = vsel %vm478, %v1453, 0
      %v1472 = vsel %vm478, %v1454, 0
      %v1475 = vsel %vm478, %v1455, 0
      %v1478 = vsel %vm478, %v1456, 0
      %v1481 = vsel %vm478, %v1457, 0
      %v1484 = vsel %vm478, %v1458, 0
      %v1487 = vsel %vm478, %v1459, 0
      %v1490 = vsel %vm478, %v1460, 0
      %v1493 = vsel %vm503, %v1466, 0
      %v1496 = vsel %vm503, %v1467, 0
      %1498 = vmatpush.msra.mxu0 0.0
      %1499 = vmatpush.msra.mxu0 0.0
      %1500 = vmatpush.msra.mxu0 0.0
      %1501 = vmatpush.msra.mxu0 0.0
      %1502 = vmatpush.msra.mxu0 0.0
      %1503 = vmatpush.msra.mxu0 0.0
      %1504 = vmatpush.msra.mxu0 0.0
      %1505 = vmatpush.msra.mxu0 0.0
      %1506 = vmatpush.msra.mxu0 0.0
      %1507 = vmatpush.msra.mxu0 0.0
      %1508 = vmatpush.msra.mxu0 0.0
      %1509 = vmatpush.msra.mxu0 0.0
      %1510 = vmatpush.msra.mxu0 0.0
      %1511 = vmatpush.msra.mxu0 0.0
      %1512 = vmatpush.msra.mxu0 0.0
      %1513 = vmatpush.msra.mxu0 %v1493
      %1514 = vmatmul.f32.gmra.mxu0 %v1469
      %v1515 = vpop.f32.mrf.mxu0
      %v1516 = vadd.f32 0.0, %v1515
      %1517 = vmatmul.f32.gmra.mxu0 %v1472
      %v1518 = vpop.f32.mrf.mxu0
      %v1519 = vadd.f32 0.0, %v1518
      %1520 = vmatmul.f32.gmra.mxu0 %v1475
      %v1521 = vpop.f32.mrf.mxu0
      %v1522 = vadd.f32 0.0, %v1521
      %1523 = vmatmul.f32.gmra.mxu0 %v1478
      %v1524 = vpop.f32.mrf.mxu0
      %v1525 = vadd.f32 0.0, %v1524
      %1526 = vmatmul.f32.gmra.mxu0 %v1481
      %v1527 = vpop.f32.mrf.mxu0
      %v1528 = vadd.f32 0.0, %v1527
      %1529 = vmatmul.f32.gmra.mxu0 %v1484
      %v1530 = vpop.f32.mrf.mxu0
      %v1531 = vadd.f32 0.0, %v1530
      %1532 = vmatmul.f32.gmra.mxu0 %v1487
      %v1533 = vpop.f32.mrf.mxu0
      %v1534 = vadd.f32 0.0, %v1533
      %1535 = vmatmul.f32.gmra.mxu0 %v1490
      %v1536 = vpop.f32.mrf.mxu0
      %v1537 = vadd.f32 0.0, %v1536
      %1538 = vdwg.mxu0
      %1539 = vmatpush.msra.mxu0 0.0
      %1540 = vmatpush.msra.mxu0 0.0
      %1541 = vmatpush.msra.mxu0 0.0
      %1542 = vmatpush.msra.mxu0 0.0
      %1543 = vmatpush.msra.mxu0 0.0
      %1544 = vmatpush.msra.mxu0 0.0
      %1545 = vmatpush.msra.mxu0 0.0
      %1546 = vmatpush.msra.mxu0 0.0
      %1547 = vmatpush.msra.mxu0 0.0
      %1548 = vmatpush.msra.mxu0 0.0
      %1549 = vmatpush.msra.mxu0 0.0
      %1550 = vmatpush.msra.mxu0 0.0
      %1551 = vmatpush.msra.mxu0 0.0
      %1552 = vmatpush.msra.mxu0 0.0
      %1553 = vmatpush.msra.mxu0 0.0
      %1554 = vmatpush.msra.mxu0 %v1496
      %1555 = vmatmul.f32.gmra.mxu0 %v1469
      %v1556 = vpop.f32.mrf.mxu0
      %v1557 = vadd.f32 0.0, %v1556
      %1558 = vmatmul.f32.gmra.mxu0 %v1472
      %v1559 = vpop.f32.mrf.mxu0
      %v1560 = vadd.f32 0.0, %v1559
      %1561 = vmatmul.f32.gmra.mxu0 %v1475
      %v1562 = vpop.f32.mrf.mxu0
      %v1563 = vadd.f32 0.0, %v1562
      %1564 = vmatmul.f32.gmra.mxu0 %v1478
      %v1565 = vpop.f32.mrf.mxu0
      %v1566 = vadd.f32 0.0, %v1565
      %1567 = vmatmul.f32.gmra.mxu0 %v1481
      %v1568 = vpop.f32.mrf.mxu0
      %v1569 = vadd.f32 0.0, %v1568
      %1570 = vmatmul.f32.gmra.mxu0 %v1484
      %v1571 = vpop.f32.mrf.mxu0
      %v1572 = vadd.f32 0.0, %v1571
      %1573 = vmatmul.f32.gmra.mxu0 %v1487
      %v1574 = vpop.f32.mrf.mxu0
      %v1575 = vadd.f32 0.0, %v1574
      %1576 = vmatmul.f32.gmra.mxu0 %v1490
      %v1577 = vpop.f32.mrf.mxu0
      %v1578 = vadd.f32 0.0, %v1577
      %1579 = vdwg.mxu0
      %v1580 = vadd.f32 %v1429, %v1516
      %v1581 = vadd.f32 %v1430, %v1557
      %v1582 = vadd.f32 %v1431, %v1519
      %v1583 = vadd.f32 %v1432, %v1560
      %v1584 = vadd.f32 %v1433, %v1522
      %v1585 = vadd.f32 %v1434, %v1563
      %v1586 = vadd.f32 %v1435, %v1525
      %v1587 = vadd.f32 %v1436, %v1566
      %v1588 = vadd.f32 %v1437, %v1528
      %v1589 = vadd.f32 %v1438, %v1569
      %v1590 = vadd.f32 %v1439, %v1531
      %v1591 = vadd.f32 %v1440, %v1572
      %v1592 = vadd.f32 %v1441, %v1534
      %v1593 = vadd.f32 %v1442, %v1575
      %v1594 = vadd.f32 %v1443, %v1537
      %v1595 = vadd.f32 %v1444, %v1578
      %1596 = vrot.lane.b32.xlu0 %v429, 111
      %v1597 = vpop.permute.xlu0 %1596
      %1598 = vrot.lane.b32.xlu0 %v430, 111
      %v1599 = vpop.permute.xlu0 %1598
      %vm1600 = vcmp.lt.s32.totalorder %v436, 111
      %v1601 = vsel %vm1600, %v1597, %v1599
      %v1602 = vsel %vm1600, %v1599, %v1597
      %s1603 = scalar_lea.vmem %s2, 512
      %v1604 = vld [vmem:[%s1603] sm:$0xff]
      %v1605 = vld [vmem:[%s1603 + $0x8] sm:$0xff]
      %v1606 = vld [vmem:[%s1603 + $0x10] sm:$0xff]
      %v1607 = vld [vmem:[%s1603 + $0x18] sm:$0xff]
      %v1608 = vld [vmem:[%s1603 + $0x20] sm:$0xff]
      %v1609 = vld [vmem:[%s1603 + $0x28] sm:$0xff]
      %v1610 = vld [vmem:[%s1603 + $0x30] sm:$0xff]
      %v1611 = vld [vmem:[%s1603 + $0x38] sm:$0xff]
      %v1613 = vperm.slane %v428, 0
      %v1614 = vperm.slane %v428, 1
      %v1617 = vmul.f32 %v1601, %v1613
      %v1618 = vmul.f32 %v1602, %v1614
      %v1620 = vsel %vm478, %v1604, 0
      %v1623 = vsel %vm478, %v1605, 0
      %v1626 = vsel %vm478, %v1606, 0
      %v1629 = vsel %vm478, %v1607, 0
      %v1632 = vsel %vm478, %v1608, 0
      %v1635 = vsel %vm478, %v1609, 0
      %v1638 = vsel %vm478, %v1610, 0
      %v1641 = vsel %vm478, %v1611, 0
      %v1644 = vsel %vm503, %v1617, 0
      %v1647 = vsel %vm503, %v1618, 0
      %1649 = vmatpush.msra.mxu0 0.0
      %1650 = vmatpush.msra.mxu0 0.0
      %1651 = vmatpush.msra.mxu0 0.0
      %1652 = vmatpush.msra.mxu0 0.0
      %1653 = vmatpush.msra.mxu0 0.0
      %1654 = vmatpush.msra.mxu0 0.0
      %1655 = vmatpush.msra.mxu0 0.0
      %1656 = vmatpush.msra.mxu0 0.0
      %1657 = vmatpush.msra.mxu0 0.0
      %1658 = vmatpush.msra.mxu0 0.0
      %1659 = vmatpush.msra.mxu0 0.0
      %1660 = vmatpush.msra.mxu0 0.0
      %1661 = vmatpush.msra.mxu0 0.0
      %1662 = vmatpush.msra.mxu0 0.0
      %1663 = vmatpush.msra.mxu0 0.0
      %1664 = vmatpush.msra.mxu0 %v1644
      %1665 = vmatmul.f32.gmra.mxu0 %v1620
      %v1666 = vpop.f32.mrf.mxu0
      %v1667 = vadd.f32 0.0, %v1666
      %1668 = vmatmul.f32.gmra.mxu0 %v1623
      %v1669 = vpop.f32.mrf.mxu0
      %v1670 = vadd.f32 0.0, %v1669
      %1671 = vmatmul.f32.gmra.mxu0 %v1626
      %v1672 = vpop.f32.mrf.mxu0
      %v1673 = vadd.f32 0.0, %v1672
      %1674 = vmatmul.f32.gmra.mxu0 %v1629
      %v1675 = vpop.f32.mrf.mxu0
      %v1676 = vadd.f32 0.0, %v1675
      %1677 = vmatmul.f32.gmra.mxu0 %v1632
      %v1678 = vpop.f32.mrf.mxu0
      %v1679 = vadd.f32 0.0, %v1678
      %1680 = vmatmul.f32.gmra.mxu0 %v1635
      %v1681 = vpop.f32.mrf.mxu0
      %v1682 = vadd.f32 0.0, %v1681
      %1683 = vmatmul.f32.gmra.mxu0 %v1638
      %v1684 = vpop.f32.mrf.mxu0
      %v1685 = vadd.f32 0.0, %v1684
      %1686 = vmatmul.f32.gmra.mxu0 %v1641
      %v1687 = vpop.f32.mrf.mxu0
      %v1688 = vadd.f32 0.0, %v1687
      %1689 = vdwg.mxu0
      %1690 = vmatpush.msra.mxu0 0.0
      %1691 = vmatpush.msra.mxu0 0.0
      %1692 = vmatpush.msra.mxu0 0.0
      %1693 = vmatpush.msra.mxu0 0.0
      %1694 = vmatpush.msra.mxu0 0.0
      %1695 = vmatpush.msra.mxu0 0.0
      %1696 = vmatpush.msra.mxu0 0.0
      %1697 = vmatpush.msra.mxu0 0.0
      %1698 = vmatpush.msra.mxu0 0.0
      %1699 = vmatpush.msra.mxu0 0.0
      %1700 = vmatpush.msra.mxu0 0.0
      %1701 = vmatpush.msra.mxu0 0.0
      %1702 = vmatpush.msra.mxu0 0.0
      %1703 = vmatpush.msra.mxu0 0.0
      %1704 = vmatpush.msra.mxu0 0.0
      %1705 = vmatpush.msra.mxu0 %v1647
      %1706 = vmatmul.f32.gmra.mxu0 %v1620
      %v1707 = vpop.f32.mrf.mxu0
      %v1708 = vadd.f32 0.0, %v1707
      %1709 = vmatmul.f32.gmra.mxu0 %v1623
      %v1710 = vpop.f32.mrf.mxu0
      %v1711 = vadd.f32 0.0, %v1710
      %1712 = vmatmul.f32.gmra.mxu0 %v1626
      %v1713 = vpop.f32.mrf.mxu0
      %v1714 = vadd.f32 0.0, %v1713
      %1715 = vmatmul.f32.gmra.mxu0 %v1629
      %v1716 = vpop.f32.mrf.mxu0
      %v1717 = vadd.f32 0.0, %v1716
      %1718 = vmatmul.f32.gmra.mxu0 %v1632
      %v1719 = vpop.f32.mrf.mxu0
      %v1720 = vadd.f32 0.0, %v1719
      %1721 = vmatmul.f32.gmra.mxu0 %v1635
      %v1722 = vpop.f32.mrf.mxu0
      %v1723 = vadd.f32 0.0, %v1722
      %1724 = vmatmul.f32.gmra.mxu0 %v1638
      %v1725 = vpop.f32.mrf.mxu0
      %v1726 = vadd.f32 0.0, %v1725
      %1727 = vmatmul.f32.gmra.mxu0 %v1641
      %v1728 = vpop.f32.mrf.mxu0
      %v1729 = vadd.f32 0.0, %v1728
      %1730 = vdwg.mxu0
      %v1731 = vadd.f32 %v1580, %v1667
      %v1732 = vadd.f32 %v1581, %v1708
      %v1733 = vadd.f32 %v1582, %v1670
      %v1734 = vadd.f32 %v1583, %v1711
      %v1735 = vadd.f32 %v1584, %v1673
      %v1736 = vadd.f32 %v1585, %v1714
      %v1737 = vadd.f32 %v1586, %v1676
      %v1738 = vadd.f32 %v1587, %v1717
      %v1739 = vadd.f32 %v1588, %v1679
      %v1740 = vadd.f32 %v1589, %v1720
      %v1741 = vadd.f32 %v1590, %v1682
      %v1742 = vadd.f32 %v1591, %v1723
      %v1743 = vadd.f32 %v1592, %v1685
      %v1744 = vadd.f32 %v1593, %v1726
      %v1745 = vadd.f32 %v1594, %v1688
      %v1746 = vadd.f32 %v1595, %v1729
      %v1747 = vld [vmem:[%s3] sm:$0xff]
      %v1748 = vld [vmem:[%s3 + $0x8] sm:$0xff]
      %v1749 = vld [vmem:[%s3 + $0x10] sm:$0xff]
      %v1750 = vld [vmem:[%s3 + $0x18] sm:$0xff]
      %v1751 = vld [vmem:[%s3 + $0x20] sm:$0xff]
      %v1752 = vld [vmem:[%s3 + $0x28] sm:$0xff]
      %v1753 = vld [vmem:[%s3 + $0x30] sm:$0xff]
      %v1754 = vld [vmem:[%s3 + $0x38] sm:$0xff]
      %1756 = vset.pattern.permute.xlu0 0
      %1757 = vperm.xlu0 %1756, %v1747
      %v1758 = vpop.permute.xlu0 %1757
      %1761 = vset.pattern.permute.xlu0 0
      %1762 = vperm.xlu0 %1761, %v1748
      %v1763 = vpop.permute.xlu0 %1762
      %1766 = vset.pattern.permute.xlu0 0
      %1767 = vperm.xlu0 %1766, %v1749
      %v1768 = vpop.permute.xlu0 %1767
      %1771 = vset.pattern.permute.xlu0 0
      %1772 = vperm.xlu0 %1771, %v1750
      %v1773 = vpop.permute.xlu0 %1772
      %1776 = vset.pattern.permute.xlu0 0
      %1777 = vperm.xlu0 %1776, %v1751
      %v1778 = vpop.permute.xlu0 %1777
      %1781 = vset.pattern.permute.xlu0 0
      %1782 = vperm.xlu0 %1781, %v1752
      %v1783 = vpop.permute.xlu0 %1782
      %1786 = vset.pattern.permute.xlu0 0
      %1787 = vperm.xlu0 %1786, %v1753
      %v1788 = vpop.permute.xlu0 %1787
      %1791 = vset.pattern.permute.xlu0 0
      %1792 = vperm.xlu0 %1791, %v1754
      %v1793 = vpop.permute.xlu0 %1792
      %v1795 = vadd.f32 %v1731, %v1758
      %v1796 = vadd.f32 %v1732, %v1758
      %v1797 = vadd.f32 %v1733, %v1763
      %v1798 = vadd.f32 %v1734, %v1763
      %v1799 = vadd.f32 %v1735, %v1768
      %v1800 = vadd.f32 %v1736, %v1768
      %v1801 = vadd.f32 %v1737, %v1773
      %v1802 = vadd.f32 %v1738, %v1773
      %v1803 = vadd.f32 %v1739, %v1778
      %v1804 = vadd.f32 %v1740, %v1778
      %v1805 = vadd.f32 %v1741, %v1783
      %v1806 = vadd.f32 %v1742, %v1783
      %v1807 = vadd.f32 %v1743, %v1788
      %v1808 = vadd.f32 %v1744, %v1788
      %v1809 = vadd.f32 %v1745, %v1793
      %v1810 = vadd.f32 %v1746, %v1793
      %1811 = vrot.lane.b32.xlu0 %v1795, 17
      %v1812 = vpop.permute.xlu0 %1811
      %1813 = vrot.lane.b32.xlu0 %v1797, 17
      %v1814 = vpop.permute.xlu0 %1813
      %1815 = vrot.lane.b32.xlu0 %v1799, 17
      %v1816 = vpop.permute.xlu0 %1815
      %1817 = vrot.lane.b32.xlu0 %v1801, 17
      %v1818 = vpop.permute.xlu0 %1817
      %1819 = vrot.lane.b32.xlu0 %v1803, 17
      %v1820 = vpop.permute.xlu0 %1819
      %1821 = vrot.lane.b32.xlu0 %v1805, 17
      %v1822 = vpop.permute.xlu0 %1821
      %1823 = vrot.lane.b32.xlu0 %v1807, 17
      %v1824 = vpop.permute.xlu0 %1823
      %1825 = vrot.lane.b32.xlu0 %v1809, 17
      %v1826 = vpop.permute.xlu0 %1825
      %1827 = vrot.lane.b32.xlu0 %v1796, 17
      %v1828 = vpop.permute.xlu0 %1827
      %1829 = vrot.lane.b32.xlu0 %v1798, 17
      %v1830 = vpop.permute.xlu0 %1829
      %1831 = vrot.lane.b32.xlu0 %v1800, 17
      %v1832 = vpop.permute.xlu0 %1831
      %1833 = vrot.lane.b32.xlu0 %v1802, 17
      %v1834 = vpop.permute.xlu0 %1833
      %1835 = vrot.lane.b32.xlu0 %v1804, 17
      %v1836 = vpop.permute.xlu0 %1835
      %1837 = vrot.lane.b32.xlu0 %v1806, 17
      %v1838 = vpop.permute.xlu0 %1837
      %1839 = vrot.lane.b32.xlu0 %v1808, 17
      %v1840 = vpop.permute.xlu0 %1839
      %1841 = vrot.lane.b32.xlu0 %v1810, 17
      %v1842 = vpop.permute.xlu0 %1841
      %v1843 = vsel %vm437, %v1812, %v1828
      %v1844 = vsel %vm437, %v1814, %v1830
      %v1845 = vsel %vm437, %v1816, %v1832
      %v1846 = vsel %vm437, %v1818, %v1834
      %v1847 = vsel %vm437, %v1820, %v1836
      %v1848 = vsel %vm437, %v1822, %v1838
      %v1849 = vsel %vm437, %v1824, %v1840
      %v1850 = vsel %vm437, %v1826, %v1842
      %v1851 = vsel %vm437, %v1828, %v1812
      %v1852 = vsel %vm437, %v1830, %v1814
      %v1853 = vsel %vm437, %v1832, %v1816
      %v1854 = vsel %vm437, %v1834, %v1818
      %v1855 = vsel %vm437, %v1836, %v1820
      %v1856 = vsel %vm437, %v1838, %v1822
      %v1857 = vsel %vm437, %v1840, %v1824
      %v1858 = vsel %vm437, %v1842, %v1826
      %v1859 = vld [vmem:[%s4] sm:$0xff]
      %v1860 = vld [vmem:[%s4 + $0x8] sm:$0xff]
      %v1861 = vld [vmem:[%s4 + $0x10] sm:$0xff]
      %v1862 = vld [vmem:[%s4 + $0x18] sm:$0xff]
      %vm1863 = vcmask 523264
      %v1865 = vsel %vm1863, %v1859, 0
      %v1868 = vsel %vm1863, %v1860, 0
      %v1871 = vsel %vm1863, %v1861, 0
      %v1874 = vsel %vm1863, %v1862, 0
      %1876 = vmatpush.msra.mxu0 0.0
      %1877 = vmatpush.msra.mxu0 0.0
      %1878 = vmatpush.msra.mxu0 0.0
      %1879 = vmatpush.msra.mxu0 0.0
      %1880 = vmatpush.msra.mxu0 0.0
      %1881 = vmatpush.msra.mxu0 0.0
      %1882 = vmatpush.msra.mxu0 0.0
      %1883 = vmatpush.msra.mxu0 0.0
      %1884 = vmatpush.msra.mxu0 %v1858
      %1885 = vmatpush.msra.mxu0 %v1857
      %1886 = vmatpush.msra.mxu0 %v1856
      %1887 = vmatpush.msra.mxu0 %v1855
      %1888 = vmatpush.msra.mxu0 %v1854
      %1889 = vmatpush.msra.mxu0 %v1853
      %1890 = vmatpush.msra.mxu0 %v1852
      %1891 = vmatpush.msra.mxu0 %v1851
      %1892 = vmatmul.f32.gmra.mxu0 %v1865
      %v1893 = vpop.f32.mrf.mxu0
      %v1894 = vadd.f32 0.0, %v1893
      %1895 = vmatmul.f32.gmra.mxu0 %v1868
      %v1896 = vpop.f32.mrf.mxu0
      %v1897 = vadd.f32 0.0, %v1896
      %1898 = vmatmul.f32.gmra.mxu0 %v1871
      %v1899 = vpop.f32.mrf.mxu0
      %v1900 = vadd.f32 0.0, %v1899
      %1901 = vmatmul.f32.gmra.mxu0 %v1874
      %v1902 = vpop.f32.mrf.mxu0
      %v1903 = vadd.f32 0.0, %v1902
      %1904 = vdwg.mxu0
      %1905 = vmatpush.msra.mxu0 0.0
      %1906 = vmatpush.msra.mxu0 0.0
      %1907 = vmatpush.msra.mxu0 0.0
      %1908 = vmatpush.msra.mxu0 0.0
      %1909 = vmatpush.msra.mxu0 0.0
      %1910 = vmatpush.msra.mxu0 0.0
      %1911 = vmatpush.msra.mxu0 0.0
      %1912 = vmatpush.msra.mxu0 0.0
      %1913 = vmatpush.msra.mxu0 %v1850
      %1914 = vmatpush.msra.mxu0 %v1849
      %1915 = vmatpush.msra.mxu0 %v1848
      %1916 = vmatpush.msra.mxu0 %v1847
      %1917 = vmatpush.msra.mxu0 %v1846
      %1918 = vmatpush.msra.mxu0 %v1845
      %1919 = vmatpush.msra.mxu0 %v1844
      %1920 = vmatpush.msra.mxu0 %v1843
      %1921 = vmatmul.f32.gmra.mxu0 %v1865
      %v1922 = vpop.f32.mrf.mxu0
      %v1923 = vadd.f32 0.0, %v1922
      %1924 = vmatmul.f32.gmra.mxu0 %v1868
      %v1925 = vpop.f32.mrf.mxu0
      %v1926 = vadd.f32 0.0, %v1925
      %1927 = vmatmul.f32.gmra.mxu0 %v1871
      %v1928 = vpop.f32.mrf.mxu0
      %v1929 = vadd.f32 0.0, %v1928
      %1930 = vmatmul.f32.gmra.mxu0 %v1874
      %v1931 = vpop.f32.mrf.mxu0
      %v1932 = vadd.f32 0.0, %v1931
      %1933 = vdwg.mxu0
      %v1934 = vmul.f32 %v1894, %v449
      %v1935 = vmul.f32 %v1923, %v450
      %v1936 = vmul.f32 %v1897, %v449
      %v1937 = vmul.f32 %v1926, %v450
      %v1938 = vmul.f32 %v1900, %v449
      %v1939 = vmul.f32 %v1929, %v450
      %v1940 = vmul.f32 %v1903, %v449
      %v1941 = vmul.f32 %v1932, %v450
      %v1942 = vadd.f32 %v1934, 0.0
      %v1943 = vadd.f32 %v1935, 0.0
      %v1944 = vadd.f32 %v1936, 0.0
      %v1945 = vadd.f32 %v1937, 0.0
      %v1946 = vadd.f32 %v1938, 0.0
      %v1947 = vadd.f32 %v1939, 0.0
      %v1948 = vadd.f32 %v1940, 0.0
      %v1949 = vadd.f32 %v1941, 0.0
      %1950 = vrot.lane.b32.xlu0 %v1795, 16
      %v1951 = vpop.permute.xlu0 %1950
      %1952 = vrot.lane.b32.xlu0 %v1797, 16
      %v1953 = vpop.permute.xlu0 %1952
      %1954 = vrot.lane.b32.xlu0 %v1799, 16
      %v1955 = vpop.permute.xlu0 %1954
      %1956 = vrot.lane.b32.xlu0 %v1801, 16
      %v1957 = vpop.permute.xlu0 %1956
      %1958 = vrot.lane.b32.xlu0 %v1803, 16
      %v1959 = vpop.permute.xlu0 %1958
      %1960 = vrot.lane.b32.xlu0 %v1805, 16
      %v1961 = vpop.permute.xlu0 %1960
      %1962 = vrot.lane.b32.xlu0 %v1807, 16
      %v1963 = vpop.permute.xlu0 %1962
      %1964 = vrot.lane.b32.xlu0 %v1809, 16
      %v1965 = vpop.permute.xlu0 %1964
      %1966 = vrot.lane.b32.xlu0 %v1796, 16
      %v1967 = vpop.permute.xlu0 %1966
      %1968 = vrot.lane.b32.xlu0 %v1798, 16
      %v1969 = vpop.permute.xlu0 %1968
      %1970 = vrot.lane.b32.xlu0 %v1800, 16
      %v1971 = vpop.permute.xlu0 %1970
      %1972 = vrot.lane.b32.xlu0 %v1802, 16
      %v1973 = vpop.permute.xlu0 %1972
      %1974 = vrot.lane.b32.xlu0 %v1804, 16
      %v1975 = vpop.permute.xlu0 %1974
      %1976 = vrot.lane.b32.xlu0 %v1806, 16
      %v1977 = vpop.permute.xlu0 %1976
      %1978 = vrot.lane.b32.xlu0 %v1808, 16
      %v1979 = vpop.permute.xlu0 %1978
      %1980 = vrot.lane.b32.xlu0 %v1810, 16
      %v1981 = vpop.permute.xlu0 %1980
      %v1982 = vsel %vm459, %v1951, %v1967
      %v1983 = vsel %vm459, %v1953, %v1969
      %v1984 = vsel %vm459, %v1955, %v1971
      %v1985 = vsel %vm459, %v1957, %v1973
      %v1986 = vsel %vm459, %v1959, %v1975
      %v1987 = vsel %vm459, %v1961, %v1977
      %v1988 = vsel %vm459, %v1963, %v1979
      %v1989 = vsel %vm459, %v1965, %v1981
      %v1990 = vsel %vm459, %v1967, %v1951
      %v1991 = vsel %vm459, %v1969, %v1953
      %v1992 = vsel %vm459, %v1971, %v1955
      %v1993 = vsel %vm459, %v1973, %v1957
      %v1994 = vsel %vm459, %v1975, %v1959
      %v1995 = vsel %vm459, %v1977, %v1961
      %v1996 = vsel %vm459, %v1979, %v1963
      %v1997 = vsel %vm459, %v1981, %v1965
      %s1998 = scalar_lea.vmem %s4, 32
      %v1999 = vld [vmem:[%s1998] sm:$0xff]
      %v2000 = vld [vmem:[%s1998 + $0x8] sm:$0xff]
      %v2001 = vld [vmem:[%s1998 + $0x10] sm:$0xff]
      %v2002 = vld [vmem:[%s1998 + $0x18] sm:$0xff]
      %v2004 = vsel %vm1863, %v1999, 0
      %v2007 = vsel %vm1863, %v2000, 0
      %v2010 = vsel %vm1863, %v2001, 0
      %v2013 = vsel %vm1863, %v2002, 0
      %2015 = vmatpush.msra.mxu0 0.0
      %2016 = vmatpush.msra.mxu0 0.0
      %2017 = vmatpush.msra.mxu0 0.0
      %2018 = vmatpush.msra.mxu0 0.0
      %2019 = vmatpush.msra.mxu0 0.0
      %2020 = vmatpush.msra.mxu0 0.0
      %2021 = vmatpush.msra.mxu0 0.0
      %2022 = vmatpush.msra.mxu0 0.0
      %2023 = vmatpush.msra.mxu0 %v1997
      %2024 = vmatpush.msra.mxu0 %v1996
      %2025 = vmatpush.msra.mxu0 %v1995
      %2026 = vmatpush.msra.mxu0 %v1994
      %2027 = vmatpush.msra.mxu0 %v1993
      %2028 = vmatpush.msra.mxu0 %v1992
      %2029 = vmatpush.msra.mxu0 %v1991
      %2030 = vmatpush.msra.mxu0 %v1990
      %2031 = vmatmul.f32.gmra.mxu0 %v2004
      %v2032 = vpop.f32.mrf.mxu0
      %v2033 = vadd.f32 0.0, %v2032
      %2034 = vmatmul.f32.gmra.mxu0 %v2007
      %v2035 = vpop.f32.mrf.mxu0
      %v2036 = vadd.f32 0.0, %v2035
      %2037 = vmatmul.f32.gmra.mxu0 %v2010
      %v2038 = vpop.f32.mrf.mxu0
      %v2039 = vadd.f32 0.0, %v2038
      %2040 = vmatmul.f32.gmra.mxu0 %v2013
      %v2041 = vpop.f32.mrf.mxu0
      %v2042 = vadd.f32 0.0, %v2041
      %2043 = vdwg.mxu0
      %2044 = vmatpush.msra.mxu0 0.0
      %2045 = vmatpush.msra.mxu0 0.0
      %2046 = vmatpush.msra.mxu0 0.0
      %2047 = vmatpush.msra.mxu0 0.0
      %2048 = vmatpush.msra.mxu0 0.0
      %2049 = vmatpush.msra.mxu0 0.0
      %2050 = vmatpush.msra.mxu0 0.0
      %2051 = vmatpush.msra.mxu0 0.0
      %2052 = vmatpush.msra.mxu0 %v1989
      %2053 = vmatpush.msra.mxu0 %v1988
      %2054 = vmatpush.msra.mxu0 %v1987
      %2055 = vmatpush.msra.mxu0 %v1986
      %2056 = vmatpush.msra.mxu0 %v1985
      %2057 = vmatpush.msra.mxu0 %v1984
      %2058 = vmatpush.msra.mxu0 %v1983
      %2059 = vmatpush.msra.mxu0 %v1982
      %2060 = vmatmul.f32.gmra.mxu0 %v2004
      %v2061 = vpop.f32.mrf.mxu0
      %v2062 = vadd.f32 0.0, %v2061
      %2063 = vmatmul.f32.gmra.mxu0 %v2007
      %v2064 = vpop.f32.mrf.mxu0
      %v2065 = vadd.f32 0.0, %v2064
      %2066 = vmatmul.f32.gmra.mxu0 %v2010
      %v2067 = vpop.f32.mrf.mxu0
      %v2068 = vadd.f32 0.0, %v2067
      %2069 = vmatmul.f32.gmra.mxu0 %v2013
      %v2070 = vpop.f32.mrf.mxu0
      %v2071 = vadd.f32 0.0, %v2070
      %2072 = vdwg.mxu0
      %v2073 = vmul.f32 %v2033, %v472
      %v2074 = vmul.f32 %v2062, %v473
      %v2075 = vmul.f32 %v2036, %v472
      %v2076 = vmul.f32 %v2065, %v473
      %v2077 = vmul.f32 %v2039, %v472
      %v2078 = vmul.f32 %v2068, %v473
      %v2079 = vmul.f32 %v2042, %v472
      %v2080 = vmul.f32 %v2071, %v473
      %v2081 = vadd.f32 %v1942, %v2073
      %v2082 = vadd.f32 %v1943, %v2074
      %v2083 = vadd.f32 %v1944, %v2075
      %v2084 = vadd.f32 %v1945, %v2076
      %v2085 = vadd.f32 %v1946, %v2077
      %v2086 = vadd.f32 %v1947, %v2078
      %v2087 = vadd.f32 %v1948, %v2079
      %v2088 = vadd.f32 %v1949, %v2080
      %2089 = vrot.lane.b32.xlu0 %v1795, 15
      %v2090 = vpop.permute.xlu0 %2089
      %2091 = vrot.lane.b32.xlu0 %v1797, 15
      %v2092 = vpop.permute.xlu0 %2091
      %2093 = vrot.lane.b32.xlu0 %v1799, 15
      %v2094 = vpop.permute.xlu0 %2093
      %2095 = vrot.lane.b32.xlu0 %v1801, 15
      %v2096 = vpop.permute.xlu0 %2095
      %2097 = vrot.lane.b32.xlu0 %v1803, 15
      %v2098 = vpop.permute.xlu0 %2097
      %2099 = vrot.lane.b32.xlu0 %v1805, 15
      %v2100 = vpop.permute.xlu0 %2099
      %2101 = vrot.lane.b32.xlu0 %v1807, 15
      %v2102 = vpop.permute.xlu0 %2101
      %2103 = vrot.lane.b32.xlu0 %v1809, 15
      %v2104 = vpop.permute.xlu0 %2103
      %2105 = vrot.lane.b32.xlu0 %v1796, 15
      %v2106 = vpop.permute.xlu0 %2105
      %2107 = vrot.lane.b32.xlu0 %v1798, 15
      %v2108 = vpop.permute.xlu0 %2107
      %2109 = vrot.lane.b32.xlu0 %v1800, 15
      %v2110 = vpop.permute.xlu0 %2109
      %2111 = vrot.lane.b32.xlu0 %v1802, 15
      %v2112 = vpop.permute.xlu0 %2111
      %2113 = vrot.lane.b32.xlu0 %v1804, 15
      %v2114 = vpop.permute.xlu0 %2113
      %2115 = vrot.lane.b32.xlu0 %v1806, 15
      %v2116 = vpop.permute.xlu0 %2115
      %2117 = vrot.lane.b32.xlu0 %v1808, 15
      %v2118 = vpop.permute.xlu0 %2117
      %2119 = vrot.lane.b32.xlu0 %v1810, 15
      %v2120 = vpop.permute.xlu0 %2119
      %v2121 = vsel %vm708, %v2090, %v2106
      %v2122 = vsel %vm708, %v2092, %v2108
      %v2123 = vsel %vm708, %v2094, %v2110
      %v2124 = vsel %vm708, %v2096, %v2112
      %v2125 = vsel %vm708, %v2098, %v2114
      %v2126 = vsel %vm708, %v2100, %v2116
      %v2127 = vsel %vm708, %v2102, %v2118
      %v2128 = vsel %vm708, %v2104, %v2120
      %v2129 = vsel %vm708, %v2106, %v2090
      %v2130 = vsel %vm708, %v2108, %v2092
      %v2131 = vsel %vm708, %v2110, %v2094
      %v2132 = vsel %vm708, %v2112, %v2096
      %v2133 = vsel %vm708, %v2114, %v2098
      %v2134 = vsel %vm708, %v2116, %v2100
      %v2135 = vsel %vm708, %v2118, %v2102
      %v2136 = vsel %vm708, %v2120, %v2104
      %s2137 = scalar_lea.vmem %s4, 64
      %v2138 = vld [vmem:[%s2137] sm:$0xff]
      %v2139 = vld [vmem:[%s2137 + $0x8] sm:$0xff]
      %v2140 = vld [vmem:[%s2137 + $0x10] sm:$0xff]
      %v2141 = vld [vmem:[%s2137 + $0x18] sm:$0xff]
      %v2143 = vsel %vm1863, %v2138, 0
      %v2146 = vsel %vm1863, %v2139, 0
      %v2149 = vsel %vm1863, %v2140, 0
      %v2152 = vsel %vm1863, %v2141, 0
      %2154 = vmatpush.msra.mxu0 0.0
      %2155 = vmatpush.msra.mxu0 0.0
      %2156 = vmatpush.msra.mxu0 0.0
      %2157 = vmatpush.msra.mxu0 0.0
      %2158 = vmatpush.msra.mxu0 0.0
      %2159 = vmatpush.msra.mxu0 0.0
      %2160 = vmatpush.msra.mxu0 0.0
      %2161 = vmatpush.msra.mxu0 0.0
      %2162 = vmatpush.msra.mxu0 %v2136
      %2163 = vmatpush.msra.mxu0 %v2135
      %2164 = vmatpush.msra.mxu0 %v2134
      %2165 = vmatpush.msra.mxu0 %v2133
      %2166 = vmatpush.msra.mxu0 %v2132
      %2167 = vmatpush.msra.mxu0 %v2131
      %2168 = vmatpush.msra.mxu0 %v2130
      %2169 = vmatpush.msra.mxu0 %v2129
      %2170 = vmatmul.f32.gmra.mxu0 %v2143
      %v2171 = vpop.f32.mrf.mxu0
      %v2172 = vadd.f32 0.0, %v2171
      %2173 = vmatmul.f32.gmra.mxu0 %v2146
      %v2174 = vpop.f32.mrf.mxu0
      %v2175 = vadd.f32 0.0, %v2174
      %2176 = vmatmul.f32.gmra.mxu0 %v2149
      %v2177 = vpop.f32.mrf.mxu0
      %v2178 = vadd.f32 0.0, %v2177
      %2179 = vmatmul.f32.gmra.mxu0 %v2152
      %v2180 = vpop.f32.mrf.mxu0
      %v2181 = vadd.f32 0.0, %v2180
      %2182 = vdwg.mxu0
      %2183 = vmatpush.msra.mxu0 0.0
      %2184 = vmatpush.msra.mxu0 0.0
      %2185 = vmatpush.msra.mxu0 0.0
      %2186 = vmatpush.msra.mxu0 0.0
      %2187 = vmatpush.msra.mxu0 0.0
      %2188 = vmatpush.msra.mxu0 0.0
      %2189 = vmatpush.msra.mxu0 0.0
      %2190 = vmatpush.msra.mxu0 0.0
      %2191 = vmatpush.msra.mxu0 %v2128
      %2192 = vmatpush.msra.mxu0 %v2127
      %2193 = vmatpush.msra.mxu0 %v2126
      %2194 = vmatpush.msra.mxu0 %v2125
      %2195 = vmatpush.msra.mxu0 %v2124
      %2196 = vmatpush.msra.mxu0 %v2123
      %2197 = vmatpush.msra.mxu0 %v2122
      %2198 = vmatpush.msra.mxu0 %v2121
      %2199 = vmatmul.f32.gmra.mxu0 %v2143
      %v2200 = vpop.f32.mrf.mxu0
      %v2201 = vadd.f32 0.0, %v2200
      %2202 = vmatmul.f32.gmra.mxu0 %v2146
      %v2203 = vpop.f32.mrf.mxu0
      %v2204 = vadd.f32 0.0, %v2203
      %2205 = vmatmul.f32.gmra.mxu0 %v2149
      %v2206 = vpop.f32.mrf.mxu0
      %v2207 = vadd.f32 0.0, %v2206
      %2208 = vmatmul.f32.gmra.mxu0 %v2152
      %v2209 = vpop.f32.mrf.mxu0
      %v2210 = vadd.f32 0.0, %v2209
      %2211 = vdwg.mxu0
      %v2212 = vmul.f32 %v2172, %v721
      %v2213 = vmul.f32 %v2201, %v722
      %v2214 = vmul.f32 %v2175, %v721
      %v2215 = vmul.f32 %v2204, %v722
      %v2216 = vmul.f32 %v2178, %v721
      %v2217 = vmul.f32 %v2207, %v722
      %v2218 = vmul.f32 %v2181, %v721
      %v2219 = vmul.f32 %v2210, %v722
      %v2220 = vadd.f32 %v2081, %v2212
      %v2221 = vadd.f32 %v2082, %v2213
      %v2222 = vadd.f32 %v2083, %v2214
      %v2223 = vadd.f32 %v2084, %v2215
      %v2224 = vadd.f32 %v2085, %v2216
      %v2225 = vadd.f32 %v2086, %v2217
      %v2226 = vadd.f32 %v2087, %v2218
      %v2227 = vadd.f32 %v2088, %v2219
      %2228 = vrot.lane.b32.xlu0 %v1795, 1
      %v2229 = vpop.permute.xlu0 %2228
      %2230 = vrot.lane.b32.xlu0 %v1797, 1
      %v2231 = vpop.permute.xlu0 %2230
      %2232 = vrot.lane.b32.xlu0 %v1799, 1
      %v2233 = vpop.permute.xlu0 %2232
      %2234 = vrot.lane.b32.xlu0 %v1801, 1
      %v2235 = vpop.permute.xlu0 %2234
      %2236 = vrot.lane.b32.xlu0 %v1803, 1
      %v2237 = vpop.permute.xlu0 %2236
      %2238 = vrot.lane.b32.xlu0 %v1805, 1
      %v2239 = vpop.permute.xlu0 %2238
      %2240 = vrot.lane.b32.xlu0 %v1807, 1
      %v2241 = vpop.permute.xlu0 %2240
      %2242 = vrot.lane.b32.xlu0 %v1809, 1
      %v2243 = vpop.permute.xlu0 %2242
      %2244 = vrot.lane.b32.xlu0 %v1796, 1
      %v2245 = vpop.permute.xlu0 %2244
      %2246 = vrot.lane.b32.xlu0 %v1798, 1
      %v2247 = vpop.permute.xlu0 %2246
      %2248 = vrot.lane.b32.xlu0 %v1800, 1
      %v2249 = vpop.permute.xlu0 %2248
      %2250 = vrot.lane.b32.xlu0 %v1802, 1
      %v2251 = vpop.permute.xlu0 %2250
      %2252 = vrot.lane.b32.xlu0 %v1804, 1
      %v2253 = vpop.permute.xlu0 %2252
      %2254 = vrot.lane.b32.xlu0 %v1806, 1
      %v2255 = vpop.permute.xlu0 %2254
      %2256 = vrot.lane.b32.xlu0 %v1808, 1
      %v2257 = vpop.permute.xlu0 %2256
      %2258 = vrot.lane.b32.xlu0 %v1810, 1
      %v2259 = vpop.permute.xlu0 %2258
      %v2260 = vsel %vm859, %v2229, %v2245
      %v2261 = vsel %vm859, %v2231, %v2247
      %v2262 = vsel %vm859, %v2233, %v2249
      %v2263 = vsel %vm859, %v2235, %v2251
      %v2264 = vsel %vm859, %v2237, %v2253
      %v2265 = vsel %vm859, %v2239, %v2255
      %v2266 = vsel %vm859, %v2241, %v2257
      %v2267 = vsel %vm859, %v2243, %v2259
      %v2268 = vsel %vm859, %v2245, %v2229
      %v2269 = vsel %vm859, %v2247, %v2231
      %v2270 = vsel %vm859, %v2249, %v2233
      %v2271 = vsel %vm859, %v2251, %v2235
      %v2272 = vsel %vm859, %v2253, %v2237
      %v2273 = vsel %vm859, %v2255, %v2239
      %v2274 = vsel %vm859, %v2257, %v2241
      %v2275 = vsel %vm859, %v2259, %v2243
      %s2276 = scalar_lea.vmem %s4, 96
      %v2277 = vld [vmem:[%s2276] sm:$0xff]
      %v2278 = vld [vmem:[%s2276 + $0x8] sm:$0xff]
      %v2279 = vld [vmem:[%s2276 + $0x10] sm:$0xff]
      %v2280 = vld [vmem:[%s2276 + $0x18] sm:$0xff]
      %v2282 = vsel %vm1863, %v2277, 0
      %v2285 = vsel %vm1863, %v2278, 0
      %v2288 = vsel %vm1863, %v2279, 0
      %v2291 = vsel %vm1863, %v2280, 0
      %2293 = vmatpush.msra.mxu0 0.0
      %2294 = vmatpush.msra.mxu0 0.0
      %2295 = vmatpush.msra.mxu0 0.0
      %2296 = vmatpush.msra.mxu0 0.0
      %2297 = vmatpush.msra.mxu0 0.0
      %2298 = vmatpush.msra.mxu0 0.0
      %2299 = vmatpush.msra.mxu0 0.0
      %2300 = vmatpush.msra.mxu0 0.0
      %2301 = vmatpush.msra.mxu0 %v2275
      %2302 = vmatpush.msra.mxu0 %v2274
      %2303 = vmatpush.msra.mxu0 %v2273
      %2304 = vmatpush.msra.mxu0 %v2272
      %2305 = vmatpush.msra.mxu0 %v2271
      %2306 = vmatpush.msra.mxu0 %v2270
      %2307 = vmatpush.msra.mxu0 %v2269
      %2308 = vmatpush.msra.mxu0 %v2268
      %2309 = vmatmul.f32.gmra.mxu0 %v2282
      %v2310 = vpop.f32.mrf.mxu0
      %v2311 = vadd.f32 0.0, %v2310
      %2312 = vmatmul.f32.gmra.mxu0 %v2285
      %v2313 = vpop.f32.mrf.mxu0
      %v2314 = vadd.f32 0.0, %v2313
      %2315 = vmatmul.f32.gmra.mxu0 %v2288
      %v2316 = vpop.f32.mrf.mxu0
      %v2317 = vadd.f32 0.0, %v2316
      %2318 = vmatmul.f32.gmra.mxu0 %v2291
      %v2319 = vpop.f32.mrf.mxu0
      %v2320 = vadd.f32 0.0, %v2319
      %2321 = vdwg.mxu0
      %2322 = vmatpush.msra.mxu0 0.0
      %2323 = vmatpush.msra.mxu0 0.0
      %2324 = vmatpush.msra.mxu0 0.0
      %2325 = vmatpush.msra.mxu0 0.0
      %2326 = vmatpush.msra.mxu0 0.0
      %2327 = vmatpush.msra.mxu0 0.0
      %2328 = vmatpush.msra.mxu0 0.0
      %2329 = vmatpush.msra.mxu0 0.0
      %2330 = vmatpush.msra.mxu0 %v2267
      %2331 = vmatpush.msra.mxu0 %v2266
      %2332 = vmatpush.msra.mxu0 %v2265
      %2333 = vmatpush.msra.mxu0 %v2264
      %2334 = vmatpush.msra.mxu0 %v2263
      %2335 = vmatpush.msra.mxu0 %v2262
      %2336 = vmatpush.msra.mxu0 %v2261
      %2337 = vmatpush.msra.mxu0 %v2260
      %2338 = vmatmul.f32.gmra.mxu0 %v2282
      %v2339 = vpop.f32.mrf.mxu0
      %v2340 = vadd.f32 0.0, %v2339
      %2341 = vmatmul.f32.gmra.mxu0 %v2285
      %v2342 = vpop.f32.mrf.mxu0
      %v2343 = vadd.f32 0.0, %v2342
      %2344 = vmatmul.f32.gmra.mxu0 %v2288
      %v2345 = vpop.f32.mrf.mxu0
      %v2346 = vadd.f32 0.0, %v2345
      %2347 = vmatmul.f32.gmra.mxu0 %v2291
      %v2348 = vpop.f32.mrf.mxu0
      %v2349 = vadd.f32 0.0, %v2348
      %2350 = vdwg.mxu0
      %v2351 = vmul.f32 %v2311, %v872
      %v2352 = vmul.f32 %v2340, %v873
      %v2353 = vmul.f32 %v2314, %v872
      %v2354 = vmul.f32 %v2343, %v873
      %v2355 = vmul.f32 %v2317, %v872
      %v2356 = vmul.f32 %v2346, %v873
      %v2357 = vmul.f32 %v2320, %v872
      %v2358 = vmul.f32 %v2349, %v873
      %v2359 = vadd.f32 %v2220, %v2351
      %v2360 = vadd.f32 %v2221, %v2352
      %v2361 = vadd.f32 %v2222, %v2353
      %v2362 = vadd.f32 %v2223, %v2354
      %v2363 = vadd.f32 %v2224, %v2355
      %v2364 = vadd.f32 %v2225, %v2356
      %v2365 = vadd.f32 %v2226, %v2357
      %v2366 = vadd.f32 %v2227, %v2358
      %s2367 = scalar_lea.vmem %s4, 128
      %v2368 = vld [vmem:[%s2367] sm:$0xff]
      %v2369 = vld [vmem:[%s2367 + $0x8] sm:$0xff]
      %v2370 = vld [vmem:[%s2367 + $0x10] sm:$0xff]
      %v2371 = vld [vmem:[%s2367 + $0x18] sm:$0xff]
      %v2373 = vsel %vm1863, %v2368, 0
      %v2376 = vsel %vm1863, %v2369, 0
      %v2379 = vsel %vm1863, %v2370, 0
      %v2382 = vsel %vm1863, %v2371, 0
      %2384 = vmatpush.msra.mxu0 0.0
      %2385 = vmatpush.msra.mxu0 0.0
      %2386 = vmatpush.msra.mxu0 0.0
      %2387 = vmatpush.msra.mxu0 0.0
      %2388 = vmatpush.msra.mxu0 0.0
      %2389 = vmatpush.msra.mxu0 0.0
      %2390 = vmatpush.msra.mxu0 0.0
      %2391 = vmatpush.msra.mxu0 0.0
      %2392 = vmatpush.msra.mxu0 %v1809
      %2393 = vmatpush.msra.mxu0 %v1807
      %2394 = vmatpush.msra.mxu0 %v1805
      %2395 = vmatpush.msra.mxu0 %v1803
      %2396 = vmatpush.msra.mxu0 %v1801
      %2397 = vmatpush.msra.mxu0 %v1799
      %2398 = vmatpush.msra.mxu0 %v1797
      %2399 = vmatpush.msra.mxu0 %v1795
      %2400 = vmatmul.f32.gmra.mxu0 %v2373
      %v2401 = vpop.f32.mrf.mxu0
      %v2402 = vadd.f32 0.0, %v2401
      %2403 = vmatmul.f32.gmra.mxu0 %v2376
      %v2404 = vpop.f32.mrf.mxu0
      %v2405 = vadd.f32 0.0, %v2404
      %2406 = vmatmul.f32.gmra.mxu0 %v2379
      %v2407 = vpop.f32.mrf.mxu0
      %v2408 = vadd.f32 0.0, %v2407
      %2409 = vmatmul.f32.gmra.mxu0 %v2382
      %v2410 = vpop.f32.mrf.mxu0
      %v2411 = vadd.f32 0.0, %v2410
      %2412 = vdwg.mxu0
      %2413 = vmatpush.msra.mxu0 0.0
      %2414 = vmatpush.msra.mxu0 0.0
      %2415 = vmatpush.msra.mxu0 0.0
      %2416 = vmatpush.msra.mxu0 0.0
      %2417 = vmatpush.msra.mxu0 0.0
      %2418 = vmatpush.msra.mxu0 0.0
      %2419 = vmatpush.msra.mxu0 0.0
      %2420 = vmatpush.msra.mxu0 0.0
      %2421 = vmatpush.msra.mxu0 %v1810
      %2422 = vmatpush.msra.mxu0 %v1808
      %2423 = vmatpush.msra.mxu0 %v1806
      %2424 = vmatpush.msra.mxu0 %v1804
      %2425 = vmatpush.msra.mxu0 %v1802
      %2426 = vmatpush.msra.mxu0 %v1800
      %2427 = vmatpush.msra.mxu0 %v1798
      %2428 = vmatpush.msra.mxu0 %v1796
      %2429 = vmatmul.f32.gmra.mxu0 %v2373
      %v2430 = vpop.f32.mrf.mxu0
      %v2431 = vadd.f32 0.0, %v2430
      %2432 = vmatmul.f32.gmra.mxu0 %v2376
      %v2433 = vpop.f32.mrf.mxu0
      %v2434 = vadd.f32 0.0, %v2433
      %2435 = vmatmul.f32.gmra.mxu0 %v2379
      %v2436 = vpop.f32.mrf.mxu0
      %v2437 = vadd.f32 0.0, %v2436
      %2438 = vmatmul.f32.gmra.mxu0 %v2382
      %v2439 = vpop.f32.mrf.mxu0
      %v2440 = vadd.f32 0.0, %v2439
      %2441 = vdwg.mxu0
      %v2442 = vadd.f32 %v2359, %v2402
      %v2443 = vadd.f32 %v2360, %v2431
      %v2444 = vadd.f32 %v2361, %v2405
      %v2445 = vadd.f32 %v2362, %v2434
      %v2446 = vadd.f32 %v2363, %v2408
      %v2447 = vadd.f32 %v2364, %v2437
      %v2448 = vadd.f32 %v2365, %v2411
      %v2449 = vadd.f32 %v2366, %v2440
      %2450 = vrot.lane.b32.xlu0 %v1795, 127
      %v2451 = vpop.permute.xlu0 %2450
      %2452 = vrot.lane.b32.xlu0 %v1797, 127
      %v2453 = vpop.permute.xlu0 %2452
      %2454 = vrot.lane.b32.xlu0 %v1799, 127
      %v2455 = vpop.permute.xlu0 %2454
      %2456 = vrot.lane.b32.xlu0 %v1801, 127
      %v2457 = vpop.permute.xlu0 %2456
      %2458 = vrot.lane.b32.xlu0 %v1803, 127
      %v2459 = vpop.permute.xlu0 %2458
      %2460 = vrot.lane.b32.xlu0 %v1805, 127
      %v2461 = vpop.permute.xlu0 %2460
      %2462 = vrot.lane.b32.xlu0 %v1807, 127
      %v2463 = vpop.permute.xlu0 %2462
      %2464 = vrot.lane.b32.xlu0 %v1809, 127
      %v2465 = vpop.permute.xlu0 %2464
      %2466 = vrot.lane.b32.xlu0 %v1796, 127
      %v2467 = vpop.permute.xlu0 %2466
      %2468 = vrot.lane.b32.xlu0 %v1798, 127
      %v2469 = vpop.permute.xlu0 %2468
      %2470 = vrot.lane.b32.xlu0 %v1800, 127
      %v2471 = vpop.permute.xlu0 %2470
      %2472 = vrot.lane.b32.xlu0 %v1802, 127
      %v2473 = vpop.permute.xlu0 %2472
      %2474 = vrot.lane.b32.xlu0 %v1804, 127
      %v2475 = vpop.permute.xlu0 %2474
      %2476 = vrot.lane.b32.xlu0 %v1806, 127
      %v2477 = vpop.permute.xlu0 %2476
      %2478 = vrot.lane.b32.xlu0 %v1808, 127
      %v2479 = vpop.permute.xlu0 %2478
      %2480 = vrot.lane.b32.xlu0 %v1810, 127
      %v2481 = vpop.permute.xlu0 %2480
      %v2482 = vsel %vm1147, %v2451, %v2467
      %v2483 = vsel %vm1147, %v2453, %v2469
      %v2484 = vsel %vm1147, %v2455, %v2471
      %v2485 = vsel %vm1147, %v2457, %v2473
      %v2486 = vsel %vm1147, %v2459, %v2475
      %v2487 = vsel %vm1147, %v2461, %v2477
      %v2488 = vsel %vm1147, %v2463, %v2479
      %v2489 = vsel %vm1147, %v2465, %v2481
      %v2490 = vsel %vm1147, %v2467, %v2451
      %v2491 = vsel %vm1147, %v2469, %v2453
      %v2492 = vsel %vm1147, %v2471, %v2455
      %v2493 = vsel %vm1147, %v2473, %v2457
      %v2494 = vsel %vm1147, %v2475, %v2459
      %v2495 = vsel %vm1147, %v2477, %v2461
      %v2496 = vsel %vm1147, %v2479, %v2463
      %v2497 = vsel %vm1147, %v2481, %v2465
      %s2498 = scalar_lea.vmem %s4, 160
      %v2499 = vld [vmem:[%s2498] sm:$0xff]
      %v2500 = vld [vmem:[%s2498 + $0x8] sm:$0xff]
      %v2501 = vld [vmem:[%s2498 + $0x10] sm:$0xff]
      %v2502 = vld [vmem:[%s2498 + $0x18] sm:$0xff]
      %v2504 = vsel %vm1863, %v2499, 0
      %v2507 = vsel %vm1863, %v2500, 0
      %v2510 = vsel %vm1863, %v2501, 0
      %v2513 = vsel %vm1863, %v2502, 0
      %2515 = vmatpush.msra.mxu0 0.0
      %2516 = vmatpush.msra.mxu0 0.0
      %2517 = vmatpush.msra.mxu0 0.0
      %2518 = vmatpush.msra.mxu0 0.0
      %2519 = vmatpush.msra.mxu0 0.0
      %2520 = vmatpush.msra.mxu0 0.0
      %2521 = vmatpush.msra.mxu0 0.0
      %2522 = vmatpush.msra.mxu0 0.0
      %2523 = vmatpush.msra.mxu0 %v2489
      %2524 = vmatpush.msra.mxu0 %v2488
      %2525 = vmatpush.msra.mxu0 %v2487
      %2526 = vmatpush.msra.mxu0 %v2486
      %2527 = vmatpush.msra.mxu0 %v2485
      %2528 = vmatpush.msra.mxu0 %v2484
      %2529 = vmatpush.msra.mxu0 %v2483
      %2530 = vmatpush.msra.mxu0 %v2482
      %2531 = vmatmul.f32.gmra.mxu0 %v2504
      %v2532 = vpop.f32.mrf.mxu0
      %v2533 = vadd.f32 0.0, %v2532
      %2534 = vmatmul.f32.gmra.mxu0 %v2507
      %v2535 = vpop.f32.mrf.mxu0
      %v2536 = vadd.f32 0.0, %v2535
      %2537 = vmatmul.f32.gmra.mxu0 %v2510
      %v2538 = vpop.f32.mrf.mxu0
      %v2539 = vadd.f32 0.0, %v2538
      %2540 = vmatmul.f32.gmra.mxu0 %v2513
      %v2541 = vpop.f32.mrf.mxu0
      %v2542 = vadd.f32 0.0, %v2541
      %2543 = vdwg.mxu0
      %2544 = vmatpush.msra.mxu0 0.0
      %2545 = vmatpush.msra.mxu0 0.0
      %2546 = vmatpush.msra.mxu0 0.0
      %2547 = vmatpush.msra.mxu0 0.0
      %2548 = vmatpush.msra.mxu0 0.0
      %2549 = vmatpush.msra.mxu0 0.0
      %2550 = vmatpush.msra.mxu0 0.0
      %2551 = vmatpush.msra.mxu0 0.0
      %2552 = vmatpush.msra.mxu0 %v2497
      %2553 = vmatpush.msra.mxu0 %v2496
      %2554 = vmatpush.msra.mxu0 %v2495
      %2555 = vmatpush.msra.mxu0 %v2494
      %2556 = vmatpush.msra.mxu0 %v2493
      %2557 = vmatpush.msra.mxu0 %v2492
      %2558 = vmatpush.msra.mxu0 %v2491
      %2559 = vmatpush.msra.mxu0 %v2490
      %2560 = vmatmul.f32.gmra.mxu0 %v2504
      %v2561 = vpop.f32.mrf.mxu0
      %v2562 = vadd.f32 0.0, %v2561
      %2563 = vmatmul.f32.gmra.mxu0 %v2507
      %v2564 = vpop.f32.mrf.mxu0
      %v2565 = vadd.f32 0.0, %v2564
      %2566 = vmatmul.f32.gmra.mxu0 %v2510
      %v2567 = vpop.f32.mrf.mxu0
      %v2568 = vadd.f32 0.0, %v2567
      %2569 = vmatmul.f32.gmra.mxu0 %v2513
      %v2570 = vpop.f32.mrf.mxu0
      %v2571 = vadd.f32 0.0, %v2570
      %2572 = vdwg.mxu0
      %v2573 = vmul.f32 %v2533, %v1160
      %v2574 = vmul.f32 %v2562, %v1161
      %v2575 = vmul.f32 %v2536, %v1160
      %v2576 = vmul.f32 %v2565, %v1161
      %v2577 = vmul.f32 %v2539, %v1160
      %v2578 = vmul.f32 %v2568, %v1161
      %v2579 = vmul.f32 %v2542, %v1160
      %v2580 = vmul.f32 %v2571, %v1161
      %v2581 = vadd.f32 %v2442, %v2573
      %v2582 = vadd.f32 %v2443, %v2574
      %v2583 = vadd.f32 %v2444, %v2575
      %v2584 = vadd.f32 %v2445, %v2576
      %v2585 = vadd.f32 %v2446, %v2577
      %v2586 = vadd.f32 %v2447, %v2578
      %v2587 = vadd.f32 %v2448, %v2579
      %v2588 = vadd.f32 %v2449, %v2580
      %2589 = vrot.lane.b32.xlu0 %v1795, 113
      %v2590 = vpop.permute.xlu0 %2589
      %2591 = vrot.lane.b32.xlu0 %v1797, 113
      %v2592 = vpop.permute.xlu0 %2591
      %2593 = vrot.lane.b32.xlu0 %v1799, 113
      %v2594 = vpop.permute.xlu0 %2593
      %2595 = vrot.lane.b32.xlu0 %v1801, 113
      %v2596 = vpop.permute.xlu0 %2595
      %2597 = vrot.lane.b32.xlu0 %v1803, 113
      %v2598 = vpop.permute.xlu0 %2597
      %2599 = vrot.lane.b32.xlu0 %v1805, 113
      %v2600 = vpop.permute.xlu0 %2599
      %2601 = vrot.lane.b32.xlu0 %v1807, 113
      %v2602 = vpop.permute.xlu0 %2601
      %2603 = vrot.lane.b32.xlu0 %v1809, 113
      %v2604 = vpop.permute.xlu0 %2603
      %2605 = vrot.lane.b32.xlu0 %v1796, 113
      %v2606 = vpop.permute.xlu0 %2605
      %2607 = vrot.lane.b32.xlu0 %v1798, 113
      %v2608 = vpop.permute.xlu0 %2607
      %2609 = vrot.lane.b32.xlu0 %v1800, 113
      %v2610 = vpop.permute.xlu0 %2609
      %2611 = vrot.lane.b32.xlu0 %v1802, 113
      %v2612 = vpop.permute.xlu0 %2611
      %2613 = vrot.lane.b32.xlu0 %v1804, 113
      %v2614 = vpop.permute.xlu0 %2613
      %2615 = vrot.lane.b32.xlu0 %v1806, 113
      %v2616 = vpop.permute.xlu0 %2615
      %2617 = vrot.lane.b32.xlu0 %v1808, 113
      %v2618 = vpop.permute.xlu0 %2617
      %2619 = vrot.lane.b32.xlu0 %v1810, 113
      %v2620 = vpop.permute.xlu0 %2619
      %v2621 = vsel %vm1298, %v2590, %v2606
      %v2622 = vsel %vm1298, %v2592, %v2608
      %v2623 = vsel %vm1298, %v2594, %v2610
      %v2624 = vsel %vm1298, %v2596, %v2612
      %v2625 = vsel %vm1298, %v2598, %v2614
      %v2626 = vsel %vm1298, %v2600, %v2616
      %v2627 = vsel %vm1298, %v2602, %v2618
      %v2628 = vsel %vm1298, %v2604, %v2620
      %v2629 = vsel %vm1298, %v2606, %v2590
      %v2630 = vsel %vm1298, %v2608, %v2592
      %v2631 = vsel %vm1298, %v2610, %v2594
      %v2632 = vsel %vm1298, %v2612, %v2596
      %v2633 = vsel %vm1298, %v2614, %v2598
      %v2634 = vsel %vm1298, %v2616, %v2600
      %v2635 = vsel %vm1298, %v2618, %v2602
      %v2636 = vsel %vm1298, %v2620, %v2604
      %s2637 = scalar_lea.vmem %s4, 192
      %v2638 = vld [vmem:[%s2637] sm:$0xff]
      %v2639 = vld [vmem:[%s2637 + $0x8] sm:$0xff]
      %v2640 = vld [vmem:[%s2637 + $0x10] sm:$0xff]
      %v2641 = vld [vmem:[%s2637 + $0x18] sm:$0xff]
      %v2643 = vsel %vm1863, %v2638, 0
      %v2646 = vsel %vm1863, %v2639, 0
      %v2649 = vsel %vm1863, %v2640, 0
      %v2652 = vsel %vm1863, %v2641, 0
      %2654 = vmatpush.msra.mxu0 0.0
      %2655 = vmatpush.msra.mxu0 0.0
      %2656 = vmatpush.msra.mxu0 0.0
      %2657 = vmatpush.msra.mxu0 0.0
      %2658 = vmatpush.msra.mxu0 0.0
      %2659 = vmatpush.msra.mxu0 0.0
      %2660 = vmatpush.msra.mxu0 0.0
      %2661 = vmatpush.msra.mxu0 0.0
      %2662 = vmatpush.msra.mxu0 %v2628
      %2663 = vmatpush.msra.mxu0 %v2627
      %2664 = vmatpush.msra.mxu0 %v2626
      %2665 = vmatpush.msra.mxu0 %v2625
      %2666 = vmatpush.msra.mxu0 %v2624
      %2667 = vmatpush.msra.mxu0 %v2623
      %2668 = vmatpush.msra.mxu0 %v2622
      %2669 = vmatpush.msra.mxu0 %v2621
      %2670 = vmatmul.f32.gmra.mxu0 %v2643
      %v2671 = vpop.f32.mrf.mxu0
      %v2672 = vadd.f32 0.0, %v2671
      %2673 = vmatmul.f32.gmra.mxu0 %v2646
      %v2674 = vpop.f32.mrf.mxu0
      %v2675 = vadd.f32 0.0, %v2674
      %2676 = vmatmul.f32.gmra.mxu0 %v2649
      %v2677 = vpop.f32.mrf.mxu0
      %v2678 = vadd.f32 0.0, %v2677
      %2679 = vmatmul.f32.gmra.mxu0 %v2652
      %v2680 = vpop.f32.mrf.mxu0
      %v2681 = vadd.f32 0.0, %v2680
      %2682 = vdwg.mxu0
      %2683 = vmatpush.msra.mxu0 0.0
      %2684 = vmatpush.msra.mxu0 0.0
      %2685 = vmatpush.msra.mxu0 0.0
      %2686 = vmatpush.msra.mxu0 0.0
      %2687 = vmatpush.msra.mxu0 0.0
      %2688 = vmatpush.msra.mxu0 0.0
      %2689 = vmatpush.msra.mxu0 0.0
      %2690 = vmatpush.msra.mxu0 0.0
      %2691 = vmatpush.msra.mxu0 %v2636
      %2692 = vmatpush.msra.mxu0 %v2635
      %2693 = vmatpush.msra.mxu0 %v2634
      %2694 = vmatpush.msra.mxu0 %v2633
      %2695 = vmatpush.msra.mxu0 %v2632
      %2696 = vmatpush.msra.mxu0 %v2631
      %2697 = vmatpush.msra.mxu0 %v2630
      %2698 = vmatpush.msra.mxu0 %v2629
      %2699 = vmatmul.f32.gmra.mxu0 %v2643
      %v2700 = vpop.f32.mrf.mxu0
      %v2701 = vadd.f32 0.0, %v2700
      %2702 = vmatmul.f32.gmra.mxu0 %v2646
      %v2703 = vpop.f32.mrf.mxu0
      %v2704 = vadd.f32 0.0, %v2703
      %2705 = vmatmul.f32.gmra.mxu0 %v2649
      %v2706 = vpop.f32.mrf.mxu0
      %v2707 = vadd.f32 0.0, %v2706
      %2708 = vmatmul.f32.gmra.mxu0 %v2652
      %v2709 = vpop.f32.mrf.mxu0
      %v2710 = vadd.f32 0.0, %v2709
      %2711 = vdwg.mxu0
      %v2712 = vmul.f32 %v2672, %v1311
      %v2713 = vmul.f32 %v2701, %v1312
      %v2714 = vmul.f32 %v2675, %v1311
      %v2715 = vmul.f32 %v2704, %v1312
      %v2716 = vmul.f32 %v2678, %v1311
      %v2717 = vmul.f32 %v2707, %v1312
      %v2718 = vmul.f32 %v2681, %v1311
      %v2719 = vmul.f32 %v2710, %v1312
      %v2720 = vadd.f32 %v2581, %v2712
      %v2721 = vadd.f32 %v2582, %v2713
      %v2722 = vadd.f32 %v2583, %v2714
      %v2723 = vadd.f32 %v2584, %v2715
      %v2724 = vadd.f32 %v2585, %v2716
      %v2725 = vadd.f32 %v2586, %v2717
      %v2726 = vadd.f32 %v2587, %v2718
      %v2727 = vadd.f32 %v2588, %v2719
      %2728 = vrot.lane.b32.xlu0 %v1795, 112
      %v2729 = vpop.permute.xlu0 %2728
      %2730 = vrot.lane.b32.xlu0 %v1797, 112
      %v2731 = vpop.permute.xlu0 %2730
      %2732 = vrot.lane.b32.xlu0 %v1799, 112
      %v2733 = vpop.permute.xlu0 %2732
      %2734 = vrot.lane.b32.xlu0 %v1801, 112
      %v2735 = vpop.permute.xlu0 %2734
      %2736 = vrot.lane.b32.xlu0 %v1803, 112
      %v2737 = vpop.permute.xlu0 %2736
      %2738 = vrot.lane.b32.xlu0 %v1805, 112
      %v2739 = vpop.permute.xlu0 %2738
      %2740 = vrot.lane.b32.xlu0 %v1807, 112
      %v2741 = vpop.permute.xlu0 %2740
      %2742 = vrot.lane.b32.xlu0 %v1809, 112
      %v2743 = vpop.permute.xlu0 %2742
      %2744 = vrot.lane.b32.xlu0 %v1796, 112
      %v2745 = vpop.permute.xlu0 %2744
      %2746 = vrot.lane.b32.xlu0 %v1798, 112
      %v2747 = vpop.permute.xlu0 %2746
      %2748 = vrot.lane.b32.xlu0 %v1800, 112
      %v2749 = vpop.permute.xlu0 %2748
      %2750 = vrot.lane.b32.xlu0 %v1802, 112
      %v2751 = vpop.permute.xlu0 %2750
      %2752 = vrot.lane.b32.xlu0 %v1804, 112
      %v2753 = vpop.permute.xlu0 %2752
      %2754 = vrot.lane.b32.xlu0 %v1806, 112
      %v2755 = vpop.permute.xlu0 %2754
      %2756 = vrot.lane.b32.xlu0 %v1808, 112
      %v2757 = vpop.permute.xlu0 %2756
      %2758 = vrot.lane.b32.xlu0 %v1810, 112
      %v2759 = vpop.permute.xlu0 %2758
      %v2760 = vsel %vm1449, %v2729, %v2745
      %v2761 = vsel %vm1449, %v2731, %v2747
      %v2762 = vsel %vm1449, %v2733, %v2749
      %v2763 = vsel %vm1449, %v2735, %v2751
      %v2764 = vsel %vm1449, %v2737, %v2753
      %v2765 = vsel %vm1449, %v2739, %v2755
      %v2766 = vsel %vm1449, %v2741, %v2757
      %v2767 = vsel %vm1449, %v2743, %v2759
      %v2768 = vsel %vm1449, %v2745, %v2729
      %v2769 = vsel %vm1449, %v2747, %v2731
      %v2770 = vsel %vm1449, %v2749, %v2733
      %v2771 = vsel %vm1449, %v2751, %v2735
      %v2772 = vsel %vm1449, %v2753, %v2737
      %v2773 = vsel %vm1449, %v2755, %v2739
      %v2774 = vsel %vm1449, %v2757, %v2741
      %v2775 = vsel %vm1449, %v2759, %v2743
      %s2776 = scalar_lea.vmem %s4, 224
      %v2777 = vld [vmem:[%s2776] sm:$0xff]
      %v2778 = vld [vmem:[%s2776 + $0x8] sm:$0xff]
      %v2779 = vld [vmem:[%s2776 + $0x10] sm:$0xff]
      %v2780 = vld [vmem:[%s2776 + $0x18] sm:$0xff]
      %v2782 = vsel %vm1863, %v2777, 0
      %v2785 = vsel %vm1863, %v2778, 0
      %v2788 = vsel %vm1863, %v2779, 0
      %v2791 = vsel %vm1863, %v2780, 0
      %2793 = vmatpush.msra.mxu0 0.0
      %2794 = vmatpush.msra.mxu0 0.0
      %2795 = vmatpush.msra.mxu0 0.0
      %2796 = vmatpush.msra.mxu0 0.0
      %2797 = vmatpush.msra.mxu0 0.0
      %2798 = vmatpush.msra.mxu0 0.0
      %2799 = vmatpush.msra.mxu0 0.0
      %2800 = vmatpush.msra.mxu0 0.0
      %2801 = vmatpush.msra.mxu0 %v2767
      %2802 = vmatpush.msra.mxu0 %v2766
      %2803 = vmatpush.msra.mxu0 %v2765
      %2804 = vmatpush.msra.mxu0 %v2764
      %2805 = vmatpush.msra.mxu0 %v2763
      %2806 = vmatpush.msra.mxu0 %v2762
      %2807 = vmatpush.msra.mxu0 %v2761
      %2808 = vmatpush.msra.mxu0 %v2760
      %2809 = vmatmul.f32.gmra.mxu0 %v2782
      %v2810 = vpop.f32.mrf.mxu0
      %v2811 = vadd.f32 0.0, %v2810
      %2812 = vmatmul.f32.gmra.mxu0 %v2785
      %v2813 = vpop.f32.mrf.mxu0
      %v2814 = vadd.f32 0.0, %v2813
      %2815 = vmatmul.f32.gmra.mxu0 %v2788
      %v2816 = vpop.f32.mrf.mxu0
      %v2817 = vadd.f32 0.0, %v2816
      %2818 = vmatmul.f32.gmra.mxu0 %v2791
      %v2819 = vpop.f32.mrf.mxu0
      %v2820 = vadd.f32 0.0, %v2819
      %2821 = vdwg.mxu0
      %2822 = vmatpush.msra.mxu0 0.0
      %2823 = vmatpush.msra.mxu0 0.0
      %2824 = vmatpush.msra.mxu0 0.0
      %2825 = vmatpush.msra.mxu0 0.0
      %2826 = vmatpush.msra.mxu0 0.0
      %2827 = vmatpush.msra.mxu0 0.0
      %2828 = vmatpush.msra.mxu0 0.0
      %2829 = vmatpush.msra.mxu0 0.0
      %2830 = vmatpush.msra.mxu0 %v2775
      %2831 = vmatpush.msra.mxu0 %v2774
      %2832 = vmatpush.msra.mxu0 %v2773
      %2833 = vmatpush.msra.mxu0 %v2772
      %2834 = vmatpush.msra.mxu0 %v2771
      %2835 = vmatpush.msra.mxu0 %v2770
      %2836 = vmatpush.msra.mxu0 %v2769
      %2837 = vmatpush.msra.mxu0 %v2768
      %2838 = vmatmul.f32.gmra.mxu0 %v2782
      %v2839 = vpop.f32.mrf.mxu0
      %v2840 = vadd.f32 0.0, %v2839
      %2841 = vmatmul.f32.gmra.mxu0 %v2785
      %v2842 = vpop.f32.mrf.mxu0
      %v2843 = vadd.f32 0.0, %v2842
      %2844 = vmatmul.f32.gmra.mxu0 %v2788
      %v2845 = vpop.f32.mrf.mxu0
      %v2846 = vadd.f32 0.0, %v2845
      %2847 = vmatmul.f32.gmra.mxu0 %v2791
      %v2848 = vpop.f32.mrf.mxu0
      %v2849 = vadd.f32 0.0, %v2848
      %2850 = vdwg.mxu0
      %v2851 = vmul.f32 %v2811, %v1462
      %v2852 = vmul.f32 %v2840, %v1463
      %v2853 = vmul.f32 %v2814, %v1462
      %v2854 = vmul.f32 %v2843, %v1463
      %v2855 = vmul.f32 %v2817, %v1462
      %v2856 = vmul.f32 %v2846, %v1463
      %v2857 = vmul.f32 %v2820, %v1462
      %v2858 = vmul.f32 %v2849, %v1463
      %v2859 = vadd.f32 %v2720, %v2851
      %v2860 = vadd.f32 %v2721, %v2852
      %v2861 = vadd.f32 %v2722, %v2853
      %v2862 = vadd.f32 %v2723, %v2854
      %v2863 = vadd.f32 %v2724, %v2855
      %v2864 = vadd.f32 %v2725, %v2856
      %v2865 = vadd.f32 %v2726, %v2857
      %v2866 = vadd.f32 %v2727, %v2858
      %2867 = vrot.lane.b32.xlu0 %v1795, 111
      %v2868 = vpop.permute.xlu0 %2867
      %2869 = vrot.lane.b32.xlu0 %v1797, 111
      %v2870 = vpop.permute.xlu0 %2869
      %2871 = vrot.lane.b32.xlu0 %v1799, 111
      %v2872 = vpop.permute.xlu0 %2871
      %2873 = vrot.lane.b32.xlu0 %v1801, 111
      %v2874 = vpop.permute.xlu0 %2873
      %2875 = vrot.lane.b32.xlu0 %v1803, 111
      %v2876 = vpop.permute.xlu0 %2875
      %2877 = vrot.lane.b32.xlu0 %v1805, 111
      %v2878 = vpop.permute.xlu0 %2877
      %2879 = vrot.lane.b32.xlu0 %v1807, 111
      %v2880 = vpop.permute.xlu0 %2879
      %2881 = vrot.lane.b32.xlu0 %v1809, 111
      %v2882 = vpop.permute.xlu0 %2881
      %2883 = vrot.lane.b32.xlu0 %v1796, 111
      %v2884 = vpop.permute.xlu0 %2883
      %2885 = vrot.lane.b32.xlu0 %v1798, 111
      %v2886 = vpop.permute.xlu0 %2885
      %2887 = vrot.lane.b32.xlu0 %v1800, 111
      %v2888 = vpop.permute.xlu0 %2887
      %2889 = vrot.lane.b32.xlu0 %v1802, 111
      %v2890 = vpop.permute.xlu0 %2889
      %2891 = vrot.lane.b32.xlu0 %v1804, 111
      %v2892 = vpop.permute.xlu0 %2891
      %2893 = vrot.lane.b32.xlu0 %v1806, 111
      %v2894 = vpop.permute.xlu0 %2893
      %2895 = vrot.lane.b32.xlu0 %v1808, 111
      %v2896 = vpop.permute.xlu0 %2895
      %2897 = vrot.lane.b32.xlu0 %v1810, 111
      %v2898 = vpop.permute.xlu0 %2897
      %v2899 = vsel %vm1600, %v2868, %v2884
      %v2900 = vsel %vm1600, %v2870, %v2886
      %v2901 = vsel %vm1600, %v2872, %v2888
      %v2902 = vsel %vm1600, %v2874, %v2890
      %v2903 = vsel %vm1600, %v2876, %v2892
      %v2904 = vsel %vm1600, %v2878, %v2894
      %v2905 = vsel %vm1600, %v2880, %v2896
      %v2906 = vsel %vm1600, %v2882, %v2898
      %v2907 = vsel %vm1600, %v2884, %v2868
      %v2908 = vsel %vm1600, %v2886, %v2870
      %v2909 = vsel %vm1600, %v2888, %v2872
      %v2910 = vsel %vm1600, %v2890, %v2874
      %v2911 = vsel %vm1600, %v2892, %v2876
      %v2912 = vsel %vm1600, %v2894, %v2878
      %v2913 = vsel %vm1600, %v2896, %v2880
      %v2914 = vsel %vm1600, %v2898, %v2882
      %s2915 = scalar_lea.vmem %s4, 256
      %v2916 = vld [vmem:[%s2915] sm:$0xff]
      %v2917 = vld [vmem:[%s2915 + $0x8] sm:$0xff]
      %v2918 = vld [vmem:[%s2915 + $0x10] sm:$0xff]
      %v2919 = vld [vmem:[%s2915 + $0x18] sm:$0xff]
      %v2921 = vsel %vm1863, %v2916, 0
      %v2924 = vsel %vm1863, %v2917, 0
      %v2927 = vsel %vm1863, %v2918, 0
      %v2930 = vsel %vm1863, %v2919, 0
      %2932 = vmatpush.msra.mxu0 0.0
      %2933 = vmatpush.msra.mxu0 0.0
      %2934 = vmatpush.msra.mxu0 0.0
      %2935 = vmatpush.msra.mxu0 0.0
      %2936 = vmatpush.msra.mxu0 0.0
      %2937 = vmatpush.msra.mxu0 0.0
      %2938 = vmatpush.msra.mxu0 0.0
      %2939 = vmatpush.msra.mxu0 0.0
      %2940 = vmatpush.msra.mxu0 %v2906
      %2941 = vmatpush.msra.mxu0 %v2905
      %2942 = vmatpush.msra.mxu0 %v2904
      %2943 = vmatpush.msra.mxu0 %v2903
      %2944 = vmatpush.msra.mxu0 %v2902
      %2945 = vmatpush.msra.mxu0 %v2901
      %2946 = vmatpush.msra.mxu0 %v2900
      %2947 = vmatpush.msra.mxu0 %v2899
      %2948 = vmatmul.f32.gmra.mxu0 %v2921
      %v2949 = vpop.f32.mrf.mxu0
      %v2950 = vadd.f32 0.0, %v2949
      %2951 = vmatmul.f32.gmra.mxu0 %v2924
      %v2952 = vpop.f32.mrf.mxu0
      %v2953 = vadd.f32 0.0, %v2952
      %2954 = vmatmul.f32.gmra.mxu0 %v2927
      %v2955 = vpop.f32.mrf.mxu0
      %v2956 = vadd.f32 0.0, %v2955
      %2957 = vmatmul.f32.gmra.mxu0 %v2930
      %v2958 = vpop.f32.mrf.mxu0
      %v2959 = vadd.f32 0.0, %v2958
      %2960 = vdwg.mxu0
      %2961 = vmatpush.msra.mxu0 0.0
      %2962 = vmatpush.msra.mxu0 0.0
      %2963 = vmatpush.msra.mxu0 0.0
      %2964 = vmatpush.msra.mxu0 0.0
      %2965 = vmatpush.msra.mxu0 0.0
      %2966 = vmatpush.msra.mxu0 0.0
      %2967 = vmatpush.msra.mxu0 0.0
      %2968 = vmatpush.msra.mxu0 0.0
      %2969 = vmatpush.msra.mxu0 %v2914
      %2970 = vmatpush.msra.mxu0 %v2913
      %2971 = vmatpush.msra.mxu0 %v2912
      %2972 = vmatpush.msra.mxu0 %v2911
      %2973 = vmatpush.msra.mxu0 %v2910
      %2974 = vmatpush.msra.mxu0 %v2909
      %2975 = vmatpush.msra.mxu0 %v2908
      %2976 = vmatpush.msra.mxu0 %v2907
      %2977 = vmatmul.f32.gmra.mxu0 %v2921
      %v2978 = vpop.f32.mrf.mxu0
      %v2979 = vadd.f32 0.0, %v2978
      %2980 = vmatmul.f32.gmra.mxu0 %v2924
      %v2981 = vpop.f32.mrf.mxu0
      %v2982 = vadd.f32 0.0, %v2981
      %2983 = vmatmul.f32.gmra.mxu0 %v2927
      %v2984 = vpop.f32.mrf.mxu0
      %v2985 = vadd.f32 0.0, %v2984
      %2986 = vmatmul.f32.gmra.mxu0 %v2930
      %v2987 = vpop.f32.mrf.mxu0
      %v2988 = vadd.f32 0.0, %v2987
      %2989 = vdwg.mxu0
      %v2990 = vmul.f32 %v2950, %v1613
      %v2991 = vmul.f32 %v2979, %v1614
      %v2992 = vmul.f32 %v2953, %v1613
      %v2993 = vmul.f32 %v2982, %v1614
      %v2994 = vmul.f32 %v2956, %v1613
      %v2995 = vmul.f32 %v2985, %v1614
      %v2996 = vmul.f32 %v2959, %v1613
      %v2997 = vmul.f32 %v2988, %v1614
      %v2998 = vadd.f32 %v2859, %v2990
      %v2999 = vadd.f32 %v2860, %v2991
      %v3000 = vadd.f32 %v2861, %v2992
      %v3001 = vadd.f32 %v2862, %v2993
      %v3002 = vadd.f32 %v2863, %v2994
      %v3003 = vadd.f32 %v2864, %v2995
      %v3004 = vadd.f32 %v2865, %v2996
      %v3005 = vadd.f32 %v2866, %v2997
      %v3006 = vld [vmem:[%s5] sm:$0xff]
      %v3007 = vld [vmem:[%s5 + $0x8] sm:$0xff]
      %v3008 = vld [vmem:[%s5 + $0x10] sm:$0xff]
      %v3009 = vld [vmem:[%s5 + $0x18] sm:$0xff]
      %3011 = vset.pattern.permute.xlu0 0
      %3012 = vperm.xlu0 %3011, %v3006
      %v3013 = vpop.permute.xlu0 %3012
      %3016 = vset.pattern.permute.xlu0 0
      %3017 = vperm.xlu0 %3016, %v3007
      %v3018 = vpop.permute.xlu0 %3017
      %3021 = vset.pattern.permute.xlu0 0
      %3022 = vperm.xlu0 %3021, %v3008
      %v3023 = vpop.permute.xlu0 %3022
      %3026 = vset.pattern.permute.xlu0 0
      %3027 = vperm.xlu0 %3026, %v3009
      %v3028 = vpop.permute.xlu0 %3027
      %v3030 = vadd.f32 %v2998, %v3013
      %v3031 = vadd.f32 %v2999, %v3013
      %v3032 = vadd.f32 %v3000, %v3018
      %v3033 = vadd.f32 %v3001, %v3018
      %v3034 = vadd.f32 %v3002, %v3023
      %v3035 = vadd.f32 %v3003, %v3023
      %v3036 = vadd.f32 %v3004, %v3028
      %v3037 = vadd.f32 %v3005, %v3028
      %v3038 = vmul.f32 %v3030, 0.05
      %v3039 = vmul.f32 %v3031, 0.05
      %v3040 = vmul.f32 %v3032, 0.05
      %v3041 = vmul.f32 %v3033, 0.05
      %v3042 = vmul.f32 %v3034, 0.05
      %v3043 = vmul.f32 %v3035, 0.05
      %v3044 = vmul.f32 %v3036, 0.05
      %v3045 = vmul.f32 %v3037, 0.05
      %v3046 = vmax.f32 %v3030, %v3038
      %v3047 = vmax.f32 %v3031, %v3039
      %v3048 = vmax.f32 %v3032, %v3040
      %v3049 = vmax.f32 %v3033, %v3041
      %v3050 = vmax.f32 %v3034, %v3042
      %v3051 = vmax.f32 %v3035, %v3043
      %v3052 = vmax.f32 %v3036, %v3044
      %v3053 = vmax.f32 %v3037, %v3045
      %3054 = vrot.lane.b32.xlu0 %v3046, 17
      %v3055 = vpop.permute.xlu0 %3054
      %3056 = vrot.lane.b32.xlu0 %v3048, 17
      %v3057 = vpop.permute.xlu0 %3056
      %3058 = vrot.lane.b32.xlu0 %v3050, 17
      %v3059 = vpop.permute.xlu0 %3058
      %3060 = vrot.lane.b32.xlu0 %v3052, 17
      %v3061 = vpop.permute.xlu0 %3060
      %3062 = vrot.lane.b32.xlu0 %v3047, 17
      %v3063 = vpop.permute.xlu0 %3062
      %3064 = vrot.lane.b32.xlu0 %v3049, 17
      %v3065 = vpop.permute.xlu0 %3064
      %3066 = vrot.lane.b32.xlu0 %v3051, 17
      %v3067 = vpop.permute.xlu0 %3066
      %3068 = vrot.lane.b32.xlu0 %v3053, 17
      %v3069 = vpop.permute.xlu0 %3068
      %v3070 = vsel %vm437, %v3055, %v3063
      %v3071 = vsel %vm437, %v3057, %v3065
      %v3072 = vsel %vm437, %v3059, %v3067
      %v3073 = vsel %vm437, %v3061, %v3069
      %v3074 = vsel %vm437, %v3063, %v3055
      %v3075 = vsel %vm437, %v3065, %v3057
      %v3076 = vsel %vm437, %v3067, %v3059
      %v3077 = vsel %vm437, %v3069, %v3061
      %v3078 = vld [vmem:[%s6] sm:$0xff]
      %v3079 = vld [vmem:[%s6 + $0x8] sm:$0xff]
      %vm3080 = vcmask 261120
      %v3082 = vsel %vm3080, %v3078, 0
      %v3085 = vsel %vm3080, %v3079, 0
      %3087 = vmatpush.msra.mxu0 0.0
      %3088 = vmatpush.msra.mxu0 0.0
      %3089 = vmatpush.msra.mxu0 0.0
      %3090 = vmatpush.msra.mxu0 0.0
      %3091 = vmatpush.msra.mxu0 0.0
      %3092 = vmatpush.msra.mxu0 0.0
      %3093 = vmatpush.msra.mxu0 0.0
      %3094 = vmatpush.msra.mxu0 0.0
      %3095 = vmatpush.msra.mxu0 0.0
      %3096 = vmatpush.msra.mxu0 0.0
      %3097 = vmatpush.msra.mxu0 0.0
      %3098 = vmatpush.msra.mxu0 0.0
      %3099 = vmatpush.msra.mxu0 %v3077
      %3100 = vmatpush.msra.mxu0 %v3076
      %3101 = vmatpush.msra.mxu0 %v3075
      %3102 = vmatpush.msra.mxu0 %v3074
      %3103 = vmatmul.f32.gmra.mxu0 %v3082
      %v3104 = vpop.f32.mrf.mxu0
      %v3105 = vadd.f32 0.0, %v3104
      %3106 = vmatmul.f32.gmra.mxu0 %v3085
      %v3107 = vpop.f32.mrf.mxu0
      %v3108 = vadd.f32 0.0, %v3107
      %3109 = vdwg.mxu0
      %3110 = vmatpush.msra.mxu0 0.0
      %3111 = vmatpush.msra.mxu0 0.0
      %3112 = vmatpush.msra.mxu0 0.0
      %3113 = vmatpush.msra.mxu0 0.0
      %3114 = vmatpush.msra.mxu0 0.0
      %3115 = vmatpush.msra.mxu0 0.0
      %3116 = vmatpush.msra.mxu0 0.0
      %3117 = vmatpush.msra.mxu0 0.0
      %3118 = vmatpush.msra.mxu0 0.0
      %3119 = vmatpush.msra.mxu0 0.0
      %3120 = vmatpush.msra.mxu0 0.0
      %3121 = vmatpush.msra.mxu0 0.0
      %3122 = vmatpush.msra.mxu0 %v3073
      %3123 = vmatpush.msra.mxu0 %v3072
      %3124 = vmatpush.msra.mxu0 %v3071
      %3125 = vmatpush.msra.mxu0 %v3070
      %3126 = vmatmul.f32.gmra.mxu0 %v3082
      %v3127 = vpop.f32.mrf.mxu0
      %v3128 = vadd.f32 0.0, %v3127
      %3129 = vmatmul.f32.gmra.mxu0 %v3085
      %v3130 = vpop.f32.mrf.mxu0
      %v3131 = vadd.f32 0.0, %v3130
      %3132 = vdwg.mxu0
      %v3133 = vmul.f32 %v3105, %v449
      %v3134 = vmul.f32 %v3128, %v450
      %v3135 = vmul.f32 %v3108, %v449
      %v3136 = vmul.f32 %v3131, %v450
      %v3137 = vadd.f32 %v3133, 0.0
      %v3138 = vadd.f32 %v3134, 0.0
      %v3139 = vadd.f32 %v3135, 0.0
      %v3140 = vadd.f32 %v3136, 0.0
      %3141 = vrot.lane.b32.xlu0 %v3046, 16
      %v3142 = vpop.permute.xlu0 %3141
      %3143 = vrot.lane.b32.xlu0 %v3048, 16
      %v3144 = vpop.permute.xlu0 %3143
      %3145 = vrot.lane.b32.xlu0 %v3050, 16
      %v3146 = vpop.permute.xlu0 %3145
      %3147 = vrot.lane.b32.xlu0 %v3052, 16
      %v3148 = vpop.permute.xlu0 %3147
      %3149 = vrot.lane.b32.xlu0 %v3047, 16
      %v3150 = vpop.permute.xlu0 %3149
      %3151 = vrot.lane.b32.xlu0 %v3049, 16
      %v3152 = vpop.permute.xlu0 %3151
      %3153 = vrot.lane.b32.xlu0 %v3051, 16
      %v3154 = vpop.permute.xlu0 %3153
      %3155 = vrot.lane.b32.xlu0 %v3053, 16
      %v3156 = vpop.permute.xlu0 %3155
      %v3157 = vsel %vm459, %v3142, %v3150
      %v3158 = vsel %vm459, %v3144, %v3152
      %v3159 = vsel %vm459, %v3146, %v3154
      %v3160 = vsel %vm459, %v3148, %v3156
      %v3161 = vsel %vm459, %v3150, %v3142
      %v3162 = vsel %vm459, %v3152, %v3144
      %v3163 = vsel %vm459, %v3154, %v3146
      %v3164 = vsel %vm459, %v3156, %v3148
      %s3165 = scalar_lea.vmem %s6, 16
      %v3166 = vld [vmem:[%s3165] sm:$0xff]
      %v3167 = vld [vmem:[%s3165 + $0x8] sm:$0xff]
      %v3169 = vsel %vm3080, %v3166, 0
      %v3172 = vsel %vm3080, %v3167, 0
      %3174 = vmatpush.msra.mxu0 0.0
      %3175 = vmatpush.msra.mxu0 0.0
      %3176 = vmatpush.msra.mxu0 0.0
      %3177 = vmatpush.msra.mxu0 0.0
      %3178 = vmatpush.msra.mxu0 0.0
      %3179 = vmatpush.msra.mxu0 0.0
      %3180 = vmatpush.msra.mxu0 0.0
      %3181 = vmatpush.msra.mxu0 0.0
      %3182 = vmatpush.msra.mxu0 0.0
      %3183 = vmatpush.msra.mxu0 0.0
      %3184 = vmatpush.msra.mxu0 0.0
      %3185 = vmatpush.msra.mxu0 0.0
      %3186 = vmatpush.msra.mxu0 %v3164
      %3187 = vmatpush.msra.mxu0 %v3163
      %3188 = vmatpush.msra.mxu0 %v3162
      %3189 = vmatpush.msra.mxu0 %v3161
      %3190 = vmatmul.f32.gmra.mxu0 %v3169
      %v3191 = vpop.f32.mrf.mxu0
      %v3192 = vadd.f32 0.0, %v3191
      %3193 = vmatmul.f32.gmra.mxu0 %v3172
      %v3194 = vpop.f32.mrf.mxu0
      %v3195 = vadd.f32 0.0, %v3194
      %3196 = vdwg.mxu0
      %3197 = vmatpush.msra.mxu0 0.0
      %3198 = vmatpush.msra.mxu0 0.0
      %3199 = vmatpush.msra.mxu0 0.0
      %3200 = vmatpush.msra.mxu0 0.0
      %3201 = vmatpush.msra.mxu0 0.0
      %3202 = vmatpush.msra.mxu0 0.0
      %3203 = vmatpush.msra.mxu0 0.0
      %3204 = vmatpush.msra.mxu0 0.0
      %3205 = vmatpush.msra.mxu0 0.0
      %3206 = vmatpush.msra.mxu0 0.0
      %3207 = vmatpush.msra.mxu0 0.0
      %3208 = vmatpush.msra.mxu0 0.0
      %3209 = vmatpush.msra.mxu0 %v3160
      %3210 = vmatpush.msra.mxu0 %v3159
      %3211 = vmatpush.msra.mxu0 %v3158
      %3212 = vmatpush.msra.mxu0 %v3157
      %3213 = vmatmul.f32.gmra.mxu0 %v3169
      %v3214 = vpop.f32.mrf.mxu0
      %v3215 = vadd.f32 0.0, %v3214
      %3216 = vmatmul.f32.gmra.mxu0 %v3172
      %v3217 = vpop.f32.mrf.mxu0
      %v3218 = vadd.f32 0.0, %v3217
      %3219 = vdwg.mxu0
      %v3220 = vmul.f32 %v3192, %v472
      %v3221 = vmul.f32 %v3215, %v473
      %v3222 = vmul.f32 %v3195, %v472
      %v3223 = vmul.f32 %v3218, %v473
      %v3224 = vadd.f32 %v3137, %v3220
      %v3225 = vadd.f32 %v3138, %v3221
      %v3226 = vadd.f32 %v3139, %v3222
      %v3227 = vadd.f32 %v3140, %v3223
      %3228 = vrot.lane.b32.xlu0 %v3046, 15
      %v3229 = vpop.permute.xlu0 %3228
      %3230 = vrot.lane.b32.xlu0 %v3048, 15
      %v3231 = vpop.permute.xlu0 %3230
      %3232 = vrot.lane.b32.xlu0 %v3050, 15
      %v3233 = vpop.permute.xlu0 %3232
      %3234 = vrot.lane.b32.xlu0 %v3052, 15
      %v3235 = vpop.permute.xlu0 %3234
      %3236 = vrot.lane.b32.xlu0 %v3047, 15
      %v3237 = vpop.permute.xlu0 %3236
      %3238 = vrot.lane.b32.xlu0 %v3049, 15
      %v3239 = vpop.permute.xlu0 %3238
      %3240 = vrot.lane.b32.xlu0 %v3051, 15
      %v3241 = vpop.permute.xlu0 %3240
      %3242 = vrot.lane.b32.xlu0 %v3053, 15
      %v3243 = vpop.permute.xlu0 %3242
      %v3244 = vsel %vm708, %v3229, %v3237
      %v3245 = vsel %vm708, %v3231, %v3239
      %v3246 = vsel %vm708, %v3233, %v3241
      %v3247 = vsel %vm708, %v3235, %v3243
      %v3248 = vsel %vm708, %v3237, %v3229
      %v3249 = vsel %vm708, %v3239, %v3231
      %v3250 = vsel %vm708, %v3241, %v3233
      %v3251 = vsel %vm708, %v3243, %v3235
      %s3252 = scalar_lea.vmem %s6, 32
      %v3253 = vld [vmem:[%s3252] sm:$0xff]
      %v3254 = vld [vmem:[%s3252 + $0x8] sm:$0xff]
      %v3256 = vsel %vm3080, %v3253, 0
      %v3259 = vsel %vm3080, %v3254, 0
      %3261 = vmatpush.msra.mxu0 0.0
      %3262 = vmatpush.msra.mxu0 0.0
      %3263 = vmatpush.msra.mxu0 0.0
      %3264 = vmatpush.msra.mxu0 0.0
      %3265 = vmatpush.msra.mxu0 0.0
      %3266 = vmatpush.msra.mxu0 0.0
      %3267 = vmatpush.msra.mxu0 0.0
      %3268 = vmatpush.msra.mxu0 0.0
      %3269 = vmatpush.msra.mxu0 0.0
      %3270 = vmatpush.msra.mxu0 0.0
      %3271 = vmatpush.msra.mxu0 0.0
      %3272 = vmatpush.msra.mxu0 0.0
      %3273 = vmatpush.msra.mxu0 %v3251
      %3274 = vmatpush.msra.mxu0 %v3250
      %3275 = vmatpush.msra.mxu0 %v3249
      %3276 = vmatpush.msra.mxu0 %v3248
      %3277 = vmatmul.f32.gmra.mxu0 %v3256
      %v3278 = vpop.f32.mrf.mxu0
      %v3279 = vadd.f32 0.0, %v3278
      %3280 = vmatmul.f32.gmra.mxu0 %v3259
      %v3281 = vpop.f32.mrf.mxu0
      %v3282 = vadd.f32 0.0, %v3281
      %3283 = vdwg.mxu0
      %3284 = vmatpush.msra.mxu0 0.0
      %3285 = vmatpush.msra.mxu0 0.0
      %3286 = vmatpush.msra.mxu0 0.0
      %3287 = vmatpush.msra.mxu0 0.0
      %3288 = vmatpush.msra.mxu0 0.0
      %3289 = vmatpush.msra.mxu0 0.0
      %3290 = vmatpush.msra.mxu0 0.0
      %3291 = vmatpush.msra.mxu0 0.0
      %3292 = vmatpush.msra.mxu0 0.0
      %3293 = vmatpush.msra.mxu0 0.0
      %3294 = vmatpush.msra.mxu0 0.0
      %3295 = vmatpush.msra.mxu0 0.0
      %3296 = vmatpush.msra.mxu0 %v3247
      %3297 = vmatpush.msra.mxu0 %v3246
      %3298 = vmatpush.msra.mxu0 %v3245
      %3299 = vmatpush.msra.mxu0 %v3244
      %3300 = vmatmul.f32.gmra.mxu0 %v3256
      %v3301 = vpop.f32.mrf.mxu0
      %v3302 = vadd.f32 0.0, %v3301
      %3303 = vmatmul.f32.gmra.mxu0 %v3259
      %v3304 = vpop.f32.mrf.mxu0
      %v3305 = vadd.f32 0.0, %v3304
      %3306 = vdwg.mxu0
      %v3307 = vmul.f32 %v3279, %v721
      %v3308 = vmul.f32 %v3302, %v722
      %v3309 = vmul.f32 %v3282, %v721
      %v3310 = vmul.f32 %v3305, %v722
      %v3311 = vadd.f32 %v3224, %v3307
      %v3312 = vadd.f32 %v3225, %v3308
      %v3313 = vadd.f32 %v3226, %v3309
      %v3314 = vadd.f32 %v3227, %v3310
      %3315 = vrot.lane.b32.xlu0 %v3046, 1
      %v3316 = vpop.permute.xlu0 %3315
      %3317 = vrot.lane.b32.xlu0 %v3048, 1
      %v3318 = vpop.permute.xlu0 %3317
      %3319 = vrot.lane.b32.xlu0 %v3050, 1
      %v3320 = vpop.permute.xlu0 %3319
      %3321 = vrot.lane.b32.xlu0 %v3052, 1
      %v3322 = vpop.permute.xlu0 %3321
      %3323 = vrot.lane.b32.xlu0 %v3047, 1
      %v3324 = vpop.permute.xlu0 %3323
      %3325 = vrot.lane.b32.xlu0 %v3049, 1
      %v3326 = vpop.permute.xlu0 %3325
      %3327 = vrot.lane.b32.xlu0 %v3051, 1
      %v3328 = vpop.permute.xlu0 %3327
      %3329 = vrot.lane.b32.xlu0 %v3053, 1
      %v3330 = vpop.permute.xlu0 %3329
      %v3331 = vsel %vm859, %v3316, %v3324
      %v3332 = vsel %vm859, %v3318, %v3326
      %v3333 = vsel %vm859, %v3320, %v3328
      %v3334 = vsel %vm859, %v3322, %v3330
      %v3335 = vsel %vm859, %v3324, %v3316
      %v3336 = vsel %vm859, %v3326, %v3318
      %v3337 = vsel %vm859, %v3328, %v3320
      %v3338 = vsel %vm859, %v3330, %v3322
      %s3339 = scalar_lea.vmem %s6, 48
      %v3340 = vld [vmem:[%s3339] sm:$0xff]
      %v3341 = vld [vmem:[%s3339 + $0x8] sm:$0xff]
      %v3343 = vsel %vm3080, %v3340, 0
      %v3346 = vsel %vm3080, %v3341, 0
      %3348 = vmatpush.msra.mxu0 0.0
      %3349 = vmatpush.msra.mxu0 0.0
      %3350 = vmatpush.msra.mxu0 0.0
      %3351 = vmatpush.msra.mxu0 0.0
      %3352 = vmatpush.msra.mxu0 0.0
      %3353 = vmatpush.msra.mxu0 0.0
      %3354 = vmatpush.msra.mxu0 0.0
      %3355 = vmatpush.msra.mxu0 0.0
      %3356 = vmatpush.msra.mxu0 0.0
      %3357 = vmatpush.msra.mxu0 0.0
      %3358 = vmatpush.msra.mxu0 0.0
      %3359 = vmatpush.msra.mxu0 0.0
      %3360 = vmatpush.msra.mxu0 %v3338
      %3361 = vmatpush.msra.mxu0 %v3337
      %3362 = vmatpush.msra.mxu0 %v3336
      %3363 = vmatpush.msra.mxu0 %v3335
      %3364 = vmatmul.f32.gmra.mxu0 %v3343
      %v3365 = vpop.f32.mrf.mxu0
      %v3366 = vadd.f32 0.0, %v3365
      %3367 = vmatmul.f32.gmra.mxu0 %v3346
      %v3368 = vpop.f32.mrf.mxu0
      %v3369 = vadd.f32 0.0, %v3368
      %3370 = vdwg.mxu0
      %3371 = vmatpush.msra.mxu0 0.0
      %3372 = vmatpush.msra.mxu0 0.0
      %3373 = vmatpush.msra.mxu0 0.0
      %3374 = vmatpush.msra.mxu0 0.0
      %3375 = vmatpush.msra.mxu0 0.0
      %3376 = vmatpush.msra.mxu0 0.0
      %3377 = vmatpush.msra.mxu0 0.0
      %3378 = vmatpush.msra.mxu0 0.0
      %3379 = vmatpush.msra.mxu0 0.0
      %3380 = vmatpush.msra.mxu0 0.0
      %3381 = vmatpush.msra.mxu0 0.0
      %3382 = vmatpush.msra.mxu0 0.0
      %3383 = vmatpush.msra.mxu0 %v3334
      %3384 = vmatpush.msra.mxu0 %v3333
      %3385 = vmatpush.msra.mxu0 %v3332
      %3386 = vmatpush.msra.mxu0 %v3331
      %3387 = vmatmul.f32.gmra.mxu0 %v3343
      %v3388 = vpop.f32.mrf.mxu0
      %v3389 = vadd.f32 0.0, %v3388
      %3390 = vmatmul.f32.gmra.mxu0 %v3346
      %v3391 = vpop.f32.mrf.mxu0
      %v3392 = vadd.f32 0.0, %v3391
      %3393 = vdwg.mxu0
      %v3394 = vmul.f32 %v3366, %v872
      %v3395 = vmul.f32 %v3389, %v873
      %v3396 = vmul.f32 %v3369, %v872
      %v3397 = vmul.f32 %v3392, %v873
      %v3398 = vadd.f32 %v3311, %v3394
      %v3399 = vadd.f32 %v3312, %v3395
      %v3400 = vadd.f32 %v3313, %v3396
      %v3401 = vadd.f32 %v3314, %v3397
      %s3402 = scalar_lea.vmem %s6, 64
      %v3403 = vld [vmem:[%s3402] sm:$0xff]
      %v3404 = vld [vmem:[%s3402 + $0x8] sm:$0xff]
      %v3406 = vsel %vm3080, %v3403, 0
      %v3409 = vsel %vm3080, %v3404, 0
      %3411 = vmatpush.msra.mxu0 0.0
      %3412 = vmatpush.msra.mxu0 0.0
      %3413 = vmatpush.msra.mxu0 0.0
      %3414 = vmatpush.msra.mxu0 0.0
      %3415 = vmatpush.msra.mxu0 0.0
      %3416 = vmatpush.msra.mxu0 0.0
      %3417 = vmatpush.msra.mxu0 0.0
      %3418 = vmatpush.msra.mxu0 0.0
      %3419 = vmatpush.msra.mxu0 0.0
      %3420 = vmatpush.msra.mxu0 0.0
      %3421 = vmatpush.msra.mxu0 0.0
      %3422 = vmatpush.msra.mxu0 0.0
      %3423 = vmatpush.msra.mxu0 %v3052
      %3424 = vmatpush.msra.mxu0 %v3050
      %3425 = vmatpush.msra.mxu0 %v3048
      %3426 = vmatpush.msra.mxu0 %v3046
      %3427 = vmatmul.f32.gmra.mxu0 %v3406
      %v3428 = vpop.f32.mrf.mxu0
      %v3429 = vadd.f32 0.0, %v3428
      %3430 = vmatmul.f32.gmra.mxu0 %v3409
      %v3431 = vpop.f32.mrf.mxu0
      %v3432 = vadd.f32 0.0, %v3431
      %3433 = vdwg.mxu0
      %3434 = vmatpush.msra.mxu0 0.0
      %3435 = vmatpush.msra.mxu0 0.0
      %3436 = vmatpush.msra.mxu0 0.0
      %3437 = vmatpush.msra.mxu0 0.0
      %3438 = vmatpush.msra.mxu0 0.0
      %3439 = vmatpush.msra.mxu0 0.0
      %3440 = vmatpush.msra.mxu0 0.0
      %3441 = vmatpush.msra.mxu0 0.0
      %3442 = vmatpush.msra.mxu0 0.0
      %3443 = vmatpush.msra.mxu0 0.0
      %3444 = vmatpush.msra.mxu0 0.0
      %3445 = vmatpush.msra.mxu0 0.0
      %3446 = vmatpush.msra.mxu0 %v3053
      %3447 = vmatpush.msra.mxu0 %v3051
      %3448 = vmatpush.msra.mxu0 %v3049
      %3449 = vmatpush.msra.mxu0 %v3047
      %3450 = vmatmul.f32.gmra.mxu0 %v3406
      %v3451 = vpop.f32.mrf.mxu0
      %v3452 = vadd.f32 0.0, %v3451
      %3453 = vmatmul.f32.gmra.mxu0 %v3409
      %v3454 = vpop.f32.mrf.mxu0
      %v3455 = vadd.f32 0.0, %v3454
      %3456 = vdwg.mxu0
      %v3457 = vadd.f32 %v3398, %v3429
      %v3458 = vadd.f32 %v3399, %v3452
      %v3459 = vadd.f32 %v3400, %v3432
      %v3460 = vadd.f32 %v3401, %v3455
      %3461 = vrot.lane.b32.xlu0 %v3046, 127
      %v3462 = vpop.permute.xlu0 %3461
      %3463 = vrot.lane.b32.xlu0 %v3048, 127
      %v3464 = vpop.permute.xlu0 %3463
      %3465 = vrot.lane.b32.xlu0 %v3050, 127
      %v3466 = vpop.permute.xlu0 %3465
      %3467 = vrot.lane.b32.xlu0 %v3052, 127
      %v3468 = vpop.permute.xlu0 %3467
      %3469 = vrot.lane.b32.xlu0 %v3047, 127
      %v3470 = vpop.permute.xlu0 %3469
      %3471 = vrot.lane.b32.xlu0 %v3049, 127
      %v3472 = vpop.permute.xlu0 %3471
      %3473 = vrot.lane.b32.xlu0 %v3051, 127
      %v3474 = vpop.permute.xlu0 %3473
      %3475 = vrot.lane.b32.xlu0 %v3053, 127
      %v3476 = vpop.permute.xlu0 %3475
      %v3477 = vsel %vm1147, %v3462, %v3470
      %v3478 = vsel %vm1147, %v3464, %v3472
      %v3479 = vsel %vm1147, %v3466, %v3474
      %v3480 = vsel %vm1147, %v3468, %v3476
      %v3481 = vsel %vm1147, %v3470, %v3462
      %v3482 = vsel %vm1147, %v3472, %v3464
      %v3483 = vsel %vm1147, %v3474, %v3466
      %v3484 = vsel %vm1147, %v3476, %v3468
      %s3485 = scalar_lea.vmem %s6, 80
      %v3486 = vld [vmem:[%s3485] sm:$0xff]
      %v3487 = vld [vmem:[%s3485 + $0x8] sm:$0xff]
      %v3489 = vsel %vm3080, %v3486, 0
      %v3492 = vsel %vm3080, %v3487, 0
      %3494 = vmatpush.msra.mxu0 0.0
      %3495 = vmatpush.msra.mxu0 0.0
      %3496 = vmatpush.msra.mxu0 0.0
      %3497 = vmatpush.msra.mxu0 0.0
      %3498 = vmatpush.msra.mxu0 0.0
      %3499 = vmatpush.msra.mxu0 0.0
      %3500 = vmatpush.msra.mxu0 0.0
      %3501 = vmatpush.msra.mxu0 0.0
      %3502 = vmatpush.msra.mxu0 0.0
      %3503 = vmatpush.msra.mxu0 0.0
      %3504 = vmatpush.msra.mxu0 0.0
      %3505 = vmatpush.msra.mxu0 0.0
      %3506 = vmatpush.msra.mxu0 %v3480
      %3507 = vmatpush.msra.mxu0 %v3479
      %3508 = vmatpush.msra.mxu0 %v3478
      %3509 = vmatpush.msra.mxu0 %v3477
      %3510 = vmatmul.f32.gmra.mxu0 %v3489
      %v3511 = vpop.f32.mrf.mxu0
      %v3512 = vadd.f32 0.0, %v3511
      %3513 = vmatmul.f32.gmra.mxu0 %v3492
      %v3514 = vpop.f32.mrf.mxu0
      %v3515 = vadd.f32 0.0, %v3514
      %3516 = vdwg.mxu0
      %3517 = vmatpush.msra.mxu0 0.0
      %3518 = vmatpush.msra.mxu0 0.0
      %3519 = vmatpush.msra.mxu0 0.0
      %3520 = vmatpush.msra.mxu0 0.0
      %3521 = vmatpush.msra.mxu0 0.0
      %3522 = vmatpush.msra.mxu0 0.0
      %3523 = vmatpush.msra.mxu0 0.0
      %3524 = vmatpush.msra.mxu0 0.0
      %3525 = vmatpush.msra.mxu0 0.0
      %3526 = vmatpush.msra.mxu0 0.0
      %3527 = vmatpush.msra.mxu0 0.0
      %3528 = vmatpush.msra.mxu0 0.0
      %3529 = vmatpush.msra.mxu0 %v3484
      %3530 = vmatpush.msra.mxu0 %v3483
      %3531 = vmatpush.msra.mxu0 %v3482
      %3532 = vmatpush.msra.mxu0 %v3481
      %3533 = vmatmul.f32.gmra.mxu0 %v3489
      %v3534 = vpop.f32.mrf.mxu0
      %v3535 = vadd.f32 0.0, %v3534
      %3536 = vmatmul.f32.gmra.mxu0 %v3492
      %v3537 = vpop.f32.mrf.mxu0
      %v3538 = vadd.f32 0.0, %v3537
      %3539 = vdwg.mxu0
      %v3540 = vmul.f32 %v3512, %v1160
      %v3541 = vmul.f32 %v3535, %v1161
      %v3542 = vmul.f32 %v3515, %v1160
      %v3543 = vmul.f32 %v3538, %v1161
      %v3544 = vadd.f32 %v3457, %v3540
      %v3545 = vadd.f32 %v3458, %v3541
      %v3546 = vadd.f32 %v3459, %v3542
      %v3547 = vadd.f32 %v3460, %v3543
      %3548 = vrot.lane.b32.xlu0 %v3046, 113
      %v3549 = vpop.permute.xlu0 %3548
      %3550 = vrot.lane.b32.xlu0 %v3048, 113
      %v3551 = vpop.permute.xlu0 %3550
      %3552 = vrot.lane.b32.xlu0 %v3050, 113
      %v3553 = vpop.permute.xlu0 %3552
      %3554 = vrot.lane.b32.xlu0 %v3052, 113
      %v3555 = vpop.permute.xlu0 %3554
      %3556 = vrot.lane.b32.xlu0 %v3047, 113
      %v3557 = vpop.permute.xlu0 %3556
      %3558 = vrot.lane.b32.xlu0 %v3049, 113
      %v3559 = vpop.permute.xlu0 %3558
      %3560 = vrot.lane.b32.xlu0 %v3051, 113
      %v3561 = vpop.permute.xlu0 %3560
      %3562 = vrot.lane.b32.xlu0 %v3053, 113
      %v3563 = vpop.permute.xlu0 %3562
      %v3564 = vsel %vm1298, %v3549, %v3557
      %v3565 = vsel %vm1298, %v3551, %v3559
      %v3566 = vsel %vm1298, %v3553, %v3561
      %v3567 = vsel %vm1298, %v3555, %v3563
      %v3568 = vsel %vm1298, %v3557, %v3549
      %v3569 = vsel %vm1298, %v3559, %v3551
      %v3570 = vsel %vm1298, %v3561, %v3553
      %v3571 = vsel %vm1298, %v3563, %v3555
      %s3572 = scalar_lea.vmem %s6, 96
      %v3573 = vld [vmem:[%s3572] sm:$0xff]
      %v3574 = vld [vmem:[%s3572 + $0x8] sm:$0xff]
      %v3576 = vsel %vm3080, %v3573, 0
      %v3579 = vsel %vm3080, %v3574, 0
      %3581 = vmatpush.msra.mxu0 0.0
      %3582 = vmatpush.msra.mxu0 0.0
      %3583 = vmatpush.msra.mxu0 0.0
      %3584 = vmatpush.msra.mxu0 0.0
      %3585 = vmatpush.msra.mxu0 0.0
      %3586 = vmatpush.msra.mxu0 0.0
      %3587 = vmatpush.msra.mxu0 0.0
      %3588 = vmatpush.msra.mxu0 0.0
      %3589 = vmatpush.msra.mxu0 0.0
      %3590 = vmatpush.msra.mxu0 0.0
      %3591 = vmatpush.msra.mxu0 0.0
      %3592 = vmatpush.msra.mxu0 0.0
      %3593 = vmatpush.msra.mxu0 %v3567
      %3594 = vmatpush.msra.mxu0 %v3566
      %3595 = vmatpush.msra.mxu0 %v3565
      %3596 = vmatpush.msra.mxu0 %v3564
      %3597 = vmatmul.f32.gmra.mxu0 %v3576
      %v3598 = vpop.f32.mrf.mxu0
      %v3599 = vadd.f32 0.0, %v3598
      %3600 = vmatmul.f32.gmra.mxu0 %v3579
      %v3601 = vpop.f32.mrf.mxu0
      %v3602 = vadd.f32 0.0, %v3601
      %3603 = vdwg.mxu0
      %3604 = vmatpush.msra.mxu0 0.0
      %3605 = vmatpush.msra.mxu0 0.0
      %3606 = vmatpush.msra.mxu0 0.0
      %3607 = vmatpush.msra.mxu0 0.0
      %3608 = vmatpush.msra.mxu0 0.0
      %3609 = vmatpush.msra.mxu0 0.0
      %3610 = vmatpush.msra.mxu0 0.0
      %3611 = vmatpush.msra.mxu0 0.0
      %3612 = vmatpush.msra.mxu0 0.0
      %3613 = vmatpush.msra.mxu0 0.0
      %3614 = vmatpush.msra.mxu0 0.0
      %3615 = vmatpush.msra.mxu0 0.0
      %3616 = vmatpush.msra.mxu0 %v3571
      %3617 = vmatpush.msra.mxu0 %v3570
      %3618 = vmatpush.msra.mxu0 %v3569
      %3619 = vmatpush.msra.mxu0 %v3568
      %3620 = vmatmul.f32.gmra.mxu0 %v3576
      %v3621 = vpop.f32.mrf.mxu0
      %v3622 = vadd.f32 0.0, %v3621
      %3623 = vmatmul.f32.gmra.mxu0 %v3579
      %v3624 = vpop.f32.mrf.mxu0
      %v3625 = vadd.f32 0.0, %v3624
      %3626 = vdwg.mxu0
      %v3627 = vmul.f32 %v3599, %v1311
      %v3628 = vmul.f32 %v3622, %v1312
      %v3629 = vmul.f32 %v3602, %v1311
      %v3630 = vmul.f32 %v3625, %v1312
      %v3631 = vadd.f32 %v3544, %v3627
      %v3632 = vadd.f32 %v3545, %v3628
      %v3633 = vadd.f32 %v3546, %v3629
      %v3634 = vadd.f32 %v3547, %v3630
      %3635 = vrot.lane.b32.xlu0 %v3046, 112
      %v3636 = vpop.permute.xlu0 %3635
      %3637 = vrot.lane.b32.xlu0 %v3048, 112
      %v3638 = vpop.permute.xlu0 %3637
      %3639 = vrot.lane.b32.xlu0 %v3050, 112
      %v3640 = vpop.permute.xlu0 %3639
      %3641 = vrot.lane.b32.xlu0 %v3052, 112
      %v3642 = vpop.permute.xlu0 %3641
      %3643 = vrot.lane.b32.xlu0 %v3047, 112
      %v3644 = vpop.permute.xlu0 %3643
      %3645 = vrot.lane.b32.xlu0 %v3049, 112
      %v3646 = vpop.permute.xlu0 %3645
      %3647 = vrot.lane.b32.xlu0 %v3051, 112
      %v3648 = vpop.permute.xlu0 %3647
      %3649 = vrot.lane.b32.xlu0 %v3053, 112
      %v3650 = vpop.permute.xlu0 %3649
      %v3651 = vsel %vm1449, %v3636, %v3644
      %v3652 = vsel %vm1449, %v3638, %v3646
      %v3653 = vsel %vm1449, %v3640, %v3648
      %v3654 = vsel %vm1449, %v3642, %v3650
      %v3655 = vsel %vm1449, %v3644, %v3636
      %v3656 = vsel %vm1449, %v3646, %v3638
      %v3657 = vsel %vm1449, %v3648, %v3640
      %v3658 = vsel %vm1449, %v3650, %v3642
      %s3659 = scalar_lea.vmem %s6, 112
      %v3660 = vld [vmem:[%s3659] sm:$0xff]
      %v3661 = vld [vmem:[%s3659 + $0x8] sm:$0xff]
      %v3663 = vsel %vm3080, %v3660, 0
      %v3666 = vsel %vm3080, %v3661, 0
      %3668 = vmatpush.msra.mxu0 0.0
      %3669 = vmatpush.msra.mxu0 0.0
      %3670 = vmatpush.msra.mxu0 0.0
      %3671 = vmatpush.msra.mxu0 0.0
      %3672 = vmatpush.msra.mxu0 0.0
      %3673 = vmatpush.msra.mxu0 0.0
      %3674 = vmatpush.msra.mxu0 0.0
      %3675 = vmatpush.msra.mxu0 0.0
      %3676 = vmatpush.msra.mxu0 0.0
      %3677 = vmatpush.msra.mxu0 0.0
      %3678 = vmatpush.msra.mxu0 0.0
      %3679 = vmatpush.msra.mxu0 0.0
      %3680 = vmatpush.msra.mxu0 %v3654
      %3681 = vmatpush.msra.mxu0 %v3653
      %3682 = vmatpush.msra.mxu0 %v3652
      %3683 = vmatpush.msra.mxu0 %v3651
      %3684 = vmatmul.f32.gmra.mxu0 %v3663
      %v3685 = vpop.f32.mrf.mxu0
      %v3686 = vadd.f32 0.0, %v3685
      %3687 = vmatmul.f32.gmra.mxu0 %v3666
      %v3688 = vpop.f32.mrf.mxu0
      %v3689 = vadd.f32 0.0, %v3688
      %3690 = vdwg.mxu0
      %3691 = vmatpush.msra.mxu0 0.0
      %3692 = vmatpush.msra.mxu0 0.0
      %3693 = vmatpush.msra.mxu0 0.0
      %3694 = vmatpush.msra.mxu0 0.0
      %3695 = vmatpush.msra.mxu0 0.0
      %3696 = vmatpush.msra.mxu0 0.0
      %3697 = vmatpush.msra.mxu0 0.0
      %3698 = vmatpush.msra.mxu0 0.0
      %3699 = vmatpush.msra.mxu0 0.0
      %3700 = vmatpush.msra.mxu0 0.0
      %3701 = vmatpush.msra.mxu0 0.0
      %3702 = vmatpush.msra.mxu0 0.0
      %3703 = vmatpush.msra.mxu0 %v3658
      %3704 = vmatpush.msra.mxu0 %v3657
      %3705 = vmatpush.msra.mxu0 %v3656
      %3706 = vmatpush.msra.mxu0 %v3655
      %3707 = vmatmul.f32.gmra.mxu0 %v3663
      %v3708 = vpop.f32.mrf.mxu0
      %v3709 = vadd.f32 0.0, %v3708
      %3710 = vmatmul.f32.gmra.mxu0 %v3666
      %v3711 = vpop.f32.mrf.mxu0
      %v3712 = vadd.f32 0.0, %v3711
      %3713 = vdwg.mxu0
      %v3714 = vmul.f32 %v3686, %v1462
      %v3715 = vmul.f32 %v3709, %v1463
      %v3716 = vmul.f32 %v3689, %v1462
      %v3717 = vmul.f32 %v3712, %v1463
      %v3718 = vadd.f32 %v3631, %v3714
      %v3719 = vadd.f32 %v3632, %v3715
      %v3720 = vadd.f32 %v3633, %v3716
      %v3721 = vadd.f32 %v3634, %v3717
      %3722 = vrot.lane.b32.xlu0 %v3046, 111
      %v3723 = vpop.permute.xlu0 %3722
      %3724 = vrot.lane.b32.xlu0 %v3048, 111
      %v3725 = vpop.permute.xlu0 %3724
      %3726 = vrot.lane.b32.xlu0 %v3050, 111
      %v3727 = vpop.permute.xlu0 %3726
      %3728 = vrot.lane.b32.xlu0 %v3052, 111
      %v3729 = vpop.permute.xlu0 %3728
      %3730 = vrot.lane.b32.xlu0 %v3047, 111
      %v3731 = vpop.permute.xlu0 %3730
      %3732 = vrot.lane.b32.xlu0 %v3049, 111
      %v3733 = vpop.permute.xlu0 %3732
      %3734 = vrot.lane.b32.xlu0 %v3051, 111
      %v3735 = vpop.permute.xlu0 %3734
      %3736 = vrot.lane.b32.xlu0 %v3053, 111
      %v3737 = vpop.permute.xlu0 %3736
      %v3738 = vsel %vm1600, %v3723, %v3731
      %v3739 = vsel %vm1600, %v3725, %v3733
      %v3740 = vsel %vm1600, %v3727, %v3735
      %v3741 = vsel %vm1600, %v3729, %v3737
      %v3742 = vsel %vm1600, %v3731, %v3723
      %v3743 = vsel %vm1600, %v3733, %v3725
      %v3744 = vsel %vm1600, %v3735, %v3727
      %v3745 = vsel %vm1600, %v3737, %v3729
      %s3746 = scalar_lea.vmem %s6, 128
      %v3747 = vld [vmem:[%s3746] sm:$0xff]
      %v3748 = vld [vmem:[%s3746 + $0x8] sm:$0xff]
      %v3750 = vsel %vm3080, %v3747, 0
      %v3753 = vsel %vm3080, %v3748, 0
      %3755 = vmatpush.msra.mxu0 0.0
      %3756 = vmatpush.msra.mxu0 0.0
      %3757 = vmatpush.msra.mxu0 0.0
      %3758 = vmatpush.msra.mxu0 0.0
      %3759 = vmatpush.msra.mxu0 0.0
      %3760 = vmatpush.msra.mxu0 0.0
      %3761 = vmatpush.msra.mxu0 0.0
      %3762 = vmatpush.msra.mxu0 0.0
      %3763 = vmatpush.msra.mxu0 0.0
      %3764 = vmatpush.msra.mxu0 0.0
      %3765 = vmatpush.msra.mxu0 0.0
      %3766 = vmatpush.msra.mxu0 0.0
      %3767 = vmatpush.msra.mxu0 %v3741
      %3768 = vmatpush.msra.mxu0 %v3740
      %3769 = vmatpush.msra.mxu0 %v3739
      %3770 = vmatpush.msra.mxu0 %v3738
      %3771 = vmatmul.f32.gmra.mxu0 %v3750
      %v3772 = vpop.f32.mrf.mxu0
      %v3773 = vadd.f32 0.0, %v3772
      %3774 = vmatmul.f32.gmra.mxu0 %v3753
      %v3775 = vpop.f32.mrf.mxu0
      %v3776 = vadd.f32 0.0, %v3775
      %3777 = vdwg.mxu0
      %3778 = vmatpush.msra.mxu0 0.0
      %3779 = vmatpush.msra.mxu0 0.0
      %3780 = vmatpush.msra.mxu0 0.0
      %3781 = vmatpush.msra.mxu0 0.0
      %3782 = vmatpush.msra.mxu0 0.0
      %3783 = vmatpush.msra.mxu0 0.0
      %3784 = vmatpush.msra.mxu0 0.0
      %3785 = vmatpush.msra.mxu0 0.0
      %3786 = vmatpush.msra.mxu0 0.0
      %3787 = vmatpush.msra.mxu0 0.0
      %3788 = vmatpush.msra.mxu0 0.0
      %3789 = vmatpush.msra.mxu0 0.0
      %3790 = vmatpush.msra.mxu0 %v3745
      %3791 = vmatpush.msra.mxu0 %v3744
      %3792 = vmatpush.msra.mxu0 %v3743
      %3793 = vmatpush.msra.mxu0 %v3742
      %3794 = vmatmul.f32.gmra.mxu0 %v3750
      %v3795 = vpop.f32.mrf.mxu0
      %v3796 = vadd.f32 0.0, %v3795
      %3797 = vmatmul.f32.gmra.mxu0 %v3753
      %v3798 = vpop.f32.mrf.mxu0
      %v3799 = vadd.f32 0.0, %v3798
      %3800 = vdwg.mxu0
      %v3801 = vmul.f32 %v3773, %v1613
      %v3802 = vmul.f32 %v3796, %v1614
      %v3803 = vmul.f32 %v3776, %v1613
      %v3804 = vmul.f32 %v3799, %v1614
      %v3805 = vadd.f32 %v3718, %v3801
      %v3806 = vadd.f32 %v3719, %v3802
      %v3807 = vadd.f32 %v3720, %v3803
      %v3808 = vadd.f32 %v3721, %v3804
      %v3809 = vld [vmem:[%s7] sm:$0xff]
      %v3810 = vld [vmem:[%s7 + $0x8] sm:$0xff]
      %3812 = vset.pattern.permute.xlu0 0
      %3813 = vperm.xlu0 %3812, %v3809
      %v3814 = vpop.permute.xlu0 %3813
      %3817 = vset.pattern.permute.xlu0 0
      %3818 = vperm.xlu0 %3817, %v3810
      %v3819 = vpop.permute.xlu0 %3818
      %v3821 = vadd.f32 %v3805, %v3814
      %v3822 = vadd.f32 %v3806, %v3814
      %v3823 = vadd.f32 %v3807, %v3819
      %v3824 = vadd.f32 %v3808, %v3819
      %v3825 = vmul.f32 %v3821, 0.05
      %v3826 = vmul.f32 %v3822, 0.05
      %v3827 = vmul.f32 %v3823, 0.05
      %v3828 = vmul.f32 %v3824, 0.05
      %v3829 = vmax.f32 %v3821, %v3825
      %v3830 = vmax.f32 %v3822, %v3826
      %v3831 = vmax.f32 %v3823, %v3827
      %v3832 = vmax.f32 %v3824, %v3828
      %3833 = vrot.lane.b32.xlu0 %v3829, 17
      %v3834 = vpop.permute.xlu0 %3833
      %3835 = vrot.lane.b32.xlu0 %v3831, 17
      %v3836 = vpop.permute.xlu0 %3835
      %3837 = vrot.lane.b32.xlu0 %v3830, 17
      %v3838 = vpop.permute.xlu0 %3837
      %3839 = vrot.lane.b32.xlu0 %v3832, 17
      %v3840 = vpop.permute.xlu0 %3839
      %v3841 = vsel %vm437, %v3834, %v3838
      %v3842 = vsel %vm437, %v3836, %v3840
      %v3843 = vsel %vm437, %v3838, %v3834
      %v3844 = vsel %vm437, %v3840, %v3836
      %v3845 = vld [vmem:[%s8] sm:$0xff]
      %vm3846 = vcmask 130048
      %v3848 = vsel %vm3846, %v3845, 0
      %3850 = vmatpush.msra.mxu0 0.0
      %3851 = vmatpush.msra.mxu0 0.0
      %3852 = vmatpush.msra.mxu0 0.0
      %3853 = vmatpush.msra.mxu0 0.0
      %3854 = vmatpush.msra.mxu0 0.0
      %3855 = vmatpush.msra.mxu0 0.0
      %3856 = vmatpush.msra.mxu0 0.0
      %3857 = vmatpush.msra.mxu0 0.0
      %3858 = vmatpush.msra.mxu0 0.0
      %3859 = vmatpush.msra.mxu0 0.0
      %3860 = vmatpush.msra.mxu0 0.0
      %3861 = vmatpush.msra.mxu0 0.0
      %3862 = vmatpush.msra.mxu0 0.0
      %3863 = vmatpush.msra.mxu0 0.0
      %3864 = vmatpush.msra.mxu0 %v3844
      %3865 = vmatpush.msra.mxu0 %v3843
      %3866 = vmatmul.f32.gmra.mxu0 %v3848
      %v3867 = vpop.f32.mrf.mxu0
      %v3868 = vadd.f32 0.0, %v3867
      %3869 = vdwg.mxu0
      %3870 = vmatpush.msra.mxu0 0.0
      %3871 = vmatpush.msra.mxu0 0.0
      %3872 = vmatpush.msra.mxu0 0.0
      %3873 = vmatpush.msra.mxu0 0.0
      %3874 = vmatpush.msra.mxu0 0.0
      %3875 = vmatpush.msra.mxu0 0.0
      %3876 = vmatpush.msra.mxu0 0.0
      %3877 = vmatpush.msra.mxu0 0.0
      %3878 = vmatpush.msra.mxu0 0.0
      %3879 = vmatpush.msra.mxu0 0.0
      %3880 = vmatpush.msra.mxu0 0.0
      %3881 = vmatpush.msra.mxu0 0.0
      %3882 = vmatpush.msra.mxu0 0.0
      %3883 = vmatpush.msra.mxu0 0.0
      %3884 = vmatpush.msra.mxu0 %v3842
      %3885 = vmatpush.msra.mxu0 %v3841
      %3886 = vmatmul.f32.gmra.mxu0 %v3848
      %v3887 = vpop.f32.mrf.mxu0
      %v3888 = vadd.f32 0.0, %v3887
      %3889 = vdwg.mxu0
      %v3890 = vmul.f32 %v3868, %v449
      %v3891 = vmul.f32 %v3888, %v450
      %v3892 = vadd.f32 %v3890, 0.0
      %v3893 = vadd.f32 %v3891, 0.0
      %3894 = vrot.lane.b32.xlu0 %v3829, 16
      %v3895 = vpop.permute.xlu0 %3894
      %3896 = vrot.lane.b32.xlu0 %v3831, 16
      %v3897 = vpop.permute.xlu0 %3896
      %3898 = vrot.lane.b32.xlu0 %v3830, 16
      %v3899 = vpop.permute.xlu0 %3898
      %3900 = vrot.lane.b32.xlu0 %v3832, 16
      %v3901 = vpop.permute.xlu0 %3900
      %v3902 = vsel %vm459, %v3895, %v3899
      %v3903 = vsel %vm459, %v3897, %v3901
      %v3904 = vsel %vm459, %v3899, %v3895
      %v3905 = vsel %vm459, %v3901, %v3897
      %s3906 = scalar_lea.vmem %s8, 8
      %v3907 = vld [vmem:[%s3906] sm:$0xff]
      %v3909 = vsel %vm3846, %v3907, 0
      %3911 = vmatpush.msra.mxu0 0.0
      %3912 = vmatpush.msra.mxu0 0.0
      %3913 = vmatpush.msra.mxu0 0.0
      %3914 = vmatpush.msra.mxu0 0.0
      %3915 = vmatpush.msra.mxu0 0.0
      %3916 = vmatpush.msra.mxu0 0.0
      %3917 = vmatpush.msra.mxu0 0.0
      %3918 = vmatpush.msra.mxu0 0.0
      %3919 = vmatpush.msra.mxu0 0.0
      %3920 = vmatpush.msra.mxu0 0.0
      %3921 = vmatpush.msra.mxu0 0.0
      %3922 = vmatpush.msra.mxu0 0.0
      %3923 = vmatpush.msra.mxu0 0.0
      %3924 = vmatpush.msra.mxu0 0.0
      %3925 = vmatpush.msra.mxu0 %v3905
      %3926 = vmatpush.msra.mxu0 %v3904
      %3927 = vmatmul.f32.gmra.mxu0 %v3909
      %v3928 = vpop.f32.mrf.mxu0
      %v3929 = vadd.f32 0.0, %v3928
      %3930 = vdwg.mxu0
      %3931 = vmatpush.msra.mxu0 0.0
      %3932 = vmatpush.msra.mxu0 0.0
      %3933 = vmatpush.msra.mxu0 0.0
      %3934 = vmatpush.msra.mxu0 0.0
      %3935 = vmatpush.msra.mxu0 0.0
      %3936 = vmatpush.msra.mxu0 0.0
      %3937 = vmatpush.msra.mxu0 0.0
      %3938 = vmatpush.msra.mxu0 0.0
      %3939 = vmatpush.msra.mxu0 0.0
      %3940 = vmatpush.msra.mxu0 0.0
      %3941 = vmatpush.msra.mxu0 0.0
      %3942 = vmatpush.msra.mxu0 0.0
      %3943 = vmatpush.msra.mxu0 0.0
      %3944 = vmatpush.msra.mxu0 0.0
      %3945 = vmatpush.msra.mxu0 %v3903
      %3946 = vmatpush.msra.mxu0 %v3902
      %3947 = vmatmul.f32.gmra.mxu0 %v3909
      %v3948 = vpop.f32.mrf.mxu0
      %v3949 = vadd.f32 0.0, %v3948
      %3950 = vdwg.mxu0
      %v3951 = vmul.f32 %v3929, %v472
      %v3952 = vmul.f32 %v3949, %v473
      %v3953 = vadd.f32 %v3892, %v3951
      %v3954 = vadd.f32 %v3893, %v3952
      %3955 = vrot.lane.b32.xlu0 %v3829, 15
      %v3956 = vpop.permute.xlu0 %3955
      %3957 = vrot.lane.b32.xlu0 %v3831, 15
      %v3958 = vpop.permute.xlu0 %3957
      %3959 = vrot.lane.b32.xlu0 %v3830, 15
      %v3960 = vpop.permute.xlu0 %3959
      %3961 = vrot.lane.b32.xlu0 %v3832, 15
      %v3962 = vpop.permute.xlu0 %3961
      %v3963 = vsel %vm708, %v3956, %v3960
      %v3964 = vsel %vm708, %v3958, %v3962
      %v3965 = vsel %vm708, %v3960, %v3956
      %v3966 = vsel %vm708, %v3962, %v3958
      %s3967 = scalar_lea.vmem %s8, 16
      %v3968 = vld [vmem:[%s3967] sm:$0xff]
      %v3970 = vsel %vm3846, %v3968, 0
      %3972 = vmatpush.msra.mxu0 0.0
      %3973 = vmatpush.msra.mxu0 0.0
      %3974 = vmatpush.msra.mxu0 0.0
      %3975 = vmatpush.msra.mxu0 0.0
      %3976 = vmatpush.msra.mxu0 0.0
      %3977 = vmatpush.msra.mxu0 0.0
      %3978 = vmatpush.msra.mxu0 0.0
      %3979 = vmatpush.msra.mxu0 0.0
      %3980 = vmatpush.msra.mxu0 0.0
      %3981 = vmatpush.msra.mxu0 0.0
      %3982 = vmatpush.msra.mxu0 0.0
      %3983 = vmatpush.msra.mxu0 0.0
      %3984 = vmatpush.msra.mxu0 0.0
      %3985 = vmatpush.msra.mxu0 0.0
      %3986 = vmatpush.msra.mxu0 %v3966
      %3987 = vmatpush.msra.mxu0 %v3965
      %3988 = vmatmul.f32.gmra.mxu0 %v3970
      %v3989 = vpop.f32.mrf.mxu0
      %v3990 = vadd.f32 0.0, %v3989
      %3991 = vdwg.mxu0
      %3992 = vmatpush.msra.mxu0 0.0
      %3993 = vmatpush.msra.mxu0 0.0
      %3994 = vmatpush.msra.mxu0 0.0
      %3995 = vmatpush.msra.mxu0 0.0
      %3996 = vmatpush.msra.mxu0 0.0
      %3997 = vmatpush.msra.mxu0 0.0
      %3998 = vmatpush.msra.mxu0 0.0
      %3999 = vmatpush.msra.mxu0 0.0
      %4000 = vmatpush.msra.mxu0 0.0
      %4001 = vmatpush.msra.mxu0 0.0
      %4002 = vmatpush.msra.mxu0 0.0
      %4003 = vmatpush.msra.mxu0 0.0
      %4004 = vmatpush.msra.mxu0 0.0
      %4005 = vmatpush.msra.mxu0 0.0
      %4006 = vmatpush.msra.mxu0 %v3964
      %4007 = vmatpush.msra.mxu0 %v3963
      %4008 = vmatmul.f32.gmra.mxu0 %v3970
      %v4009 = vpop.f32.mrf.mxu0
      %v4010 = vadd.f32 0.0, %v4009
      %4011 = vdwg.mxu0
      %v4012 = vmul.f32 %v3990, %v721
      %v4013 = vmul.f32 %v4010, %v722
      %v4014 = vadd.f32 %v3953, %v4012
      %v4015 = vadd.f32 %v3954, %v4013
      %4016 = vrot.lane.b32.xlu0 %v3829, 1
      %v4017 = vpop.permute.xlu0 %4016
      %4018 = vrot.lane.b32.xlu0 %v3831, 1
      %v4019 = vpop.permute.xlu0 %4018
      %4020 = vrot.lane.b32.xlu0 %v3830, 1
      %v4021 = vpop.permute.xlu0 %4020
      %4022 = vrot.lane.b32.xlu0 %v3832, 1
      %v4023 = vpop.permute.xlu0 %4022
      %v4024 = vsel %vm859, %v4017, %v4021
      %v4025 = vsel %vm859, %v4019, %v4023
      %v4026 = vsel %vm859, %v4021, %v4017
      %v4027 = vsel %vm859, %v4023, %v4019
      %s4028 = scalar_lea.vmem %s8, 24
      %v4029 = vld [vmem:[%s4028] sm:$0xff]
      %v4031 = vsel %vm3846, %v4029, 0
      %4033 = vmatpush.msra.mxu0 0.0
      %4034 = vmatpush.msra.mxu0 0.0
      %4035 = vmatpush.msra.mxu0 0.0
      %4036 = vmatpush.msra.mxu0 0.0
      %4037 = vmatpush.msra.mxu0 0.0
      %4038 = vmatpush.msra.mxu0 0.0
      %4039 = vmatpush.msra.mxu0 0.0
      %4040 = vmatpush.msra.mxu0 0.0
      %4041 = vmatpush.msra.mxu0 0.0
      %4042 = vmatpush.msra.mxu0 0.0
      %4043 = vmatpush.msra.mxu0 0.0
      %4044 = vmatpush.msra.mxu0 0.0
      %4045 = vmatpush.msra.mxu0 0.0
      %4046 = vmatpush.msra.mxu0 0.0
      %4047 = vmatpush.msra.mxu0 %v4027
      %4048 = vmatpush.msra.mxu0 %v4026
      %4049 = vmatmul.f32.gmra.mxu0 %v4031
      %v4050 = vpop.f32.mrf.mxu0
      %v4051 = vadd.f32 0.0, %v4050
      %4052 = vdwg.mxu0
      %4053 = vmatpush.msra.mxu0 0.0
      %4054 = vmatpush.msra.mxu0 0.0
      %4055 = vmatpush.msra.mxu0 0.0
      %4056 = vmatpush.msra.mxu0 0.0
      %4057 = vmatpush.msra.mxu0 0.0
      %4058 = vmatpush.msra.mxu0 0.0
      %4059 = vmatpush.msra.mxu0 0.0
      %4060 = vmatpush.msra.mxu0 0.0
      %4061 = vmatpush.msra.mxu0 0.0
      %4062 = vmatpush.msra.mxu0 0.0
      %4063 = vmatpush.msra.mxu0 0.0
      %4064 = vmatpush.msra.mxu0 0.0
      %4065 = vmatpush.msra.mxu0 0.0
      %4066 = vmatpush.msra.mxu0 0.0
      %4067 = vmatpush.msra.mxu0 %v4025
      %4068 = vmatpush.msra.mxu0 %v4024
      %4069 = vmatmul.f32.gmra.mxu0 %v4031
      %v4070 = vpop.f32.mrf.mxu0
      %v4071 = vadd.f32 0.0, %v4070
      %4072 = vdwg.mxu0
      %v4073 = vmul.f32 %v4051, %v872
      %v4074 = vmul.f32 %v4071, %v873
      %v4075 = vadd.f32 %v4014, %v4073
      %v4076 = vadd.f32 %v4015, %v4074
      %s4077 = scalar_lea.vmem %s8, 32
      %v4078 = vld [vmem:[%s4077] sm:$0xff]
      %v4080 = vsel %vm3846, %v4078, 0
      %4082 = vmatpush.msra.mxu0 0.0
      %4083 = vmatpush.msra.mxu0 0.0
      %4084 = vmatpush.msra.mxu0 0.0
      %4085 = vmatpush.msra.mxu0 0.0
      %4086 = vmatpush.msra.mxu0 0.0
      %4087 = vmatpush.msra.mxu0 0.0
      %4088 = vmatpush.msra.mxu0 0.0
      %4089 = vmatpush.msra.mxu0 0.0
      %4090 = vmatpush.msra.mxu0 0.0
      %4091 = vmatpush.msra.mxu0 0.0
      %4092 = vmatpush.msra.mxu0 0.0
      %4093 = vmatpush.msra.mxu0 0.0
      %4094 = vmatpush.msra.mxu0 0.0
      %4095 = vmatpush.msra.mxu0 0.0
      %4096 = vmatpush.msra.mxu0 %v3831
      %4097 = vmatpush.msra.mxu0 %v3829
      %4098 = vmatmul.f32.gmra.mxu0 %v4080
      %v4099 = vpop.f32.mrf.mxu0
      %v4100 = vadd.f32 0.0, %v4099
      %4101 = vdwg.mxu0
      %4102 = vmatpush.msra.mxu0 0.0
      %4103 = vmatpush.msra.mxu0 0.0
      %4104 = vmatpush.msra.mxu0 0.0
      %4105 = vmatpush.msra.mxu0 0.0
      %4106 = vmatpush.msra.mxu0 0.0
      %4107 = vmatpush.msra.mxu0 0.0
      %4108 = vmatpush.msra.mxu0 0.0
      %4109 = vmatpush.msra.mxu0 0.0
      %4110 = vmatpush.msra.mxu0 0.0
      %4111 = vmatpush.msra.mxu0 0.0
      %4112 = vmatpush.msra.mxu0 0.0
      %4113 = vmatpush.msra.mxu0 0.0
      %4114 = vmatpush.msra.mxu0 0.0
      %4115 = vmatpush.msra.mxu0 0.0
      %4116 = vmatpush.msra.mxu0 %v3832
      %4117 = vmatpush.msra.mxu0 %v3830
      %4118 = vmatmul.f32.gmra.mxu0 %v4080
      %v4119 = vpop.f32.mrf.mxu0
      %v4120 = vadd.f32 0.0, %v4119
      %4121 = vdwg.mxu0
      %v4122 = vadd.f32 %v4075, %v4100
      %v4123 = vadd.f32 %v4076, %v4120
      %4124 = vrot.lane.b32.xlu0 %v3829, 127
      %v4125 = vpop.permute.xlu0 %4124
      %4126 = vrot.lane.b32.xlu0 %v3831, 127
      %v4127 = vpop.permute.xlu0 %4126
      %4128 = vrot.lane.b32.xlu0 %v3830, 127
      %v4129 = vpop.permute.xlu0 %4128
      %4130 = vrot.lane.b32.xlu0 %v3832, 127
      %v4131 = vpop.permute.xlu0 %4130
      %v4132 = vsel %vm1147, %v4125, %v4129
      %v4133 = vsel %vm1147, %v4127, %v4131
      %v4134 = vsel %vm1147, %v4129, %v4125
      %v4135 = vsel %vm1147, %v4131, %v4127
      %s4136 = scalar_lea.vmem %s8, 40
      %v4137 = vld [vmem:[%s4136] sm:$0xff]
      %v4139 = vsel %vm3846, %v4137, 0
      %4141 = vmatpush.msra.mxu0 0.0
      %4142 = vmatpush.msra.mxu0 0.0
      %4143 = vmatpush.msra.mxu0 0.0
      %4144 = vmatpush.msra.mxu0 0.0
      %4145 = vmatpush.msra.mxu0 0.0
      %4146 = vmatpush.msra.mxu0 0.0
      %4147 = vmatpush.msra.mxu0 0.0
      %4148 = vmatpush.msra.mxu0 0.0
      %4149 = vmatpush.msra.mxu0 0.0
      %4150 = vmatpush.msra.mxu0 0.0
      %4151 = vmatpush.msra.mxu0 0.0
      %4152 = vmatpush.msra.mxu0 0.0
      %4153 = vmatpush.msra.mxu0 0.0
      %4154 = vmatpush.msra.mxu0 0.0
      %4155 = vmatpush.msra.mxu0 %v4133
      %4156 = vmatpush.msra.mxu0 %v4132
      %4157 = vmatmul.f32.gmra.mxu0 %v4139
      %v4158 = vpop.f32.mrf.mxu0
      %v4159 = vadd.f32 0.0, %v4158
      %4160 = vdwg.mxu0
      %4161 = vmatpush.msra.mxu0 0.0
      %4162 = vmatpush.msra.mxu0 0.0
      %4163 = vmatpush.msra.mxu0 0.0
      %4164 = vmatpush.msra.mxu0 0.0
      %4165 = vmatpush.msra.mxu0 0.0
      %4166 = vmatpush.msra.mxu0 0.0
      %4167 = vmatpush.msra.mxu0 0.0
      %4168 = vmatpush.msra.mxu0 0.0
      %4169 = vmatpush.msra.mxu0 0.0
      %4170 = vmatpush.msra.mxu0 0.0
      %4171 = vmatpush.msra.mxu0 0.0
      %4172 = vmatpush.msra.mxu0 0.0
      %4173 = vmatpush.msra.mxu0 0.0
      %4174 = vmatpush.msra.mxu0 0.0
      %4175 = vmatpush.msra.mxu0 %v4135
      %4176 = vmatpush.msra.mxu0 %v4134
      %4177 = vmatmul.f32.gmra.mxu0 %v4139
      %v4178 = vpop.f32.mrf.mxu0
      %v4179 = vadd.f32 0.0, %v4178
      %4180 = vdwg.mxu0
      %v4181 = vmul.f32 %v4159, %v1160
      %v4182 = vmul.f32 %v4179, %v1161
      %v4183 = vadd.f32 %v4122, %v4181
      %v4184 = vadd.f32 %v4123, %v4182
      %4185 = vrot.lane.b32.xlu0 %v3829, 113
      %v4186 = vpop.permute.xlu0 %4185
      %4187 = vrot.lane.b32.xlu0 %v3831, 113
      %v4188 = vpop.permute.xlu0 %4187
      %4189 = vrot.lane.b32.xlu0 %v3830, 113
      %v4190 = vpop.permute.xlu0 %4189
      %4191 = vrot.lane.b32.xlu0 %v3832, 113
      %v4192 = vpop.permute.xlu0 %4191
      %v4193 = vsel %vm1298, %v4186, %v4190
      %v4194 = vsel %vm1298, %v4188, %v4192
      %v4195 = vsel %vm1298, %v4190, %v4186
      %v4196 = vsel %vm1298, %v4192, %v4188
      %s4197 = scalar_lea.vmem %s8, 48
      %v4198 = vld [vmem:[%s4197] sm:$0xff]
      %v4200 = vsel %vm3846, %v4198, 0
      %4202 = vmatpush.msra.mxu0 0.0
      %4203 = vmatpush.msra.mxu0 0.0
      %4204 = vmatpush.msra.mxu0 0.0
      %4205 = vmatpush.msra.mxu0 0.0
      %4206 = vmatpush.msra.mxu0 0.0
      %4207 = vmatpush.msra.mxu0 0.0
      %4208 = vmatpush.msra.mxu0 0.0
      %4209 = vmatpush.msra.mxu0 0.0
      %4210 = vmatpush.msra.mxu0 0.0
      %4211 = vmatpush.msra.mxu0 0.0
      %4212 = vmatpush.msra.mxu0 0.0
      %4213 = vmatpush.msra.mxu0 0.0
      %4214 = vmatpush.msra.mxu0 0.0
      %4215 = vmatpush.msra.mxu0 0.0
      %4216 = vmatpush.msra.mxu0 %v4194
      %4217 = vmatpush.msra.mxu0 %v4193
      %4218 = vmatmul.f32.gmra.mxu0 %v4200
      %v4219 = vpop.f32.mrf.mxu0
      %v4220 = vadd.f32 0.0, %v4219
      %4221 = vdwg.mxu0
      %4222 = vmatpush.msra.mxu0 0.0
      %4223 = vmatpush.msra.mxu0 0.0
      %4224 = vmatpush.msra.mxu0 0.0
      %4225 = vmatpush.msra.mxu0 0.0
      %4226 = vmatpush.msra.mxu0 0.0
      %4227 = vmatpush.msra.mxu0 0.0
      %4228 = vmatpush.msra.mxu0 0.0
      %4229 = vmatpush.msra.mxu0 0.0
      %4230 = vmatpush.msra.mxu0 0.0
      %4231 = vmatpush.msra.mxu0 0.0
      %4232 = vmatpush.msra.mxu0 0.0
      %4233 = vmatpush.msra.mxu0 0.0
      %4234 = vmatpush.msra.mxu0 0.0
      %4235 = vmatpush.msra.mxu0 0.0
      %4236 = vmatpush.msra.mxu0 %v4196
      %4237 = vmatpush.msra.mxu0 %v4195
      %4238 = vmatmul.f32.gmra.mxu0 %v4200
      %v4239 = vpop.f32.mrf.mxu0
      %v4240 = vadd.f32 0.0, %v4239
      %4241 = vdwg.mxu0
      %v4242 = vmul.f32 %v4220, %v1311
      %v4243 = vmul.f32 %v4240, %v1312
      %v4244 = vadd.f32 %v4183, %v4242
      %v4245 = vadd.f32 %v4184, %v4243
      %4246 = vrot.lane.b32.xlu0 %v3829, 112
      %v4247 = vpop.permute.xlu0 %4246
      %4248 = vrot.lane.b32.xlu0 %v3831, 112
      %v4249 = vpop.permute.xlu0 %4248
      %4250 = vrot.lane.b32.xlu0 %v3830, 112
      %v4251 = vpop.permute.xlu0 %4250
      %4252 = vrot.lane.b32.xlu0 %v3832, 112
      %v4253 = vpop.permute.xlu0 %4252
      %v4254 = vsel %vm1449, %v4247, %v4251
      %v4255 = vsel %vm1449, %v4249, %v4253
      %v4256 = vsel %vm1449, %v4251, %v4247
      %v4257 = vsel %vm1449, %v4253, %v4249
      %s4258 = scalar_lea.vmem %s8, 56
      %v4259 = vld [vmem:[%s4258] sm:$0xff]
      %v4261 = vsel %vm3846, %v4259, 0
      %4263 = vmatpush.msra.mxu0 0.0
      %4264 = vmatpush.msra.mxu0 0.0
      %4265 = vmatpush.msra.mxu0 0.0
      %4266 = vmatpush.msra.mxu0 0.0
      %4267 = vmatpush.msra.mxu0 0.0
      %4268 = vmatpush.msra.mxu0 0.0
      %4269 = vmatpush.msra.mxu0 0.0
      %4270 = vmatpush.msra.mxu0 0.0
      %4271 = vmatpush.msra.mxu0 0.0
      %4272 = vmatpush.msra.mxu0 0.0
      %4273 = vmatpush.msra.mxu0 0.0
      %4274 = vmatpush.msra.mxu0 0.0
      %4275 = vmatpush.msra.mxu0 0.0
      %4276 = vmatpush.msra.mxu0 0.0
      %4277 = vmatpush.msra.mxu0 %v4255
      %4278 = vmatpush.msra.mxu0 %v4254
      %4279 = vmatmul.f32.gmra.mxu0 %v4261
      %v4280 = vpop.f32.mrf.mxu0
      %v4281 = vadd.f32 0.0, %v4280
      %4282 = vdwg.mxu0
      %4283 = vmatpush.msra.mxu0 0.0
      %4284 = vmatpush.msra.mxu0 0.0
      %4285 = vmatpush.msra.mxu0 0.0
      %4286 = vmatpush.msra.mxu0 0.0
      %4287 = vmatpush.msra.mxu0 0.0
      %4288 = vmatpush.msra.mxu0 0.0
      %4289 = vmatpush.msra.mxu0 0.0
      %4290 = vmatpush.msra.mxu0 0.0
      %4291 = vmatpush.msra.mxu0 0.0
      %4292 = vmatpush.msra.mxu0 0.0
      %4293 = vmatpush.msra.mxu0 0.0
      %4294 = vmatpush.msra.mxu0 0.0
      %4295 = vmatpush.msra.mxu0 0.0
      %4296 = vmatpush.msra.mxu0 0.0
      %4297 = vmatpush.msra.mxu0 %v4257
      %4298 = vmatpush.msra.mxu0 %v4256
      %4299 = vmatmul.f32.gmra.mxu0 %v4261
      %v4300 = vpop.f32.mrf.mxu0
      %v4301 = vadd.f32 0.0, %v4300
      %4302 = vdwg.mxu0
      %v4303 = vmul.f32 %v4281, %v1462
      %v4304 = vmul.f32 %v4301, %v1463
      %v4305 = vadd.f32 %v4244, %v4303
      %v4306 = vadd.f32 %v4245, %v4304
      %4307 = vrot.lane.b32.xlu0 %v3829, 111
      %v4308 = vpop.permute.xlu0 %4307
      %4309 = vrot.lane.b32.xlu0 %v3831, 111
      %v4310 = vpop.permute.xlu0 %4309
      %4311 = vrot.lane.b32.xlu0 %v3830, 111
      %v4312 = vpop.permute.xlu0 %4311
      %4313 = vrot.lane.b32.xlu0 %v3832, 111
      %v4314 = vpop.permute.xlu0 %4313
      %v4315 = vsel %vm1600, %v4308, %v4312
      %v4316 = vsel %vm1600, %v4310, %v4314
      %v4317 = vsel %vm1600, %v4312, %v4308
      %v4318 = vsel %vm1600, %v4314, %v4310
      %s4319 = scalar_lea.vmem %s8, 64
      %v4320 = vld [vmem:[%s4319] sm:$0xff]
      %v4322 = vsel %vm3846, %v4320, 0
      %4324 = vmatpush.msra.mxu0 0.0
      %4325 = vmatpush.msra.mxu0 0.0
      %4326 = vmatpush.msra.mxu0 0.0
      %4327 = vmatpush.msra.mxu0 0.0
      %4328 = vmatpush.msra.mxu0 0.0
      %4329 = vmatpush.msra.mxu0 0.0
      %4330 = vmatpush.msra.mxu0 0.0
      %4331 = vmatpush.msra.mxu0 0.0
      %4332 = vmatpush.msra.mxu0 0.0
      %4333 = vmatpush.msra.mxu0 0.0
      %4334 = vmatpush.msra.mxu0 0.0
      %4335 = vmatpush.msra.mxu0 0.0
      %4336 = vmatpush.msra.mxu0 0.0
      %4337 = vmatpush.msra.mxu0 0.0
      %4338 = vmatpush.msra.mxu0 %v4316
      %4339 = vmatpush.msra.mxu0 %v4315
      %4340 = vmatmul.f32.gmra.mxu0 %v4322
      %v4341 = vpop.f32.mrf.mxu0
      %v4342 = vadd.f32 0.0, %v4341
      %4343 = vdwg.mxu0
      %4344 = vmatpush.msra.mxu0 0.0
      %4345 = vmatpush.msra.mxu0 0.0
      %4346 = vmatpush.msra.mxu0 0.0
      %4347 = vmatpush.msra.mxu0 0.0
      %4348 = vmatpush.msra.mxu0 0.0
      %4349 = vmatpush.msra.mxu0 0.0
      %4350 = vmatpush.msra.mxu0 0.0
      %4351 = vmatpush.msra.mxu0 0.0
      %4352 = vmatpush.msra.mxu0 0.0
      %4353 = vmatpush.msra.mxu0 0.0
      %4354 = vmatpush.msra.mxu0 0.0
      %4355 = vmatpush.msra.mxu0 0.0
      %4356 = vmatpush.msra.mxu0 0.0
      %4357 = vmatpush.msra.mxu0 0.0
      %4358 = vmatpush.msra.mxu0 %v4318
      %4359 = vmatpush.msra.mxu0 %v4317
      %4360 = vmatmul.f32.gmra.mxu0 %v4322
      %v4361 = vpop.f32.mrf.mxu0
      %v4362 = vadd.f32 0.0, %v4361
      %4363 = vdwg.mxu0
      %v4364 = vmul.f32 %v4342, %v1613
      %v4365 = vmul.f32 %v4362, %v1614
      %v4366 = vadd.f32 %v4305, %v4364
      %v4367 = vadd.f32 %v4306, %v4365
      %v4368 = vld [vmem:[%s9] sm:$0xff]
      %4370 = vset.pattern.permute.xlu0 0
      %4371 = vperm.xlu0 %4370, %v4368
      %v4372 = vpop.permute.xlu0 %4371
      %v4374 = vadd.f32 %v4366, %v4372
      %v4375 = vadd.f32 %v4367, %v4372
      %v4376 = vmul.f32 %v4374, 0.05
      %v4377 = vmul.f32 %v4375, 0.05
      %v4378 = vmax.f32 %v4374, %v4376
      %v4379 = vmax.f32 %v4375, %v4377
      %4380 = vrot.lane.b32.xlu0 %v4378, 17
      %v4381 = vpop.permute.xlu0 %4380
      %4382 = vrot.lane.b32.xlu0 %v4379, 17
      %v4383 = vpop.permute.xlu0 %4382
      %v4384 = vsel %vm437, %v4381, %v4383
      %v4385 = vsel %vm437, %v4383, %v4381
      %v4386 = vld [vmem:[%s10] sm:$0x1]
      %vm4387 = vcmask 64512
      %v4389 = vsel %vm4387, %v4386, 0
      %4391 = vmatpush.msra.mxu0 0.0
      %4392 = vmatpush.msra.mxu0 0.0
      %4393 = vmatpush.msra.mxu0 0.0
      %4394 = vmatpush.msra.mxu0 0.0
      %4395 = vmatpush.msra.mxu0 0.0
      %4396 = vmatpush.msra.mxu0 0.0
      %4397 = vmatpush.msra.mxu0 0.0
      %4398 = vmatpush.msra.mxu0 0.0
      %4399 = vmatpush.msra.mxu0 0.0
      %4400 = vmatpush.msra.mxu0 0.0
      %4401 = vmatpush.msra.mxu0 0.0
      %4402 = vmatpush.msra.mxu0 0.0
      %4403 = vmatpush.msra.mxu0 0.0
      %4404 = vmatpush.msra.mxu0 0.0
      %4405 = vmatpush.msra.mxu0 0.0
      %4406 = vmatpush.msra.mxu0 %v4385
      %4407 = vmatmul.f32.gmra.mxu0 %v4389
      %v4408 = vpop.f32.mrf.mxu0
      %v4409 = vadd.f32 0.0, %v4408
      %4410 = vdwg.mxu0
      %4411 = vmatpush.msra.mxu0 0.0
      %4412 = vmatpush.msra.mxu0 0.0
      %4413 = vmatpush.msra.mxu0 0.0
      %4414 = vmatpush.msra.mxu0 0.0
      %4415 = vmatpush.msra.mxu0 0.0
      %4416 = vmatpush.msra.mxu0 0.0
      %4417 = vmatpush.msra.mxu0 0.0
      %4418 = vmatpush.msra.mxu0 0.0
      %4419 = vmatpush.msra.mxu0 0.0
      %4420 = vmatpush.msra.mxu0 0.0
      %4421 = vmatpush.msra.mxu0 0.0
      %4422 = vmatpush.msra.mxu0 0.0
      %4423 = vmatpush.msra.mxu0 0.0
      %4424 = vmatpush.msra.mxu0 0.0
      %4425 = vmatpush.msra.mxu0 0.0
      %4426 = vmatpush.msra.mxu0 %v4384
      %4427 = vmatmul.f32.gmra.mxu0 %v4389
      %v4428 = vpop.f32.mrf.mxu0
      %v4429 = vadd.f32 0.0, %v4428
      %4430 = vdwg.mxu0
      %v4431 = vmul.f32 %v4409, %v449
      %v4432 = vmul.f32 %v4429, %v450
      %v4433 = vadd.f32 %v4431, 0.0
      %v4434 = vadd.f32 %v4432, 0.0
      %4435 = vrot.lane.b32.xlu0 %v4378, 16
      %v4436 = vpop.permute.xlu0 %4435
      %4437 = vrot.lane.b32.xlu0 %v4379, 16
      %v4438 = vpop.permute.xlu0 %4437
      %v4439 = vsel %vm459, %v4436, %v4438
      %v4440 = vsel %vm459, %v4438, %v4436
      %s4441 = scalar_lea.vmem %s10, 1
      %v4442 = vld [vmem:[%s4441] sm:$0x1]
      %v4444 = vsel %vm4387, %v4442, 0
      %4446 = vmatpush.msra.mxu0 0.0
      %4447 = vmatpush.msra.mxu0 0.0
      %4448 = vmatpush.msra.mxu0 0.0
      %4449 = vmatpush.msra.mxu0 0.0
      %4450 = vmatpush.msra.mxu0 0.0
      %4451 = vmatpush.msra.mxu0 0.0
      %4452 = vmatpush.msra.mxu0 0.0
      %4453 = vmatpush.msra.mxu0 0.0
      %4454 = vmatpush.msra.mxu0 0.0
      %4455 = vmatpush.msra.mxu0 0.0
      %4456 = vmatpush.msra.mxu0 0.0
      %4457 = vmatpush.msra.mxu0 0.0
      %4458 = vmatpush.msra.mxu0 0.0
      %4459 = vmatpush.msra.mxu0 0.0
      %4460 = vmatpush.msra.mxu0 0.0
      %4461 = vmatpush.msra.mxu0 %v4440
      %4462 = vmatmul.f32.gmra.mxu0 %v4444
      %v4463 = vpop.f32.mrf.mxu0
      %v4464 = vadd.f32 0.0, %v4463
      %4465 = vdwg.mxu0
      %4466 = vmatpush.msra.mxu0 0.0
      %4467 = vmatpush.msra.mxu0 0.0
      %4468 = vmatpush.msra.mxu0 0.0
      %4469 = vmatpush.msra.mxu0 0.0
      %4470 = vmatpush.msra.mxu0 0.0
      %4471 = vmatpush.msra.mxu0 0.0
      %4472 = vmatpush.msra.mxu0 0.0
      %4473 = vmatpush.msra.mxu0 0.0
      %4474 = vmatpush.msra.mxu0 0.0
      %4475 = vmatpush.msra.mxu0 0.0
      %4476 = vmatpush.msra.mxu0 0.0
      %4477 = vmatpush.msra.mxu0 0.0
      %4478 = vmatpush.msra.mxu0 0.0
      %4479 = vmatpush.msra.mxu0 0.0
      %4480 = vmatpush.msra.mxu0 0.0
      %4481 = vmatpush.msra.mxu0 %v4439
      %4482 = vmatmul.f32.gmra.mxu0 %v4444
      %v4483 = vpop.f32.mrf.mxu0
      %v4484 = vadd.f32 0.0, %v4483
      %4485 = vdwg.mxu0
      %v4486 = vmul.f32 %v4464, %v472
      %v4487 = vmul.f32 %v4484, %v473
      %v4488 = vadd.f32 %v4433, %v4486
      %v4489 = vadd.f32 %v4434, %v4487
      %4490 = vrot.lane.b32.xlu0 %v4378, 15
      %v4491 = vpop.permute.xlu0 %4490
      %4492 = vrot.lane.b32.xlu0 %v4379, 15
      %v4493 = vpop.permute.xlu0 %4492
      %v4494 = vsel %vm708, %v4491, %v4493
      %v4495 = vsel %vm708, %v4493, %v4491
      %s4496 = scalar_lea.vmem %s10, 2
      %v4497 = vld [vmem:[%s4496] sm:$0x1]
      %v4499 = vsel %vm4387, %v4497, 0
      %4501 = vmatpush.msra.mxu0 0.0
      %4502 = vmatpush.msra.mxu0 0.0
      %4503 = vmatpush.msra.mxu0 0.0
      %4504 = vmatpush.msra.mxu0 0.0
      %4505 = vmatpush.msra.mxu0 0.0
      %4506 = vmatpush.msra.mxu0 0.0
      %4507 = vmatpush.msra.mxu0 0.0
      %4508 = vmatpush.msra.mxu0 0.0
      %4509 = vmatpush.msra.mxu0 0.0
      %4510 = vmatpush.msra.mxu0 0.0
      %4511 = vmatpush.msra.mxu0 0.0
      %4512 = vmatpush.msra.mxu0 0.0
      %4513 = vmatpush.msra.mxu0 0.0
      %4514 = vmatpush.msra.mxu0 0.0
      %4515 = vmatpush.msra.mxu0 0.0
      %4516 = vmatpush.msra.mxu0 %v4495
      %4517 = vmatmul.f32.gmra.mxu0 %v4499
      %v4518 = vpop.f32.mrf.mxu0
      %v4519 = vadd.f32 0.0, %v4518
      %4520 = vdwg.mxu0
      %4521 = vmatpush.msra.mxu0 0.0
      %4522 = vmatpush.msra.mxu0 0.0
      %4523 = vmatpush.msra.mxu0 0.0
      %4524 = vmatpush.msra.mxu0 0.0
      %4525 = vmatpush.msra.mxu0 0.0
      %4526 = vmatpush.msra.mxu0 0.0
      %4527 = vmatpush.msra.mxu0 0.0
      %4528 = vmatpush.msra.mxu0 0.0
      %4529 = vmatpush.msra.mxu0 0.0
      %4530 = vmatpush.msra.mxu0 0.0
      %4531 = vmatpush.msra.mxu0 0.0
      %4532 = vmatpush.msra.mxu0 0.0
      %4533 = vmatpush.msra.mxu0 0.0
      %4534 = vmatpush.msra.mxu0 0.0
      %4535 = vmatpush.msra.mxu0 0.0
      %4536 = vmatpush.msra.mxu0 %v4494
      %4537 = vmatmul.f32.gmra.mxu0 %v4499
      %v4538 = vpop.f32.mrf.mxu0
      %v4539 = vadd.f32 0.0, %v4538
      %4540 = vdwg.mxu0
      %v4541 = vmul.f32 %v4519, %v721
      %v4542 = vmul.f32 %v4539, %v722
      %v4543 = vadd.f32 %v4488, %v4541
      %v4544 = vadd.f32 %v4489, %v4542
      %4545 = vrot.lane.b32.xlu0 %v4378, 1
      %v4546 = vpop.permute.xlu0 %4545
      %4547 = vrot.lane.b32.xlu0 %v4379, 1
      %v4548 = vpop.permute.xlu0 %4547
      %v4549 = vsel %vm859, %v4546, %v4548
      %v4550 = vsel %vm859, %v4548, %v4546
      %s4551 = scalar_lea.vmem %s10, 3
      %v4552 = vld [vmem:[%s4551] sm:$0x1]
      %v4554 = vsel %vm4387, %v4552, 0
      %4556 = vmatpush.msra.mxu0 0.0
      %4557 = vmatpush.msra.mxu0 0.0
      %4558 = vmatpush.msra.mxu0 0.0
      %4559 = vmatpush.msra.mxu0 0.0
      %4560 = vmatpush.msra.mxu0 0.0
      %4561 = vmatpush.msra.mxu0 0.0
      %4562 = vmatpush.msra.mxu0 0.0
      %4563 = vmatpush.msra.mxu0 0.0
      %4564 = vmatpush.msra.mxu0 0.0
      %4565 = vmatpush.msra.mxu0 0.0
      %4566 = vmatpush.msra.mxu0 0.0
      %4567 = vmatpush.msra.mxu0 0.0
      %4568 = vmatpush.msra.mxu0 0.0
      %4569 = vmatpush.msra.mxu0 0.0
      %4570 = vmatpush.msra.mxu0 0.0
      %4571 = vmatpush.msra.mxu0 %v4550
      %4572 = vmatmul.f32.gmra.mxu0 %v4554
      %v4573 = vpop.f32.mrf.mxu0
      %v4574 = vadd.f32 0.0, %v4573
      %4575 = vdwg.mxu0
      %4576 = vmatpush.msra.mxu0 0.0
      %4577 = vmatpush.msra.mxu0 0.0
      %4578 = vmatpush.msra.mxu0 0.0
      %4579 = vmatpush.msra.mxu0 0.0
      %4580 = vmatpush.msra.mxu0 0.0
      %4581 = vmatpush.msra.mxu0 0.0
      %4582 = vmatpush.msra.mxu0 0.0
      %4583 = vmatpush.msra.mxu0 0.0
      %4584 = vmatpush.msra.mxu0 0.0
      %4585 = vmatpush.msra.mxu0 0.0
      %4586 = vmatpush.msra.mxu0 0.0
      %4587 = vmatpush.msra.mxu0 0.0
      %4588 = vmatpush.msra.mxu0 0.0
      %4589 = vmatpush.msra.mxu0 0.0
      %4590 = vmatpush.msra.mxu0 0.0
      %4591 = vmatpush.msra.mxu0 %v4549
      %4592 = vmatmul.f32.gmra.mxu0 %v4554
      %v4593 = vpop.f32.mrf.mxu0
      %v4594 = vadd.f32 0.0, %v4593
      %4595 = vdwg.mxu0
      %v4596 = vmul.f32 %v4574, %v872
      %v4597 = vmul.f32 %v4594, %v873
      %v4598 = vadd.f32 %v4543, %v4596
      %v4599 = vadd.f32 %v4544, %v4597
      %s4600 = scalar_lea.vmem %s10, 4
      %v4601 = vld [vmem:[%s4600] sm:$0x1]
      %v4603 = vsel %vm4387, %v4601, 0
      %4605 = vmatpush.msra.mxu0 0.0
      %4606 = vmatpush.msra.mxu0 0.0
      %4607 = vmatpush.msra.mxu0 0.0
      %4608 = vmatpush.msra.mxu0 0.0
      %4609 = vmatpush.msra.mxu0 0.0
      %4610 = vmatpush.msra.mxu0 0.0
      %4611 = vmatpush.msra.mxu0 0.0
      %4612 = vmatpush.msra.mxu0 0.0
      %4613 = vmatpush.msra.mxu0 0.0
      %4614 = vmatpush.msra.mxu0 0.0
      %4615 = vmatpush.msra.mxu0 0.0
      %4616 = vmatpush.msra.mxu0 0.0
      %4617 = vmatpush.msra.mxu0 0.0
      %4618 = vmatpush.msra.mxu0 0.0
      %4619 = vmatpush.msra.mxu0 0.0
      %4620 = vmatpush.msra.mxu0 %v4378
      %4621 = vmatmul.f32.gmra.mxu0 %v4603
      %v4622 = vpop.f32.mrf.mxu0
      %v4623 = vadd.f32 0.0, %v4622
      %4624 = vdwg.mxu0
      %4625 = vmatpush.msra.mxu0 0.0
      %4626 = vmatpush.msra.mxu0 0.0
      %4627 = vmatpush.msra.mxu0 0.0
      %4628 = vmatpush.msra.mxu0 0.0
      %4629 = vmatpush.msra.mxu0 0.0
      %4630 = vmatpush.msra.mxu0 0.0
      %4631 = vmatpush.msra.mxu0 0.0
      %4632 = vmatpush.msra.mxu0 0.0
      %4633 = vmatpush.msra.mxu0 0.0
      %4634 = vmatpush.msra.mxu0 0.0
      %4635 = vmatpush.msra.mxu0 0.0
      %4636 = vmatpush.msra.mxu0 0.0
      %4637 = vmatpush.msra.mxu0 0.0
      %4638 = vmatpush.msra.mxu0 0.0
      %4639 = vmatpush.msra.mxu0 0.0
      %4640 = vmatpush.msra.mxu0 %v4379
      %4641 = vmatmul.f32.gmra.mxu0 %v4603
      %v4642 = vpop.f32.mrf.mxu0
      %v4643 = vadd.f32 0.0, %v4642
      %4644 = vdwg.mxu0
      %v4645 = vadd.f32 %v4598, %v4623
      %v4646 = vadd.f32 %v4599, %v4643
      %4647 = vrot.lane.b32.xlu0 %v4378, 127
      %v4648 = vpop.permute.xlu0 %4647
      %4649 = vrot.lane.b32.xlu0 %v4379, 127
      %v4650 = vpop.permute.xlu0 %4649
      %v4651 = vsel %vm1147, %v4648, %v4650
      %v4652 = vsel %vm1147, %v4650, %v4648
      %s4653 = scalar_lea.vmem %s10, 5
      %v4654 = vld [vmem:[%s4653] sm:$0x1]
      %v4656 = vsel %vm4387, %v4654, 0
      %4658 = vmatpush.msra.mxu0 0.0
      %4659 = vmatpush.msra.mxu0 0.0
      %4660 = vmatpush.msra.mxu0 0.0
      %4661 = vmatpush.msra.mxu0 0.0
      %4662 = vmatpush.msra.mxu0 0.0
      %4663 = vmatpush.msra.mxu0 0.0
      %4664 = vmatpush.msra.mxu0 0.0
      %4665 = vmatpush.msra.mxu0 0.0
      %4666 = vmatpush.msra.mxu0 0.0
      %4667 = vmatpush.msra.mxu0 0.0
      %4668 = vmatpush.msra.mxu0 0.0
      %4669 = vmatpush.msra.mxu0 0.0
      %4670 = vmatpush.msra.mxu0 0.0
      %4671 = vmatpush.msra.mxu0 0.0
      %4672 = vmatpush.msra.mxu0 0.0
      %4673 = vmatpush.msra.mxu0 %v4651
      %4674 = vmatmul.f32.gmra.mxu0 %v4656
      %v4675 = vpop.f32.mrf.mxu0
      %v4676 = vadd.f32 0.0, %v4675
      %4677 = vdwg.mxu0
      %4678 = vmatpush.msra.mxu0 0.0
      %4679 = vmatpush.msra.mxu0 0.0
      %4680 = vmatpush.msra.mxu0 0.0
      %4681 = vmatpush.msra.mxu0 0.0
      %4682 = vmatpush.msra.mxu0 0.0
      %4683 = vmatpush.msra.mxu0 0.0
      %4684 = vmatpush.msra.mxu0 0.0
      %4685 = vmatpush.msra.mxu0 0.0
      %4686 = vmatpush.msra.mxu0 0.0
      %4687 = vmatpush.msra.mxu0 0.0
      %4688 = vmatpush.msra.mxu0 0.0
      %4689 = vmatpush.msra.mxu0 0.0
      %4690 = vmatpush.msra.mxu0 0.0
      %4691 = vmatpush.msra.mxu0 0.0
      %4692 = vmatpush.msra.mxu0 0.0
      %4693 = vmatpush.msra.mxu0 %v4652
      %4694 = vmatmul.f32.gmra.mxu0 %v4656
      %v4695 = vpop.f32.mrf.mxu0
      %v4696 = vadd.f32 0.0, %v4695
      %4697 = vdwg.mxu0
      %v4698 = vmul.f32 %v4676, %v1160
      %v4699 = vmul.f32 %v4696, %v1161
      %v4700 = vadd.f32 %v4645, %v4698
      %v4701 = vadd.f32 %v4646, %v4699
      %4702 = vrot.lane.b32.xlu0 %v4378, 113
      %v4703 = vpop.permute.xlu0 %4702
      %4704 = vrot.lane.b32.xlu0 %v4379, 113
      %v4705 = vpop.permute.xlu0 %4704
      %v4706 = vsel %vm1298, %v4703, %v4705
      %v4707 = vsel %vm1298, %v4705, %v4703
      %s4708 = scalar_lea.vmem %s10, 6
      %v4709 = vld [vmem:[%s4708] sm:$0x1]
      %v4711 = vsel %vm4387, %v4709, 0
      %4713 = vmatpush.msra.mxu0 0.0
      %4714 = vmatpush.msra.mxu0 0.0
      %4715 = vmatpush.msra.mxu0 0.0
      %4716 = vmatpush.msra.mxu0 0.0
      %4717 = vmatpush.msra.mxu0 0.0
      %4718 = vmatpush.msra.mxu0 0.0
      %4719 = vmatpush.msra.mxu0 0.0
      %4720 = vmatpush.msra.mxu0 0.0
      %4721 = vmatpush.msra.mxu0 0.0
      %4722 = vmatpush.msra.mxu0 0.0
      %4723 = vmatpush.msra.mxu0 0.0
      %4724 = vmatpush.msra.mxu0 0.0
      %4725 = vmatpush.msra.mxu0 0.0
      %4726 = vmatpush.msra.mxu0 0.0
      %4727 = vmatpush.msra.mxu0 0.0
      %4728 = vmatpush.msra.mxu0 %v4706
      %4729 = vmatmul.f32.gmra.mxu0 %v4711
      %v4730 = vpop.f32.mrf.mxu0
      %v4731 = vadd.f32 0.0, %v4730
      %4732 = vdwg.mxu0
      %4733 = vmatpush.msra.mxu0 0.0
      %4734 = vmatpush.msra.mxu0 0.0
      %4735 = vmatpush.msra.mxu0 0.0
      %4736 = vmatpush.msra.mxu0 0.0
      %4737 = vmatpush.msra.mxu0 0.0
      %4738 = vmatpush.msra.mxu0 0.0
      %4739 = vmatpush.msra.mxu0 0.0
      %4740 = vmatpush.msra.mxu0 0.0
      %4741 = vmatpush.msra.mxu0 0.0
      %4742 = vmatpush.msra.mxu0 0.0
      %4743 = vmatpush.msra.mxu0 0.0
      %4744 = vmatpush.msra.mxu0 0.0
      %4745 = vmatpush.msra.mxu0 0.0
      %4746 = vmatpush.msra.mxu0 0.0
      %4747 = vmatpush.msra.mxu0 0.0
      %4748 = vmatpush.msra.mxu0 %v4707
      %4749 = vmatmul.f32.gmra.mxu0 %v4711
      %v4750 = vpop.f32.mrf.mxu0
      %v4751 = vadd.f32 0.0, %v4750
      %4752 = vdwg.mxu0
      %v4753 = vmul.f32 %v4731, %v1311
      %v4754 = vmul.f32 %v4751, %v1312
      %v4755 = vadd.f32 %v4700, %v4753
      %v4756 = vadd.f32 %v4701, %v4754
      %4757 = vrot.lane.b32.xlu0 %v4378, 112
      %v4758 = vpop.permute.xlu0 %4757
      %4759 = vrot.lane.b32.xlu0 %v4379, 112
      %v4760 = vpop.permute.xlu0 %4759
      %v4761 = vsel %vm1449, %v4758, %v4760
      %v4762 = vsel %vm1449, %v4760, %v4758
      %s4763 = scalar_lea.vmem %s10, 7
      %v4764 = vld [vmem:[%s4763] sm:$0x1]
      %v4766 = vsel %vm4387, %v4764, 0
      %4768 = vmatpush.msra.mxu0 0.0
      %4769 = vmatpush.msra.mxu0 0.0
      %4770 = vmatpush.msra.mxu0 0.0
      %4771 = vmatpush.msra.mxu0 0.0
      %4772 = vmatpush.msra.mxu0 0.0
      %4773 = vmatpush.msra.mxu0 0.0
      %4774 = vmatpush.msra.mxu0 0.0
      %4775 = vmatpush.msra.mxu0 0.0
      %4776 = vmatpush.msra.mxu0 0.0
      %4777 = vmatpush.msra.mxu0 0.0
      %4778 = vmatpush.msra.mxu0 0.0
      %4779 = vmatpush.msra.mxu0 0.0
      %4780 = vmatpush.msra.mxu0 0.0
      %4781 = vmatpush.msra.mxu0 0.0
      %4782 = vmatpush.msra.mxu0 0.0
      %4783 = vmatpush.msra.mxu0 %v4761
      %4784 = vmatmul.f32.gmra.mxu0 %v4766
      %v4785 = vpop.f32.mrf.mxu0
      %v4786 = vadd.f32 0.0, %v4785
      %4787 = vdwg.mxu0
      %4788 = vmatpush.msra.mxu0 0.0
      %4789 = vmatpush.msra.mxu0 0.0
      %4790 = vmatpush.msra.mxu0 0.0
      %4791 = vmatpush.msra.mxu0 0.0
      %4792 = vmatpush.msra.mxu0 0.0
      %4793 = vmatpush.msra.mxu0 0.0
      %4794 = vmatpush.msra.mxu0 0.0
      %4795 = vmatpush.msra.mxu0 0.0
      %4796 = vmatpush.msra.mxu0 0.0
      %4797 = vmatpush.msra.mxu0 0.0
      %4798 = vmatpush.msra.mxu0 0.0
      %4799 = vmatpush.msra.mxu0 0.0
      %4800 = vmatpush.msra.mxu0 0.0
      %4801 = vmatpush.msra.mxu0 0.0
      %4802 = vmatpush.msra.mxu0 0.0
      %4803 = vmatpush.msra.mxu0 %v4762
      %4804 = vmatmul.f32.gmra.mxu0 %v4766
      %v4805 = vpop.f32.mrf.mxu0
      %v4806 = vadd.f32 0.0, %v4805
      %4807 = vdwg.mxu0
      %v4808 = vmul.f32 %v4786, %v1462
      %v4809 = vmul.f32 %v4806, %v1463
      %v4810 = vadd.f32 %v4755, %v4808
      %v4811 = vadd.f32 %v4756, %v4809
      %4812 = vrot.lane.b32.xlu0 %v4378, 111
      %v4813 = vpop.permute.xlu0 %4812
      %4814 = vrot.lane.b32.xlu0 %v4379, 111
      %v4815 = vpop.permute.xlu0 %4814
      %v4816 = vsel %vm1600, %v4813, %v4815
      %v4817 = vsel %vm1600, %v4815, %v4813
      %s4818 = scalar_lea.vmem %s10, 8
      %v4819 = vld [vmem:[%s4818] sm:$0x1]
      %v4821 = vsel %vm4387, %v4819, 0
      %4823 = vmatpush.msra.mxu0 0.0
      %4824 = vmatpush.msra.mxu0 0.0
      %4825 = vmatpush.msra.mxu0 0.0
      %4826 = vmatpush.msra.mxu0 0.0
      %4827 = vmatpush.msra.mxu0 0.0
      %4828 = vmatpush.msra.mxu0 0.0
      %4829 = vmatpush.msra.mxu0 0.0
      %4830 = vmatpush.msra.mxu0 0.0
      %4831 = vmatpush.msra.mxu0 0.0
      %4832 = vmatpush.msra.mxu0 0.0
      %4833 = vmatpush.msra.mxu0 0.0
      %4834 = vmatpush.msra.mxu0 0.0
      %4835 = vmatpush.msra.mxu0 0.0
      %4836 = vmatpush.msra.mxu0 0.0
      %4837 = vmatpush.msra.mxu0 0.0
      %4838 = vmatpush.msra.mxu0 %v4816
      %4839 = vmatmul.f32.gmra.mxu0 %v4821
      %v4840 = vpop.f32.mrf.mxu0
      %v4841 = vadd.f32 0.0, %v4840
      %4842 = vdwg.mxu0
      %4843 = vmatpush.msra.mxu0 0.0
      %4844 = vmatpush.msra.mxu0 0.0
      %4845 = vmatpush.msra.mxu0 0.0
      %4846 = vmatpush.msra.mxu0 0.0
      %4847 = vmatpush.msra.mxu0 0.0
      %4848 = vmatpush.msra.mxu0 0.0
      %4849 = vmatpush.msra.mxu0 0.0
      %4850 = vmatpush.msra.mxu0 0.0
      %4851 = vmatpush.msra.mxu0 0.0
      %4852 = vmatpush.msra.mxu0 0.0
      %4853 = vmatpush.msra.mxu0 0.0
      %4854 = vmatpush.msra.mxu0 0.0
      %4855 = vmatpush.msra.mxu0 0.0
      %4856 = vmatpush.msra.mxu0 0.0
      %4857 = vmatpush.msra.mxu0 0.0
      %4858 = vmatpush.msra.mxu0 %v4817
      %4859 = vmatmul.f32.gmra.mxu0 %v4821
      %v4860 = vpop.f32.mrf.mxu0
      %v4861 = vadd.f32 0.0, %v4860
      %4862 = vdwg.mxu0
      %v4863 = vmul.f32 %v4841, %v1613
      %v4864 = vmul.f32 %v4861, %v1614
      %v4865 = vadd.f32 %v4810, %v4863
      %v4866 = vadd.f32 %v4811, %v4864
      %v4867 = vld [vmem:[#allocation2] sm:$0x1]
      %4869 = vset.pattern.permute.xlu0 0
      %4870 = vperm.xlu0 %4869, %v4867
      %v4871 = vpop.permute.xlu0 %4870
      %v4873 = vperm.slane %v4871, 0
      %v4874 = vadd.f32 %v4865, %v4873
      %v4875 = vadd.f32 %v4866, %v4873
      %v4876 = vmul.f32 %v4874, 0.05
      %v4877 = vmul.f32 %v4875, 0.05
      %v4878 = vmax.f32 %v4874, %v4876
      %v4879 = vmax.f32 %v4875, %v4877
      %v4882 = vrot.slane %v4879, 7
      %vm4883 = vcmask 1040384
      %v4884 = vsel %vm4883, %v4878, %v4882
      %v4886 = vlaneseq
      %vm4887 = vcmp.ge.s32.totalorder %v4886, 0
      %vm4888 = vcmp.lt.s32.totalorder %v4886, 256
      %vm4889 = vmand %vm4887, %vm4888
      %4890 = vst.msk [vmem:[%s413] sm:$0x3] %vm4889, %v4884
      %p4891 = scmp.lt.s32.totalorder %s25, 1
      %s4892 = scalar_select %p4891, %s25, 1
      %s4893 = smul.addr %s4892, 2
      %s4894 = scalar_lea.vmem %s12, %s4893
      // Predicated region
      $region69: #{dcnet_forward.1} parent=67 // pred_check
        %p4895 = pneg %p300
      $region70: #{dcnet_forward.1} parent=67 // pred_check_branch
        %4897 = sbr.rel (%p4895) target = $region72
      $region71: #{dcnet_forward.1} parent=67 // pred_region
        _
      $region72: #{dcnet_forward.1} parent=67 // pred_fallthru
        _
    $region68: #{dcnet_forward.1} parent=5 // pred_fallthru
      _
    %p4898 = scmp.le.s32.totalorder 2, %s20
    // Predicated region
    $region73: #{dcnet_forward.1} parent=5 // pred_check
      %p4899 = pneg %p4898
    $region74: #{dcnet_forward.1} parent=5 // pred_check_branch
      %4901 = sbr.rel (%p4899) target = $region76
    $region75: #{dcnet_forward.1} parent=5 // pred_region
      %s4902 = ssub.s32 %s20, 2
      // Predicated region
      $region77: #{dcnet_forward.1} parent=75 // pred_check
        %p4903 = pneg %p306
      $region78: #{dcnet_forward.1} parent=75 // pred_check_branch
        %4905 = sbr.rel (%p4903) target = $region80
      $region79: #{dcnet_forward.1} parent=75 // pred_region
        %p4906 = scmp.lt.s32.totalorder %s26, 1
        %s4907 = scalar_select %p4906, %s26, 1
        %s4908 = smul.addr %s4907, 2
        %s4909 = scalar_lea.vmem %s12, %s4908
      $region80: #{dcnet_forward.1} parent=75 // pred_fallthru
        _
    $region76: #{dcnet_forward.1} parent=5 // pred_fallthru
      _
  $region6: #{dcnet_forward.1} parent=0 // loop_footer
    %s24 = sadd.s32 1, %s20
  $region7: #{dcnet_forward.1} parent=0 // loop_footer_branch
    %19 = sbr.rel target = $region3
  $region8: #{dcnet_forward.1} parent=0 // loop_exit
    _

</llo_original>
